<compile_context>
chip_gen: v6e
topology: v6e:2x2x1
jax: 0.10.0
libtpu: 0.0.40
codegen_flags: <defaults>
</compile_context>

<pallas_src>
import functools

import jax
import jax.numpy as jnp
import numpy as np
from jax import lax
from jax.experimental import pallas as pl
from jax.experimental.pallas import tpu as pltpu


# --------------------------------------------------------------------------------------
# Pallas kernel: one grid step == one transformer encoder layer (sequential over layers).
# --------------------------------------------------------------------------------------
def transformer_kernel(x_hbm_ref, bb_ref, tdiff_ref,
                       wqkv_ref, wo_ref, ln_attn_ref, ln_ff_ref,
                       ffw1_ref, ffb1_ref, ffw2_ref, ffb2_ref,
                       gy_ref, gx_ref, gb_ref,
                       out_ref, state_ref, kv_ref,
                       *, n_head, d_inner, pre_lnorm, gating, bg,
                       q_block, k_tblocks, n_row_blocks):
    l = pl.program_id(0)
    N, D = state_ref.shape
    NH, DI = n_head, d_inner
    NHDI = NH * DI
    TQ = q_block
    # Row/column chunks span k_tblocks whole time steps; only when a chunk covers
    # more than one time step does the diagonal chunk need an intra-chunk time mask.
    apply_time_mask = k_tblocks > 1

    # ----- layer 0: DMA the (z + pos_emb) rows from HBM into the state scratch once ----
    @pl.when(l == 0)
    def _():
        pltpu.sync_copy(x_hbm_ref, state_ref)

    # Per-layer parameters (whole blocks, resident for this grid step).
    wqkv = wqkv_ref[...]                      # (D, 3*NHDI) bf16   [Wq*scale | Wk | Wv]
    wo = wo_ref[...]                          # (NHDI, D)   bf16
    ln_a = ln_attn_ref[...]                   # (2, D) f32  [gamma; beta]
    ln_f = ln_ff_ref[...]                     # (2, D) f32
    w1, b1 = ffw1_ref[...], ffb1_ref[...]     # (D, DFF) bf16 / (1, DFF) f32
    w2, b2 = ffw2_ref[...], ffb2_ref[...]     # (DFF, D) bf16 / (1, D) f32
    gb = gb_ref[...]                          # (2, D) f32  Uz biases (gate1, gate2)
    gy1, gy2 = gy_ref[0], gy_ref[1]           # (D, 3D) bf16  [Wr|Wz|Wg]
    gx1, gx2 = gx_ref[0], gx_ref[1]           # (D, 3D) bf16  [Ur|Uz|Ug]
    bz1, bz2 = gb[0:1, :], gb[1:2, :]

    def layer_norm(v, p):
        gamma, beta = p[0:1, :], p[1:2, :]
        mu = jnp.mean(v, axis=-1, keepdims=True)
        var = jnp.mean((v - mu) ** 2, axis=-1, keepdims=True)
        return (v - mu) * lax.rsqrt(var + 1e-5) * gamma + beta

    def mm(a, w_bf16):
        # MXU GEMM: bf16 operands, f32 accumulation.
        return jnp.dot(a.astype(jnp.bfloat16), w_bf16,
                       preferred_element_type=jnp.float32)

    def gru_gate(xg, yg, wy, wx, bz):
        # wy = [Wr|Wz|Wg], wx = [Ur|Uz|Ug]: 2 fused GEMMs instead of 6 per gate.
        hy = mm(yg, wy)                       # (TQ, 3D) f32
        hx = mm(xg, wx)
        r = jax.nn.sigmoid(hy[:, :D] + hx[:, :D])
        zg = jax.nn.sigmoid(hy[:, D:2 * D] + (hx[:, D:2 * D] + bz) - bg)
        h = jnp.tanh(hy[:, 2 * D:] + r * hx[:, 2 * D:])
        return (1.0 - zg) * xg + zg * h

    # ----------------------------- row-block pipeline ----------------------------------
    def row_body(i, carry):
        r0 = pl.multiple_of(i * TQ, TQ)
        xb = state_ref[pl.ds(r0, TQ), :]                  # (TQ, D) f32, OLD state rows
        xa = layer_norm(xb, ln_a) if pre_lnorm else xb

        # Fused QKV GEMM for this row chunk; K/V cached in bf16 scratch for reuse by
        # later row blocks (earlier chunks were written by earlier iterations).
        qkv = mm(xa, wqkv)                                # (TQ, 3*NHDI) f32
        q = qkv[:, :NHDI].astype(jnp.bfloat16)            # Wq already carries 1/sqrt(DI)
        kv_ref[pl.ds(r0, TQ), :] = qkv[:, NHDI:].astype(jnp.bfloat16)

        # Online-softmax over column chunks, clipped to the causal limit (chunks 0..i).
        m0 = tuple(jnp.full((TQ, 1), -1e30, jnp.float32) for _ in range(NH))
        l0 = tuple(jnp.zeros((TQ, 1), jnp.float32) for _ in range(NH))
        a0 = tuple(jnp.zeros((TQ, DI), jnp.float32) for _ in range(NH))

        def col_body(c, acc_carry):
            ms, ls, accs = acc_carry
            c0 = pl.multiple_of(c * TQ, TQ)
            kvc = kv_ref[pl.ds(c0, TQ), :]                # (TQ, 2*NHDI) bf16
            bias = bb_ref[...]                            # batch-mismatch additive bias
            if apply_time_mask:
                # col_tblock > row_tblock  <=>  tdiff > (i - c) * k_tblocks
                bias = jnp.where(tdiff_ref[...] > (i - c) * k_tblocks,
                                 jnp.float32(-1e30), bias)
            new_ms, new_ls, new_accs = [], [], []
            for n in range(NH):
                ksl = slice(n * DI, (n + 1) * DI)
                vsl = slice(NHDI + n * DI, NHDI + (n + 1) * DI)
                s = lax.dot_general(q[:, ksl], kvc[:, ksl],
                                    (((1,), (1,)), ((), ())),
                                    preferred_element_type=jnp.float32) + bias
                m_new = jnp.maximum(ms[n], jnp.max(s, axis=-1, keepdims=True))
                alpha = jnp.exp(ms[n] - m_new)
                p = jnp.exp(s - m_new)
                new_ls.append(alpha * ls[n] + jnp.sum(p, axis=-1, keepdims=True))
                new_accs.append(alpha * accs[n]
                                + jnp.dot(p.astype(jnp.bfloat16), kvc[:, vsl],
                                          preferred_element_type=jnp.float32))
                new_ms.append(m_new)
            return tuple(new_ms), tuple(new_ls), tuple(new_accs)

        _, ls, accs = lax.fori_loop(0, i + 1, col_body, (m0, l0, a0))

        # Deferred normalization on the small (TQ, DI) accumulators; concatenate heads
        # once so the output projection is a single lane-dense GEMM.
        av = jnp.concatenate(
            [accs[n] * pl.reciprocal(ls[n], approx=True) for n in range(NH)], axis=-1)

        attn = mm(av, wo)                                 # (TQ, D) f32
        if not pre_lnorm:
            attn = layer_norm(attn, ln_a)
        src = gru_gate(xb, attn, gy1, gx1, bz1) if gating else xb + attn

        # -------- position-wise FF --------
        xn = layer_norm(src, ln_f) if pre_lnorm else src
        hf = jnp.maximum(mm(xn, w1) + b1, 0.0).astype(jnp.bfloat16)
        ff = jnp.dot(hf, w2, preferred_element_type=jnp.float32) + b2
        if not pre_lnorm:
            ff = layer_norm(ff, ln_f)

        new = gru_gate(src, ff, gy2, gx2, bz2) if gating else src + ff

        state_ref[pl.ds(r0, TQ), :] = new                 # carried to the next layer
        out_ref[pl.ds(r0, TQ), :] = new                   # per-block output writeback
        return carry

    lax.fori_loop(0, n_row_blocks, row_body, 0)


# --------------------------------------------------------------------------------------
# Wrapper helpers
# --------------------------------------------------------------------------------------
def _pick_q_block(T, rows_per_t, target_rows=512):
    """q_block = k * rows_per_t with k | T: row blocks cover whole time steps, so the
    causal column clip is exact (block i attends to chunks 0..i) and the per-chunk
    mask reduces to precomputed relative matrices.  The score working set stays
    (q_block, q_block) thanks to the online-softmax column chunking."""
    k = 1
    for d in range(1, T + 1):
        if T % d == 0 and d * rows_per_t <= target_rows:
            k = max(k, d)
    return k * rows_per_t, k


def _vmem_limit_bytes():
    """Explicit scoped-VMEM budget (defaults are only 16/32 MiB); per-generation."""
    try:
        cap = int(pltpu.get_tpu_info().vmem_capacity_bytes)
    except Exception:
        cap = 64 * 1024 * 1024
    return min(cap * 3 // 4, 112 * 1024 * 1024)


def pack_params(params, d_inner):
    """Repack / downcast parameters for the kernel (done once, outside the hot path).

    - Wq (pre-scaled by 1/sqrt(d_inner)) / Wk / Wv concatenated -> one QKV GEMM.
    - GRU gate weights [Wr,Ur,Wz,Uz,Wg,Ug] split into y-side (D,3D) [Wr|Wz|Wg] and
      x-side (D,3D) [Ur|Uz|Ug] per gate -> 2 GEMMs per gate.
    - All GEMM weights cast to bf16 (MXU-native); LayerNorm params / biases stay f32.
    """
    gw = params["gw"]                                      # (L, 12, D, D)
    wqkv = params["wqkv"]                                  # (L, 3, D, NHDI)
    scale = 1.0 / (d_inner ** 0.5)
    gy = jnp.stack([
        jnp.concatenate([gw[:, 0], gw[:, 2], gw[:, 4]], axis=-1),
        jnp.concatenate([gw[:, 6], gw[:, 8], gw[:, 10]], axis=-1),
    ], axis=1).astype(jnp.bfloat16)                        # (L, 2, D, 3D)
    gx = jnp.stack([
        jnp.concatenate([gw[:, 1], gw[:, 3], gw[:, 5]], axis=-1),
        jnp.concatenate([gw[:, 7], gw[:, 9], gw[:, 11]], axis=-1),
    ], axis=1).astype(jnp.bfloat16)                        # (L, 2, D, 3D)
    return dict(
        wqkv=jnp.concatenate([wqkv[:, 0] * scale, wqkv[:, 1], wqkv[:, 2]],
                             axis=-1).astype(jnp.bfloat16),          # (L, D, 3*NHDI)
        wo=params["wo"].astype(jnp.bfloat16),
        ln_attn=params["ln_attn"], ln_ff=params["ln_ff"],
        ffw1=params["ffw1"].astype(jnp.bfloat16), ffb1=params["ffb1"],
        ffw2=params["ffw2"].astype(jnp.bfloat16), ffb2=params["ffb2"],
        gy=gy, gx=gx, gb=params["gb"],
    )


# --------------------------------------------------------------------------------------
# Wrapper: glue (positional embedding, rearranges, packing) in JAX; hot path in Pallas.
# --------------------------------------------------------------------------------------
def transformer_forward(z, params, cfg):
    B, T, D, H, W = z.shape
    S = T * H * W
    N = S * B
    L = cfg["n_layers"]
    NH, DI, DFF = cfg["num_heads"], cfg["d_inner"], cfg["d_ff_inner"]
    NHDI = NH * DI
    rows_per_t = B * H * W                     # rows per time step in flattened layout

    # Positional embedding (sin/cos), matches PositionalEmbedding.
    pos = jnp.arange(S, dtype=jnp.float32)
    inv_freq = 1.0 / (10000.0 ** (jnp.arange(0.0, D, 2.0) / D))
    sinusoid = pos[:, None] * inv_freq[None, :]
    pos_emb = jnp.concatenate([jnp.sin(sinusoid), jnp.cos(sinusoid)], axis=-1)  # (S, D)

    # rearrange 'b t d h w -> (t h w) b d', add pos emb, flatten (S,B,D) -> (N,D).
    z_flat = jnp.transpose(z, (1, 3, 4, 0, 2)).reshape(S, B, D)
    x = (z_flat + pos_emb[:, None, :]).reshape(N, D).astype(jnp.float32)

    q_block, k_tblocks = _pick_q_block(T, rows_per_t)
    n_row_blocks = N // q_block

    # Precomputed relative mask matrices (row/column chunk starts are multiples of
    # q_block, which is a multiple of B and of rows_per_t, so these are chunk-invariant).
    lidx = jnp.arange(q_block, dtype=jnp.int32)
    bb = jnp.where((lidx[:, None] % B) != (lidx[None, :] % B),
                   -1e30, 0.0).astype(jnp.float32)                     # (TQ, TQ) f32
    tdiff = ((lidx[None, :] // rows_per_t)
             - (lidx[:, None] // rows_per_t)).astype(jnp.int32)        # (TQ, TQ) i32

    pk = pack_params(params, DI)

    # Rough cost estimate: helps XLA schedule the prologue/epilogue around the call.
    R = n_row_blocks
    gemm_flops_row = 2 * (D * 3 * NHDI + NHDI * D + 2 * D * DFF
                          + (12 * D * D if cfg["gating"] else 0))
    attn_pairs = q_block * q_block * (R * (R + 1) // 2)    # visited (row, col) pairs/layer
    flops = L * (N * gemm_flops_row + attn_pairs * 4 * NHDI)
    transc = L * (attn_pairs * NH + (6 * N * D if cfg["gating"] else 0))
    weight_bytes = sum(int(v.size) * v.dtype.itemsize for v in pk.values())
    bytes_accessed = weight_bytes + N * D * 4 + L * N * D * 4

    kern = functools.partial(
        transformer_kernel,
        n_head=NH, d_inner=DI, pre_lnorm=cfg["pre_lnorm"], gating=cfg["gating"],
        bg=cfg["bg"], q_block=q_block, k_tblocks=k_tblocks, n_row_blocks=n_row_blocks)

    out = pl.pallas_call(
        kern,
        out_shape=jax.ShapeDtypeStruct((L, N, D), jnp.float32),
        grid_spec=pltpu.PrefetchScalarGridSpec(
            num_scalar_prefetch=0,
            grid=(L,),
            in_specs=[
                pl.BlockSpec(memory_space=pl.ANY),                         # x: HBM, DMA at l==0
                pl.BlockSpec((q_block, q_block), lambda l: (0, 0)),        # batch-mismatch bias
                pl.BlockSpec((q_block, q_block), lambda l: (0, 0)),        # time-block diff
                pl.BlockSpec((None, D, 3 * NHDI), lambda l: (l, 0, 0)),    # fused Wqkv bf16
                pl.BlockSpec((None, NHDI, D), lambda l: (l, 0, 0)),        # Wo bf16
                pl.BlockSpec((None, 2, D), lambda l: (l, 0, 0)),           # attn LN (g, b)
                pl.BlockSpec((None, 2, D), lambda l: (l, 0, 0)),           # ff LN (g, b)
                pl.BlockSpec((None, D, DFF), lambda l: (l, 0, 0)),         # FF W1 bf16
                pl.BlockSpec((None, 1, DFF), lambda l: (l, 0, 0)),         # FF b1
                pl.BlockSpec((None, DFF, D), lambda l: (l, 0, 0)),         # FF W2 bf16
                pl.BlockSpec((None, 1, D), lambda l: (l, 0, 0)),           # FF b2
                pl.BlockSpec((None, 2, D, 3 * D), lambda l: (l, 0, 0, 0)), # gate y-side bf16
                pl.BlockSpec((None, 2, D, 3 * D), lambda l: (l, 0, 0, 0)), # gate x-side bf16
                pl.BlockSpec((None, 2, D), lambda l: (l, 0, 0)),           # gate Uz biases
            ],
            out_specs=pl.BlockSpec((None, N, D), lambda l: (l, 0, 0)),
            scratch_shapes=[pltpu.VMEM((N, D), jnp.float32),               # layer state carry
                            pltpu.VMEM((N, 2 * NHDI), jnp.bfloat16)],      # K/V cache (bf16)
        ),
        compiler_params=pltpu.CompilerParams(
            # Layer carry lives in scratch -> the layer axis MUST stay sequential.
            dimension_semantics=("arbitrary",),
            vmem_limit_bytes=_vmem_limit_bytes()),
        cost_estimate=pl.CostEstimate(flops=int(flops), transcendentals=int(transc),
                                      bytes_accessed=int(bytes_accessed)),
    )(x, bb, tdiff, pk["wqkv"], pk["wo"], pk["ln_attn"], pk["ln_ff"],
      pk["ffw1"], pk["ffb1"], pk["ffw2"], pk["ffb2"],
      pk["gy"], pk["gx"], pk["gb"])

    # (L, S*B, D) -> (L, T, H, W, B, D) -> 'b t l d h w'
    out = out.reshape(L, T, H, W, B, D).transpose(4, 1, 0, 5, 2, 3)
    return out


# --------------------------------------------------------------------------------------
# Deterministic parameter initialization (natural per-module shapes).
# Linear weights are stored as (in, out), i.e. already transposed for y = x @ W.
# --------------------------------------------------------------------------------------
def init_params(key, cfg):
    D = cfg["d_model"]
    NHDI = cfg["num_heads"] * cfg["d_inner"]
    DFF = cfg["d_ff_inner"]
    L = cfg["n_layers"]
    ks = jax.random.split(key, 8)
    s = 0.1
    return dict(
        wqkv=jax.random.normal(ks[0], (L, 3, D, NHDI), jnp.float32) * s,
        wo=jax.random.normal(ks[1], (L, NHDI, D), jnp.float32) * s,
        ln_attn=jnp.stack([jnp.ones((L, D), jnp.float32),
                           jnp.zeros((L, D), jnp.float32)], axis=1),
        ln_ff=jnp.stack([jnp.ones((L, D), jnp.float32),
                         jnp.zeros((L, D), jnp.float32)], axis=1),
        ffw1=jax.random.normal(ks[2], (L, D, DFF), jnp.float32) * s,
        ffb1=jax.random.normal(ks[3], (L, 1, DFF), jnp.float32) * s,
        ffw2=jax.random.normal(ks[4], (L, DFF, D), jnp.float32) * s,
        ffb2=jax.random.normal(ks[5], (L, 1, D), jnp.float32) * s,
        gw=jax.random.normal(ks[6], (L, 12, D, D), jnp.float32) * s,  # gate1[Wr,Ur,Wz,Uz,Wg,Ug], gate2[...]
        gb=jax.random.normal(ks[7], (L, 2, D), jnp.float32) * s,      # Uz biases
    )


# --------------------------------------------------------------------------------------
# Pure-JAX f32 reference (mirrors the PyTorch forward) for the correctness cross-check.
# --------------------------------------------------------------------------------------
def ref_forward(z, params, cfg):
    B, T, D, H, W = z.shape
    S = T * H * W
    L, NH, DI = cfg["n_layers"], cfg["num_heads"], cfg["d_inner"]
    pc = jax.lax.Precision.HIGHEST

    pos = jnp.arange(S, dtype=jnp.float32)
    inv_freq = 1.0 / (10000.0 ** (jnp.arange(0.0, D, 2.0) / D))
    si = pos[:, None] * inv_freq[None, :]
    pos_emb = jnp.concatenate([jnp.sin(si), jnp.cos(si)], -1)
    x = jnp.transpose(z, (1, 3, 4, 0, 2)).reshape(S, B, D) + pos_emb[:, None, :]

    tids = jnp.arange(S) // (H * W)
    disallow = tids[None, :] > tids[:, None]

    def ln(v, g, b):
        mu = v.mean(-1, keepdims=True)
        var = ((v - mu) ** 2).mean(-1, keepdims=True)
        return (v - mu) / jnp.sqrt(var + 1e-5) * g + b

    def lin(a, w):
        return jnp.einsum('sbd,de->sbe', a, w, precision=pc)

    def gate(xg, yg, Wm, bz):
        r = jax.nn.sigmoid(lin(yg, Wm[0]) + lin(xg, Wm[1]))
        zz = jax.nn.sigmoid(lin(yg, Wm[2]) + (lin(xg, Wm[3]) + bz) - cfg["bg"])
        h = jnp.tanh(lin(yg, Wm[4]) + r * lin(xg, Wm[5]))
        return (1.0 - zz) * xg + zz * h

    outs = []
    for l in range(L):
        ln_a, ln_f = params["ln_attn"][l], params["ln_ff"][l]
        xa = ln(x, ln_a[0], ln_a[1]) if cfg["pre_lnorm"] else x
        q = lin(xa, params["wqkv"][l, 0]).reshape(S, B, NH, DI)
        k = lin(xa, params["wqkv"][l, 1]).reshape(S, B, NH, DI)
        v = lin(xa, params["wqkv"][l, 2]).reshape(S, B, NH, DI)
        score = jnp.einsum('ibnd,jbnd->ijbn', q, k, precision=pc) / (DI ** 0.5)
        score = jnp.where(disallow[:, :, None, None], -1e30, score)
        p = jax.nn.softmax(score, axis=1)
        av = jnp.einsum('ijbn,jbnd->ibnd', p, v, precision=pc).reshape(S, B, NH * DI)
        ao = jnp.einsum('sbe,ed->sbd', av, params["wo"][l], precision=pc)
        if not cfg["pre_lnorm"]:
            ao = ln(ao, ln_a[0], ln_a[1])
        src = (gate(x, ao, params["gw"][l, 0:6], params["gb"][l, 0:1])
               if cfg["gating"] else x + ao)
        xn = ln(src, ln_f[0], ln_f[1]) if cfg["pre_lnorm"] else src
        hf = jax.nn.relu(jnp.einsum('sbd,df->sbf', xn, params["ffw1"][l], precision=pc)
                         + params["ffb1"][l, 0])
        ff = jnp.einsum('sbf,fd->sbd', hf, params["ffw2"][l], precision=pc) + params["ffb2"][l, 0]
        if not cfg["pre_lnorm"]:
            ff = ln(ff, ln_f[0], ln_f[1])
        x = (gate(src, ff, params["gw"][l, 6:12], params["gb"][l, 1:2])
             if cfg["gating"] else src + ff)
        outs.append(x)
    out = jnp.stack(outs, axis=1)                     # (S, L, B, D)
    return out.reshape(T, H, W, L, B, D).transpose(4, 0, 3, 5, 1, 2)


if __name__ == "__main__":
    cfg = dict(d_model=32, num_heads=2, d_inner=16, d_ff_inner=64,
               n_layers=2, pre_lnorm=True, gating=True, bg=0.1)
    key = jax.random.PRNGKey(0)
    kp, kz = jax.random.split(key)
    params = init_params(kp, cfg)

    B, T, H, W = 2, 4, 2, 2
    z = jax.random.normal(kz, (B, T, cfg["d_model"], H, W), jnp.float32)

    out = transformer_forward(z, params, cfg)
    out = jax.block_until_ready(out)
    assert out.shape == (B, T, cfg["n_layers"], cfg["d_model"], H, W)

    # f32 (Precision.HIGHEST) reference; the kernel runs its GEMMs in bf16 on the MXU
    # with f32 accumulation (LayerNorm/softmax stay f32), so validate at a
    # bf16-appropriate tolerance.
    ref = ref_forward(z, params, cfg)
    np.testing.assert_allclose(np.asarray(out), np.asarray(ref), rtol=5e-2, atol=5e-2)

    print("KERNEL_OK")
</pallas_src>

<mosaic_0001>
module attributes {stable_mosaic.version = 11 : i64} {
  func.func @transformer_kernel(%arg0: i32, %arg1: memref<32x32xf32, #tpu.memory_space<any>>, %arg2: memref<32x32xf32, #tpu.memory_space<vmem>>, %arg3: memref<32x32xi32, #tpu.memory_space<vmem>>, %arg4: memref<1x32x96xbf16, #tpu.memory_space<vmem>>, %arg5: memref<1x32x32xbf16, #tpu.memory_space<vmem>>, %arg6: memref<1x2x32xf32, #tpu.memory_space<vmem>>, %arg7: memref<1x2x32xf32, #tpu.memory_space<vmem>>, %arg8: memref<1x32x64xbf16, #tpu.memory_space<vmem>>, %arg9: memref<1x1x64xf32, #tpu.memory_space<vmem>>, %arg10: memref<1x64x32xbf16, #tpu.memory_space<vmem>>, %arg11: memref<1x1x32xf32, #tpu.memory_space<vmem>>, %arg12: memref<1x2x32x96xbf16, #tpu.memory_space<vmem>>, %arg13: memref<1x2x32x96xbf16, #tpu.memory_space<vmem>>, %arg14: memref<1x2x32xf32, #tpu.memory_space<vmem>>, %arg15: memref<1x32x32xf32, #tpu.memory_space<vmem>>, %arg16: memref<32x32xf32, #tpu.memory_space<vmem>>, %arg17: memref<32x64xbf16, #tpu.memory_space<vmem>>) attributes {dimension_semantics = [#tpu.dimension_semantics<arbitrary>], iteration_bounds = array<i64: 2>, scalar_prefetch = 0 : i64, scratch_operands = 2 : i64, tpu.core_type = #tpu.core_type<tc>, window_params = [{}, {pipeline_mode = #tpu.pipeline_mode<synchronous>, transform_indices = @transform_1, window_bounds = array<i64: 32, 32>}, {pipeline_mode = #tpu.pipeline_mode<synchronous>, transform_indices = @transform_2, window_bounds = array<i64: 32, 32>}, {transform_indices = @transform_3, window_bounds = array<i64: 1, 32, 96>}, {transform_indices = @transform_4, window_bounds = array<i64: 1, 32, 32>}, {transform_indices = @transform_5, window_bounds = array<i64: 1, 2, 32>}, {transform_indices = @transform_6, window_bounds = array<i64: 1, 2, 32>}, {transform_indices = @transform_7, window_bounds = array<i64: 1, 32, 64>}, {transform_indices = @transform_8, window_bounds = array<i64: 1, 1, 64>}, {transform_indices = @transform_9, window_bounds = array<i64: 1, 64, 32>}, {transform_indices = @transform_10, window_bounds = array<i64: 1, 1, 32>}, {transform_indices = @transform_11, window_bounds = array<i64: 1, 2, 32, 96>}, {transform_indices = @transform_12, window_bounds = array<i64: 1, 2, 32, 96>}, {transform_indices = @transform_13, window_bounds = array<i64: 1, 2, 32>}, {transform_indices = @transform_14, window_bounds = array<i64: 1, 32, 32>}]} {
    %c0_i32 = arith.constant 0 : i32
    %0 = arith.cmpi eq, %arg0, %c0_i32 : i32
    %1 = arith.extui %0 : i1 to i32
    %c0_i32_0 = arith.constant 0 : i32
    %2 = arith.cmpi ne, %1, %c0_i32_0 : i32
    scf.if %2 {
      "tpu.region"() ({
        %194 = tpu.sem_alloc : memref<!tpu.dma_semaphore, #tpu.memory_space<semaphore_mem>>
        tpu.enqueue_dma source(%arg1 : memref<32x32xf32, #tpu.memory_space<any>>) target(%arg16 : memref<32x32xf32, #tpu.memory_space<vmem>>) target_semaphore(%194 : memref<!tpu.dma_semaphore, #tpu.memory_space<semaphore_mem>>)
        tpu.wait_dma2 semaphore(%194 : memref<!tpu.dma_semaphore, #tpu.memory_space<semaphore_mem>>) src(%arg1 : memref<32x32xf32, #tpu.memory_space<any>>) dst(%arg16 : memref<32x32xf32, #tpu.memory_space<vmem>>)
        tpu.yield
      }) : () -> ()
    } else {
    }
    %c0 = arith.constant 0 : index
    %c0_1 = arith.constant 0 : index
    %c0_2 = arith.constant 0 : index
    %3 = vector.load %arg4[%c0, %c0_1, %c0_2] : memref<1x32x96xbf16, #tpu.memory_space<vmem>>, vector<1x32x96xbf16>
    %4 = vector.shape_cast %3 : vector<1x32x96xbf16> to vector<32x96xbf16>
    %c0_3 = arith.constant 0 : index
    %c0_4 = arith.constant 0 : index
    %c0_5 = arith.constant 0 : index
    %5 = vector.load %arg5[%c0_3, %c0_4, %c0_5] : memref<1x32x32xbf16, #tpu.memory_space<vmem>>, vector<1x32x32xbf16>
    %6 = vector.shape_cast %5 : vector<1x32x32xbf16> to vector<32x32xbf16>
    %c0_6 = arith.constant 0 : index
    %c0_7 = arith.constant 0 : index
    %c0_8 = arith.constant 0 : index
    %7 = vector.load %arg6[%c0_6, %c0_7, %c0_8] : memref<1x2x32xf32, #tpu.memory_space<vmem>>, vector<1x2x32xf32>
    %8 = vector.shape_cast %7 : vector<1x2x32xf32> to vector<2x32xf32>
    %c0_9 = arith.constant 0 : index
    %c0_10 = arith.constant 0 : index
    %c0_11 = arith.constant 0 : index
    %9 = vector.load %arg7[%c0_9, %c0_10, %c0_11] : memref<1x2x32xf32, #tpu.memory_space<vmem>>, vector<1x2x32xf32>
    %10 = vector.shape_cast %9 : vector<1x2x32xf32> to vector<2x32xf32>
    %c0_12 = arith.constant 0 : index
    %c0_13 = arith.constant 0 : index
    %c0_14 = arith.constant 0 : index
    %11 = vector.load %arg8[%c0_12, %c0_13, %c0_14] : memref<1x32x64xbf16, #tpu.memory_space<vmem>>, vector<1x32x64xbf16>
    %12 = vector.shape_cast %11 : vector<1x32x64xbf16> to vector<32x64xbf16>
    %c0_15 = arith.constant 0 : index
    %c0_16 = arith.constant 0 : index
    %c0_17 = arith.constant 0 : index
    %13 = vector.load %arg9[%c0_15, %c0_16, %c0_17] : memref<1x1x64xf32, #tpu.memory_space<vmem>>, vector<1x1x64xf32>
    %14 = vector.shape_cast %13 : vector<1x1x64xf32> to vector<1x64xf32>
    %c0_18 = arith.constant 0 : index
    %c0_19 = arith.constant 0 : index
    %c0_20 = arith.constant 0 : index
    %15 = vector.load %arg10[%c0_18, %c0_19, %c0_20] : memref<1x64x32xbf16, #tpu.memory_space<vmem>>, vector<1x64x32xbf16>
    %16 = vector.shape_cast %15 : vector<1x64x32xbf16> to vector<64x32xbf16>
    %c0_21 = arith.constant 0 : index
    %c0_22 = arith.constant 0 : index
    %c0_23 = arith.constant 0 : index
    %17 = vector.load %arg11[%c0_21, %c0_22, %c0_23] : memref<1x1x32xf32, #tpu.memory_space<vmem>>, vector<1x1x32xf32>
    %18 = vector.shape_cast %17 : vector<1x1x32xf32> to vector<1x32xf32>
    %c0_24 = arith.constant 0 : index
    %c0_25 = arith.constant 0 : index
    %c0_26 = arith.constant 0 : index
    %19 = vector.load %arg14[%c0_24, %c0_25, %c0_26] : memref<1x2x32xf32, #tpu.memory_space<vmem>>, vector<1x2x32xf32>
    %20 = vector.shape_cast %19 : vector<1x2x32xf32> to vector<2x32xf32>
    %c0_27 = arith.constant 0 : index
    %c0_28 = arith.constant 0 : index
    %c0_29 = arith.constant 0 : index
    %c0_30 = arith.constant 0 : index
    %21 = vector.load %arg12[%c0_27, %c0_28, %c0_29, %c0_30] : memref<1x2x32x96xbf16, #tpu.memory_space<vmem>>, vector<1x1x32x96xbf16>
    %22 = vector.shape_cast %21 : vector<1x1x32x96xbf16> to vector<32x96xbf16>
    %c0_31 = arith.constant 0 : index
    %c1 = arith.constant 1 : index
    %c0_32 = arith.constant 0 : index
    %c0_33 = arith.constant 0 : index
    %23 = vector.load %arg12[%c0_31, %c1, %c0_32, %c0_33] : memref<1x2x32x96xbf16, #tpu.memory_space<vmem>>, vector<1x1x32x96xbf16>
    %24 = vector.shape_cast %23 : vector<1x1x32x96xbf16> to vector<32x96xbf16>
    %c0_34 = arith.constant 0 : index
    %c0_35 = arith.constant 0 : index
    %c0_36 = arith.constant 0 : index
    %c0_37 = arith.constant 0 : index
    %25 = vector.load %arg13[%c0_34, %c0_35, %c0_36, %c0_37] : memref<1x2x32x96xbf16, #tpu.memory_space<vmem>>, vector<1x1x32x96xbf16>
    %26 = vector.shape_cast %25 : vector<1x1x32x96xbf16> to vector<32x96xbf16>
    %c0_38 = arith.constant 0 : index
    %c1_39 = arith.constant 1 : index
    %c0_40 = arith.constant 0 : index
    %c0_41 = arith.constant 0 : index
    %27 = vector.load %arg13[%c0_38, %c1_39, %c0_40, %c0_41] : memref<1x2x32x96xbf16, #tpu.memory_space<vmem>>, vector<1x1x32x96xbf16>
    %28 = vector.shape_cast %27 : vector<1x1x32x96xbf16> to vector<32x96xbf16>
    %29 = vector.extract_strided_slice %20 {offsets = [0, 0], sizes = [1, 32], strides = [1, 1]} : vector<2x32xf32> to vector<1x32xf32>
    %30 = vector.extract_strided_slice %20 {offsets = [1, 0], sizes = [1, 32], strides = [1, 1]} : vector<2x32xf32> to vector<1x32xf32>
    %c0_i32_42 = arith.constant 0 : i32
    %c32_i32 = arith.constant 32 : i32
    %31 = arith.muli %c0_i32_42, %c32_i32 : i32
    %32 = tpu.assume_multiple %31, 32 : i32
    %33 = arith.index_cast %32 : i32 to index
    %c0_43 = arith.constant 0 : index
    %34 = vector.load %arg16[%33, %c0_43] : memref<32x32xf32, #tpu.memory_space<vmem>>, vector<32x32xf32>
    %35 = vector.extract_strided_slice %8 {offsets = [0, 0], sizes = [1, 32], strides = [1, 1]} : vector<2x32xf32> to vector<1x32xf32>
    %36 = vector.extract_strided_slice %8 {offsets = [1, 0], sizes = [1, 32], strides = [1, 1]} : vector<2x32xf32> to vector<1x32xf32>
    %cst = arith.constant dense<0.000000e+00> : vector<32xf32>
    %37 = vector.multi_reduction <add>, %34, %cst [1] : vector<32x32xf32> to vector<32xf32>
    %38 = vector.shape_cast %37 : vector<32xf32> to vector<32x1xf32>
    %cst_44 = arith.constant 3.200000e+01 : f32
    %39 = vector.broadcast %cst_44 : f32 to vector<32x1xf32>
    %40 = arith.divf %38, %39 : vector<32x1xf32>
    %41 = vector.broadcast %40 : vector<32x1xf32> to vector<32x32xf32>
    %42 = arith.subf %34, %41 : vector<32x32xf32>
    %43 = arith.mulf %42, %42 : vector<32x32xf32>
    %cst_45 = arith.constant dense<0.000000e+00> : vector<32xf32>
    %44 = vector.multi_reduction <add>, %43, %cst_45 [1] : vector<32x32xf32> to vector<32xf32>
    %45 = vector.shape_cast %44 : vector<32xf32> to vector<32x1xf32>
    %cst_46 = arith.constant 3.200000e+01 : f32
    %46 = vector.broadcast %cst_46 : f32 to vector<32x1xf32>
    %47 = arith.divf %45, %46 : vector<32x1xf32>
    %48 = vector.broadcast %40 : vector<32x1xf32> to vector<32x32xf32>
    %49 = arith.subf %34, %48 : vector<32x32xf32>
    %cst_47 = arith.constant 9.99999974E-6 : f32
    %50 = vector.broadcast %cst_47 : f32 to vector<32x1xf32>
    %51 = arith.addf %47, %50 : vector<32x1xf32>
    %52 = math.rsqrt %51 : vector<32x1xf32>
    %53 = vector.broadcast %52 : vector<32x1xf32> to vector<32x32xf32>
    %54 = arith.mulf %49, %53 : vector<32x32xf32>
    %55 = vector.broadcast %35 : vector<1x32xf32> to vector<32x32xf32>
    %56 = arith.mulf %54, %55 : vector<32x32xf32>
    %57 = vector.broadcast %36 : vector<1x32xf32> to vector<32x32xf32>
    %58 = arith.addf %56, %57 : vector<32x32xf32>
    %59 = arith.truncf %58 : vector<32x32xf32> to vector<32x32xbf16>
    %cst_48 = arith.constant dense<0.000000e+00> : vector<32x96xf32>
    %60 = tpu.matmul %59, %4, %cst_48 {dimension_numbers = #tpu.dot_dimension_numbers<[1], [0], [0], [1], [0, 0, 1, 1], [], []>} : vector<32x32xbf16>, vector<32x96xbf16>, vector<32x96xf32> -> vector<32x96xf32>
    %61 = vector.extract_strided_slice %60 {offsets = [0, 0], sizes = [32, 32], strides = [1, 1]} : vector<32x96xf32> to vector<32x32xf32>
    %62 = arith.truncf %61 : vector<32x32xf32> to vector<32x32xbf16>
    %63 = vector.extract_strided_slice %60 {offsets = [0, 32], sizes = [32, 64], strides = [1, 1]} : vector<32x96xf32> to vector<32x64xf32>
    %64 = arith.truncf %63 : vector<32x64xf32> to vector<32x64xbf16>
    %65 = arith.index_cast %32 : i32 to index
    %c0_49 = arith.constant 0 : index
    %66 = vector.load %arg17[%65, %c0_49] : memref<32x64xbf16, #tpu.memory_space<vmem>>, vector<32x64xbf16>
    tpu.vector_store %arg17[%65, %c0_49], %64 {strides = array<i32>} : memref<32x64xbf16, #tpu.memory_space<vmem>>, vector<32x64xbf16>,
    %cst_50 = arith.constant -1.000000e+30 : f32
    %67 = vector.broadcast %cst_50 : f32 to vector<32x1xf32>
    %cst_51 = arith.constant -1.000000e+30 : f32
    %68 = vector.broadcast %cst_51 : f32 to vector<32x1xf32>
    %cst_52 = arith.constant 0.000000e+00 : f32
    %69 = vector.broadcast %cst_52 : f32 to vector<32x1xf32>
    %cst_53 = arith.constant 0.000000e+00 : f32
    %70 = vector.broadcast %cst_53 : f32 to vector<32x1xf32>
    %cst_54 = arith.constant 0.000000e+00 : f32
    %71 = vector.broadcast %cst_54 : f32 to vector<32x16xf32>
    %cst_55 = arith.constant 0.000000e+00 : f32
    %72 = vector.broadcast %cst_55 : f32 to vector<32x16xf32>
    %c1_i32 = arith.constant 1 : i32
    %73 = arith.addi %c0_i32_42, %c1_i32 : i32
    %c0_i32_56 = arith.constant 0 : i32
    %74 = arith.subi %73, %c0_i32_56 : i32
    %75 = arith.addi %c0_i32_56, %74 : i32
    %c1_i32_57 = arith.constant 1 : i32
    %76:6 = scf.for %arg18 = %c0_i32_56 to %75 step %c1_i32_57 iter_args(%arg19 = %67, %arg20 = %68, %arg21 = %69, %arg22 = %70, %arg23 = %71, %arg24 = %72) -> (vector<32x1xf32>, vector<32x1xf32>, vector<32x1xf32>, vector<32x1xf32>, vector<32x16xf32>, vector<32x16xf32>)  : i32 {
      %c32_i32_83 = arith.constant 32 : i32
      %194 = arith.muli %arg18, %c32_i32_83 : i32
      %195 = tpu.assume_multiple %194, 32 : i32
      %196 = arith.index_cast %195 : i32 to index
      %c0_84 = arith.constant 0 : index
      %197 = vector.load %arg17[%196, %c0_84] : memref<32x64xbf16, #tpu.memory_space<vmem>>, vector<32x64xbf16>
      %c0_85 = arith.constant 0 : index
      %c0_86 = arith.constant 0 : index
      %198 = vector.load %arg2[%c0_85, %c0_86] : memref<32x32xf32, #tpu.memory_space<vmem>>, vector<32x32xf32>
      %c0_87 = arith.constant 0 : index
      %c0_88 = arith.constant 0 : index
      %199 = vector.load %arg3[%c0_87, %c0_88] : memref<32x32xi32, #tpu.memory_space<vmem>>, vector<32x32xi32>
      %200 = arith.subi %c0_i32_42, %arg18 : i32
      %c4_i32 = arith.constant 4 : i32
      %201 = arith.muli %200, %c4_i32 : i32
      %202 = vector.broadcast %201 : i32 to vector<32x32xi32>
      %203 = arith.cmpi sgt, %199, %202 : vector<32x32xi32>
      %cst_89 = arith.constant -1.000000e+30 : f32
      %204 = vector.broadcast %cst_89 : f32 to vector<32x32xf32>
      %205 = arith.select %203, %204, %198 : vector<32x32xi1>, vector<32x32xf32>
      %206 = vector.extract_strided_slice %62 {offsets = [0, 0], sizes = [32, 16], strides = [1, 1]} : vector<32x32xbf16> to vector<32x16xbf16>
      %207 = vector.extract_strided_slice %197 {offsets = [0, 0], sizes = [32, 16], strides = [1, 1]} : vector<32x64xbf16> to vector<32x16xbf16>
      %cst_90 = arith.constant dense<0.000000e+00> : vector<32x32xf32>
      %208 = tpu.matmul %206, %207, %cst_90 {dimension_numbers = #tpu.dot_dimension_numbers<[1], [1], [0], [0], [0, 0, 1, 0], [], []>} : vector<32x16xbf16>, vector<32x16xbf16>, vector<32x32xf32> -> vector<32x32xf32>
      %209 = arith.addf %208, %205 : vector<32x32xf32>
      %cst_91 = arith.constant dense<0xFF800000> : vector<32xf32>
      %210 = vector.multi_reduction <maximumf>, %209, %cst_91 [1] : vector<32x32xf32> to vector<32xf32>
      %211 = vector.shape_cast %210 : vector<32xf32> to vector<32x1xf32>
      %212 = arith.maximumf %arg19, %211 : vector<32x1xf32>
      %213 = arith.subf %arg19, %212 : vector<32x1xf32>
      %214 = math.exp %213 : vector<32x1xf32>
      %215 = vector.broadcast %212 : vector<32x1xf32> to vector<32x32xf32>
      %216 = arith.subf %209, %215 : vector<32x32xf32>
      %217 = math.exp %216 : vector<32x32xf32>
      %218 = arith.mulf %214, %arg21 : vector<32x1xf32>
      %cst_92 = arith.constant dense<0.000000e+00> : vector<32xf32>
      %219 = vector.multi_reduction <add>, %217, %cst_92 [1] : vector<32x32xf32> to vector<32xf32>
      %220 = vector.shape_cast %219 : vector<32xf32> to vector<32x1xf32>
      %221 = arith.addf %218, %220 : vector<32x1xf32>
      %222 = vector.broadcast %214 : vector<32x1xf32> to vector<32x16xf32>
      %223 = arith.mulf %222, %arg23 : vector<32x16xf32>
      %224 = arith.truncf %217 : vector<32x32xf32> to vector<32x32xbf16>
      %225 = vector.extract_strided_slice %197 {offsets = [0, 32], sizes = [32, 16], strides = [1, 1]} : vector<32x64xbf16> to vector<32x16xbf16>
      %cst_93 = arith.constant dense<0.000000e+00> : vector<32x16xf32>
      %226 = tpu.matmul %224, %225, %cst_93 {dimension_numbers = #tpu.dot_dimension_numbers<[1], [0], [0], [1], [0, 0, 1, 1], [], []>} : vector<32x32xbf16>, vector<32x16xbf16>, vector<32x16xf32> -> vector<32x16xf32>
      %227 = arith.addf %223, %226 : vector<32x16xf32>
      %228 = vector.extract_strided_slice %62 {offsets = [0, 16], sizes = [32, 16], strides = [1, 1]} : vector<32x32xbf16> to vector<32x16xbf16>
      %229 = vector.extract_strided_slice %197 {offsets = [0, 16], sizes = [32, 16], strides = [1, 1]} : vector<32x64xbf16> to vector<32x16xbf16>
      %cst_94 = arith.constant dense<0.000000e+00> : vector<32x32xf32>
      %230 = tpu.matmul %228, %229, %cst_94 {dimension_numbers = #tpu.dot_dimension_numbers<[1], [1], [0], [0], [0, 0, 1, 0], [], []>} : vector<32x16xbf16>, vector<32x16xbf16>, vector<32x32xf32> -> vector<32x32xf32>
      %231 = arith.addf %230, %205 : vector<32x32xf32>
      %cst_95 = arith.constant dense<0xFF800000> : vector<32xf32>
      %232 = vector.multi_reduction <maximumf>, %231, %cst_95 [1] : vector<32x32xf32> to vector<32xf32>
      %233 = vector.shape_cast %232 : vector<32xf32> to vector<32x1xf32>
      %234 = arith.maximumf %arg20, %233 : vector<32x1xf32>
      %235 = arith.subf %arg20, %234 : vector<32x1xf32>
      %236 = math.exp %235 : vector<32x1xf32>
      %237 = vector.broadcast %234 : vector<32x1xf32> to vector<32x32xf32>
      %238 = arith.subf %231, %237 : vector<32x32xf32>
      %239 = math.exp %238 : vector<32x32xf32>
      %240 = arith.mulf %236, %arg22 : vector<32x1xf32>
      %cst_96 = arith.constant dense<0.000000e+00> : vector<32xf32>
      %241 = vector.multi_reduction <add>, %239, %cst_96 [1] : vector<32x32xf32> to vector<32xf32>
      %242 = vector.shape_cast %241 : vector<32xf32> to vector<32x1xf32>
      %243 = arith.addf %240, %242 : vector<32x1xf32>
      %244 = vector.broadcast %236 : vector<32x1xf32> to vector<32x16xf32>
      %245 = arith.mulf %244, %arg24 : vector<32x16xf32>
      %246 = arith.truncf %239 : vector<32x32xf32> to vector<32x32xbf16>
      %247 = vector.extract_strided_slice %197 {offsets = [0, 48], sizes = [32, 16], strides = [1, 1]} : vector<32x64xbf16> to vector<32x16xbf16>
      %cst_97 = arith.constant dense<0.000000e+00> : vector<32x16xf32>
      %248 = tpu.matmul %246, %247, %cst_97 {dimension_numbers = #tpu.dot_dimension_numbers<[1], [0], [0], [1], [0, 0, 1, 1], [], []>} : vector<32x32xbf16>, vector<32x16xbf16>, vector<32x16xf32> -> vector<32x16xf32>
      %249 = arith.addf %245, %248 : vector<32x16xf32>
      scf.yield %212, %234, %221, %243, %227, %249 : vector<32x1xf32>, vector<32x1xf32>, vector<32x1xf32>, vector<32x1xf32>, vector<32x16xf32>, vector<32x16xf32>
    }
    %77 = tpu.reciprocal %76#2 {approx = true} : vector<32x1xf32> -> vector<32x1xf32>
    %78 = vector.broadcast %77 : vector<32x1xf32> to vector<32x16xf32>
    %79 = arith.mulf %76#4, %78 : vector<32x16xf32>
    %80 = tpu.reciprocal %76#3 {approx = true} : vector<32x1xf32> -> vector<32x1xf32>
    %81 = vector.broadcast %80 : vector<32x1xf32> to vector<32x16xf32>
    %82 = arith.mulf %76#5, %81 : vector<32x16xf32>
    %83 = tpu.concatenate %79, %82 in 1 : vector<32x16xf32>, vector<32x16xf32> -> vector<32x32xf32>
    %84 = arith.truncf %83 : vector<32x32xf32> to vector<32x32xbf16>
    %cst_58 = arith.constant dense<0.000000e+00> : vector<32x32xf32>
    %85 = tpu.matmul %84, %6, %cst_58 {dimension_numbers = #tpu.dot_dimension_numbers<[1], [0], [0], [1], [0, 0, 1, 1], [], []>} : vector<32x32xbf16>, vector<32x32xbf16>, vector<32x32xf32> -> vector<32x32xf32>
    %86 = arith.truncf %85 : vector<32x32xf32> to vector<32x32xbf16>
    %cst_59 = arith.constant dense<0.000000e+00> : vector<32x96xf32>
    %87 = tpu.matmul %86, %22, %cst_59 {dimension_numbers = #tpu.dot_dimension_numbers<[1], [0], [0], [1], [0, 0, 1, 1], [], []>} : vector<32x32xbf16>, vector<32x96xbf16>, vector<32x96xf32> -> vector<32x96xf32>
    %88 = arith.truncf %34 : vector<32x32xf32> to vector<32x32xbf16>
    %cst_60 = arith.constant dense<0.000000e+00> : vector<32x96xf32>
    %89 = tpu.matmul %88, %26, %cst_60 {dimension_numbers = #tpu.dot_dimension_numbers<[1], [0], [0], [1], [0, 0, 1, 1], [], []>} : vector<32x32xbf16>, vector<32x96xbf16>, vector<32x96xf32> -> vector<32x96xf32>
    %90 = vector.extract_strided_slice %87 {offsets = [0, 0], sizes = [32, 32], strides = [1, 1]} : vector<32x96xf32> to vector<32x32xf32>
    %91 = vector.extract_strided_slice %89 {offsets = [0, 0], sizes = [32, 32], strides = [1, 1]} : vector<32x96xf32> to vector<32x32xf32>
    %92 = arith.addf %90, %91 : vector<32x32xf32>
    %93 = arith.negf %92 : vector<32x32xf32>
    %94 = math.exp %93 : vector<32x32xf32>
    %cst_61 = arith.constant 1.000000e+00 : f32
    %95 = vector.broadcast %cst_61 : f32 to vector<32x32xf32>
    %96 = arith.addf %95, %94 : vector<32x32xf32>
    %97 = arith.divf %95, %96 : vector<32x32xf32>
    %98 = vector.extract_strided_slice %87 {offsets = [0, 32], sizes = [32, 32], strides = [1, 1]} : vector<32x96xf32> to vector<32x32xf32>
    %99 = vector.extract_strided_slice %89 {offsets = [0, 32], sizes = [32, 32], strides = [1, 1]} : vector<32x96xf32> to vector<32x32xf32>
    %100 = vector.broadcast %29 : vector<1x32xf32> to vector<32x32xf32>
    %101 = arith.addf %99, %100 : vector<32x32xf32>
    %102 = arith.addf %98, %101 : vector<32x32xf32>
    %cst_62 = arith.constant 1.000000e-01 : f32
    %103 = vector.broadcast %cst_62 : f32 to vector<32x32xf32>
    %104 = arith.subf %102, %103 : vector<32x32xf32>
    %105 = arith.negf %104 : vector<32x32xf32>
    %106 = math.exp %105 : vector<32x32xf32>
    %cst_63 = arith.constant 1.000000e+00 : f32
    %107 = vector.broadcast %cst_63 : f32 to vector<32x32xf32>
    %108 = arith.addf %107, %106 : vector<32x32xf32>
    %109 = arith.divf %107, %108 : vector<32x32xf32>
    %110 = vector.extract_strided_slice %87 {offsets = [0, 64], sizes = [32, 32], strides = [1, 1]} : vector<32x96xf32> to vector<32x32xf32>
    %111 = vector.extract_strided_slice %89 {offsets = [0, 64], sizes = [32, 32], strides = [1, 1]} : vector<32x96xf32> to vector<32x32xf32>
    %112 = arith.mulf %97, %111 : vector<32x32xf32>
    %113 = arith.addf %110, %112 : vector<32x32xf32>
    %114 = math.tanh %113 : vector<32x32xf32>
    %cst_64 = arith.constant 1.000000e+00 : f32
    %115 = vector.broadcast %cst_64 : f32 to vector<32x32xf32>
    %116 = arith.subf %115, %109 : vector<32x32xf32>
    %117 = arith.mulf %116, %34 : vector<32x32xf32>
    %118 = arith.mulf %109, %114 : vector<32x32xf32>
    %119 = arith.addf %117, %118 : vector<32x32xf32>
    %120 = vector.extract_strided_slice %10 {offsets = [0, 0], sizes = [1, 32], strides = [1, 1]} : vector<2x32xf32> to vector<1x32xf32>
    %121 = vector.extract_strided_slice %10 {offsets = [1, 0], sizes = [1, 32], strides = [1, 1]} : vector<2x32xf32> to vector<1x32xf32>
    %cst_65 = arith.constant dense<0.000000e+00> : vector<32xf32>
    %122 = vector.multi_reduction <add>, %119, %cst_65 [1] : vector<32x32xf32> to vector<32xf32>
    %123 = vector.shape_cast %122 : vector<32xf32> to vector<32x1xf32>
    %cst_66 = arith.constant 3.200000e+01 : f32
    %124 = vector.broadcast %cst_66 : f32 to vector<32x1xf32>
    %125 = arith.divf %123, %124 : vector<32x1xf32>
    %126 = vector.broadcast %125 : vector<32x1xf32> to vector<32x32xf32>
    %127 = arith.subf %119, %126 : vector<32x32xf32>
    %128 = arith.mulf %127, %127 : vector<32x32xf32>
    %cst_67 = arith.constant dense<0.000000e+00> : vector<32xf32>
    %129 = vector.multi_reduction <add>, %128, %cst_67 [1] : vector<32x32xf32> to vector<32xf32>
    %130 = vector.shape_cast %129 : vector<32xf32> to vector<32x1xf32>
    %cst_68 = arith.constant 3.200000e+01 : f32
    %131 = vector.broadcast %cst_68 : f32 to vector<32x1xf32>
    %132 = arith.divf %130, %131 : vector<32x1xf32>
    %133 = vector.broadcast %125 : vector<32x1xf32> to vector<32x32xf32>
    %134 = arith.subf %119, %133 : vector<32x32xf32>
    %cst_69 = arith.constant 9.99999974E-6 : f32
    %135 = vector.broadcast %cst_69 : f32 to vector<32x1xf32>
    %136 = arith.addf %132, %135 : vector<32x1xf32>
    %137 = math.rsqrt %136 : vector<32x1xf32>
    %138 = vector.broadcast %137 : vector<32x1xf32> to vector<32x32xf32>
    %139 = arith.mulf %134, %138 : vector<32x32xf32>
    %140 = vector.broadcast %120 : vector<1x32xf32> to vector<32x32xf32>
    %141 = arith.mulf %139, %140 : vector<32x32xf32>
    %142 = vector.broadcast %121 : vector<1x32xf32> to vector<32x32xf32>
    %143 = arith.addf %141, %142 : vector<32x32xf32>
    %144 = arith.truncf %143 : vector<32x32xf32> to vector<32x32xbf16>
    %cst_70 = arith.constant dense<0.000000e+00> : vector<32x64xf32>
    %145 = tpu.matmul %144, %12, %cst_70 {dimension_numbers = #tpu.dot_dimension_numbers<[1], [0], [0], [1], [0, 0, 1, 1], [], []>} : vector<32x32xbf16>, vector<32x64xbf16>, vector<32x64xf32> -> vector<32x64xf32>
    %146 = vector.broadcast %14 : vector<1x64xf32> to vector<32x64xf32>
    %147 = arith.addf %145, %146 : vector<32x64xf32>
    %cst_71 = arith.constant 0.000000e+00 : f32
    %148 = vector.broadcast %cst_71 : f32 to vector<32x64xf32>
    %149 = arith.maximumf %147, %148 : vector<32x64xf32>
    %150 = arith.truncf %149 : vector<32x64xf32> to vector<32x64xbf16>
    %cst_72 = arith.constant dense<0.000000e+00> : vector<32x32xf32>
    %151 = tpu.matmul %150, %16, %cst_72 {dimension_numbers = #tpu.dot_dimension_numbers<[1], [0], [0], [1], [0, 0, 1, 1], [], []>} : vector<32x64xbf16>, vector<64x32xbf16>, vector<32x32xf32> -> vector<32x32xf32>
    %152 = vector.broadcast %18 : vector<1x32xf32> to vector<32x32xf32>
    %153 = arith.addf %151, %152 : vector<32x32xf32>
    %154 = arith.truncf %153 : vector<32x32xf32> to vector<32x32xbf16>
    %cst_73 = arith.constant dense<0.000000e+00> : vector<32x96xf32>
    %155 = tpu.matmul %154, %24, %cst_73 {dimension_numbers = #tpu.dot_dimension_numbers<[1], [0], [0], [1], [0, 0, 1, 1], [], []>} : vector<32x32xbf16>, vector<32x96xbf16>, vector<32x96xf32> -> vector<32x96xf32>
    %156 = arith.truncf %119 : vector<32x32xf32> to vector<32x32xbf16>
    %cst_74 = arith.constant dense<0.000000e+00> : vector<32x96xf32>
    %157 = tpu.matmul %156, %28, %cst_74 {dimension_numbers = #tpu.dot_dimension_numbers<[1], [0], [0], [1], [0, 0, 1, 1], [], []>} : vector<32x32xbf16>, vector<32x96xbf16>, vector<32x96xf32> -> vector<32x96xf32>
    %158 = vector.extract_strided_slice %155 {offsets = [0, 0], sizes = [32, 32], strides = [1, 1]} : vector<32x96xf32> to vector<32x32xf32>
    %159 = vector.extract_strided_slice %157 {offsets = [0, 0], sizes = [32, 32], strides = [1, 1]} : vector<32x96xf32> to vector<32x32xf32>
    %160 = arith.addf %158, %159 : vector<32x32xf32>
    %161 = arith.negf %160 : vector<32x32xf32>
    %162 = math.exp %161 : vector<32x32xf32>
    %cst_75 = arith.constant 1.000000e+00 : f32
    %163 = vector.broadcast %cst_75 : f32 to vector<32x32xf32>
    %164 = arith.addf %163, %162 : vector<32x32xf32>
    %165 = arith.divf %163, %164 : vector<32x32xf32>
    %166 = vector.extract_strided_slice %155 {offsets = [0, 32], sizes = [32, 32], strides = [1, 1]} : vector<32x96xf32> to vector<32x32xf32>
    %167 = vector.extract_strided_slice %157 {offsets = [0, 32], sizes = [32, 32], strides = [1, 1]} : vector<32x96xf32> to vector<32x32xf32>
    %168 = vector.broadcast %30 : vector<1x32xf32> to vector<32x32xf32>
    %169 = arith.addf %167, %168 : vector<32x32xf32>
    %170 = arith.addf %166, %169 : vector<32x32xf32>
    %cst_76 = arith.constant 1.000000e-01 : f32
    %171 = vector.broadcast %cst_76 : f32 to vector<32x32xf32>
    %172 = arith.subf %170, %171 : vector<32x32xf32>
    %173 = arith.negf %172 : vector<32x32xf32>
    %174 = math.exp %173 : vector<32x32xf32>
    %cst_77 = arith.constant 1.000000e+00 : f32
    %175 = vector.broadcast %cst_77 : f32 to vector<32x32xf32>
    %176 = arith.addf %175, %174 : vector<32x32xf32>
    %177 = arith.divf %175, %176 : vector<32x32xf32>
    %178 = vector.extract_strided_slice %155 {offsets = [0, 64], sizes = [32, 32], strides = [1, 1]} : vector<32x96xf32> to vector<32x32xf32>
    %179 = vector.extract_strided_slice %157 {offsets = [0, 64], sizes = [32, 32], strides = [1, 1]} : vector<32x96xf32> to vector<32x32xf32>
    %180 = arith.mulf %165, %179 : vector<32x32xf32>
    %181 = arith.addf %178, %180 : vector<32x32xf32>
    %182 = math.tanh %181 : vector<32x32xf32>
    %cst_78 = arith.constant 1.000000e+00 : f32
    %183 = vector.broadcast %cst_78 : f32 to vector<32x32xf32>
    %184 = arith.subf %183, %177 : vector<32x32xf32>
    %185 = arith.mulf %184, %119 : vector<32x32xf32>
    %186 = arith.mulf %177, %182 : vector<32x32xf32>
    %187 = arith.addf %185, %186 : vector<32x32xf32>
    %188 = arith.index_cast %32 : i32 to index
    %c0_79 = arith.constant 0 : index
    %189 = vector.load %arg16[%188, %c0_79] : memref<32x32xf32, #tpu.memory_space<vmem>>, vector<32x32xf32>
    tpu.vector_store %arg16[%188, %c0_79], %187 {strides = array<i32>} : memref<32x32xf32, #tpu.memory_space<vmem>>, vector<32x32xf32>,
    %c0_80 = arith.constant 0 : index
    %190 = arith.index_cast %32 : i32 to index
    %c0_81 = arith.constant 0 : index
    %191 = vector.load %arg15[%c0_80, %190, %c0_81] : memref<1x32x32xf32, #tpu.memory_space<vmem>>, vector<1x32x32xf32>
    %192 = vector.shape_cast %191 : vector<1x32x32xf32> to vector<32x32xf32>
    %193 = vector.shape_cast %187 : vector<32x32xf32> to vector<1x32x32xf32>
    tpu.vector_store %arg15[%c0_80, %190, %c0_81], %193 {strides = array<i32>} : memref<1x32x32xf32, #tpu.memory_space<vmem>>, vector<1x32x32xf32>,
    %c1_i32_82 = arith.constant 1 : i32
    return
  }
  func.func @transform_1(%arg0: i32) -> (i32, i32) {
    %c0_i32 = arith.constant 0 : i32
    %c0_i32_0 = arith.constant 0 : i32
    %c0_i32_1 = arith.constant 0 : i32
    return %c0_i32, %c0_i32_0 : i32, i32
  }
  func.func @transform_2(%arg0: i32) -> (i32, i32) {
    %c0_i32 = arith.constant 0 : i32
    %c0_i32_0 = arith.constant 0 : i32
    %c0_i32_1 = arith.constant 0 : i32
    return %c0_i32, %c0_i32_0 : i32, i32
  }
  func.func @transform_3(%arg0: i32) -> (i32, i32, i32) {
    %c0_i32 = arith.constant 0 : i32
    %c0_i32_0 = arith.constant 0 : i32
    %c0_i32_1 = arith.constant 0 : i32
    return %arg0, %c0_i32, %c0_i32_0 : i32, i32, i32
  }
  func.func @transform_4(%arg0: i32) -> (i32, i32, i32) {
    %c0_i32 = arith.constant 0 : i32
    %c0_i32_0 = arith.constant 0 : i32
    %c0_i32_1 = arith.constant 0 : i32
    return %arg0, %c0_i32, %c0_i32_0 : i32, i32, i32
  }
  func.func @transform_5(%arg0: i32) -> (i32, i32, i32) {
    %c0_i32 = arith.constant 0 : i32
    %c0_i32_0 = arith.constant 0 : i32
    %c0_i32_1 = arith.constant 0 : i32
    return %arg0, %c0_i32, %c0_i32_0 : i32, i32, i32
  }
  func.func @transform_6(%arg0: i32) -> (i32, i32, i32) {
    %c0_i32 = arith.constant 0 : i32
    %c0_i32_0 = arith.constant 0 : i32
    %c0_i32_1 = arith.constant 0 : i32
    return %arg0, %c0_i32, %c0_i32_0 : i32, i32, i32
  }
  func.func @transform_7(%arg0: i32) -> (i32, i32, i32) {
    %c0_i32 = arith.constant 0 : i32
    %c0_i32_0 = arith.constant 0 : i32
    %c0_i32_1 = arith.constant 0 : i32
    return %arg0, %c0_i32, %c0_i32_0 : i32, i32, i32
  }
  func.func @transform_8(%arg0: i32) -> (i32, i32, i32) {
    %c0_i32 = arith.constant 0 : i32
    %c0_i32_0 = arith.constant 0 : i32
    %c0_i32_1 = arith.constant 0 : i32
    return %arg0, %c0_i32, %c0_i32_0 : i32, i32, i32
  }
  func.func @transform_9(%arg0: i32) -> (i32, i32, i32) {
    %c0_i32 = arith.constant 0 : i32
    %c0_i32_0 = arith.constant 0 : i32
    %c0_i32_1 = arith.constant 0 : i32
    return %arg0, %c0_i32, %c0_i32_0 : i32, i32, i32
  }
  func.func @transform_10(%arg0: i32) -> (i32, i32, i32) {
    %c0_i32 = arith.constant 0 : i32
    %c0_i32_0 = arith.constant 0 : i32
    %c0_i32_1 = arith.constant 0 : i32
    return %arg0, %c0_i32, %c0_i32_0 : i32, i32, i32
  }
  func.func @transform_11(%arg0: i32) -> (i32, i32, i32, i32) {
    %c0_i32 = arith.constant 0 : i32
    %c0_i32_0 = arith.constant 0 : i32
    %c0_i32_1 = arith.constant 0 : i32
    %c0_i32_2 = arith.constant 0 : i32
    return %arg0, %c0_i32, %c0_i32_0, %c0_i32_1 : i32, i32, i32, i32
  }
  func.func @transform_12(%arg0: i32) -> (i32, i32, i32, i32) {
    %c0_i32 = arith.constant 0 : i32
    %c0_i32_0 = arith.constant 0 : i32
    %c0_i32_1 = arith.constant 0 : i32
    %c0_i32_2 = arith.constant 0 : i32
    return %arg0, %c0_i32, %c0_i32_0, %c0_i32_1 : i32, i32, i32, i32
  }
  func.func @transform_13(%arg0: i32) -> (i32, i32, i32) {
    %c0_i32 = arith.constant 0 : i32
    %c0_i32_0 = arith.constant 0 : i32
    %c0_i32_1 = arith.constant 0 : i32
    return %arg0, %c0_i32, %c0_i32_0 : i32, i32, i32
  }
  func.func @transform_14(%arg0: i32) -> (i32, i32, i32) {
    %c0_i32 = arith.constant 0 : i32
    %c0_i32_0 = arith.constant 0 : i32
    %c0_i32_1 = arith.constant 0 : i32
    return %arg0, %c0_i32, %c0_i32_0 : i32, i32, i32
  }
}

</mosaic_0001>

<llo_original>
// kernel: tpu_custom_call.1
$region0: #{tpu_custom_call.1}
  #allocation0 [shape = 'u32[]', space=smem, size = 0x4, offset = 0x4, fixed_abs, tag = 'smem constant byte address 0x4 - core index']
  #allocation1 [shape = 'u32[144,128]{1,0:T(1,128)}', space=vmem, size = 0x12000, scoped, tag = 'internal scratch']
  #allocation2 [shape = 'f32[32,32]{1,0:T(8,128)}', space=vmem, size = 0x4000, scoped, tag = 'scratch operand']
  #allocation3 [shape = 'bf16[32,64]{1,0:T(8,128)(2,1)}', space=vmem, size = 0x2000, scoped, tag = 'scratch operand']
  #allocation15 [shape = 's32[]', space=sflag, size = 0x4, offset = 0, fixed_abs, tag = 'sflag constant byte address 0x0 - dummy sync flag']
  %s0 = inlined_call_operand.vmem [shape: f32[32,32], index: 0, kind: input, shape index: {}]
  %s1 = inlined_call_operand.hbm [shape: f32[32,32], index: 1, kind: input, shape index: {}]
  %s2 = inlined_call_operand.hbm [shape: s32[32,32], index: 2, kind: input, shape index: {}]
  %s3 = inlined_call_operand.hbm [shape: bf16[2,32,96], index: 3, kind: input, shape index: {}]
  %s4 = inlined_call_operand.hbm [shape: bf16[2,32,32], index: 4, kind: input, shape index: {}]
  %s5 = inlined_call_operand.vmem [shape: f32[2,2,32], index: 5, kind: input, shape index: {}]
  %s6 = inlined_call_operand.vmem [shape: f32[2,2,32], index: 6, kind: input, shape index: {}]
  %s7 = inlined_call_operand.hbm [shape: bf16[2,32,64], index: 7, kind: input, shape index: {}]
  %s8 = inlined_call_operand.vmem [shape: f32[2,1,64], index: 8, kind: input, shape index: {}]
  %s9 = inlined_call_operand.vmem [shape: bf16[2,64,32], index: 9, kind: input, shape index: {}]
  %s10 = inlined_call_operand.vmem [shape: f32[2,1,32], index: 10, kind: input, shape index: {}]
  %s11 = inlined_call_operand.vmem [shape: bf16[2,2,32,96], index: 11, kind: input, shape index: {}]
  %s12 = inlined_call_operand.hbm [shape: bf16[2,2,32,96], index: 12, kind: input, shape index: {}]
  %s13 = inlined_call_operand.vmem [shape: f32[2,2,32], index: 13, kind: input, shape index: {}]
  %s14 = inlined_call_operand.hbm [shape: f32[2,32,32], index: 14, kind: output, shape index: {}]
  %s15 = sld [smem:[#allocation0]]
  $region148: #{tpu_custom_call.1} parent=0
    _
  %s17 = ssub.s32 1, %s15
  %s18 = scalar_select 0, %s17, %s15
  $region1: #{tpu_custom_call.1} parent=0
    #allocation4 [shape = 'u8[16384]{0}', space=vmem, size = 0x4000, scoped, tag = 'input window, operand 1, single buffered']
    #allocation5 [shape = 's32[2]{0}', space=sflag, size = 0x8, scoped, tag = 'scoped memory for tpu_custom_call.1']
    #allocation6 [shape = 's32[2]{0}', space=sflag, size = 0x8, scoped, tag = 'scoped memory for tpu_custom_call.1']
    #allocation7 [shape = 'u8[16384]{0}', space=vmem, size = 0x4000, scoped, tag = 'input window, operand 2, single buffered']
    #allocation8 [shape = 's32[1]{0}', space=sflag, size = 0x4, scoped, tag = 'scoped memory for tpu_custom_call.1']
    #allocation9 [shape = 'u8[16384]{0}', space=vmem, size = 0x4000, scoped, tag = 'input window, operand 3']
    #allocation10 [shape = 'u8[16384]{0}', space=vmem, size = 0x4000, scoped, tag = 'input window, operand 4']
    #allocation11 [shape = 'u8[16384]{0}', space=vmem, size = 0x4000, scoped, tag = 'input window, operand 7']
    #allocation12 [shape = 'u8[32768]{0}', space=vmem, size = 0x8000, scoped, tag = 'input window, operand 12']
    #allocation13 [shape = 'u8[32768]{0}', space=vmem, size = 0x8000, scoped, tag = 'output window, operand 0']
    %19 = vsyncpa [#allocation5], 0
    %20 = vsyncpa [#allocation8], 0
    %21 = vsyncpa [#allocation6], 0
    %s22 = scalar_lea.sflag [#allocation6], 1
    %23 = vsyncpa %s22, 0
    loop: start=0, step=1, limit=4
    $region2: #{tpu_custom_call.1} parent=1 // loop_pre_header
      _
    $region3: #{tpu_custom_call.1} parent=1 // loop_header
      %s25 = sphi 0, %s29
      %p26 = scmp.ge.s32.totalorder %s25, 4
      %s33 = sphi 0, %s33
      %s35 = sphi 0, %s33
      %s36 = sphi 0, %s35
      %s50 = sphi 0, %s36
      %s54 = sphi 0, %s54
      %s56 = sphi 0, %s54
      %s57 = sphi 0, %s56
      %s71 = sphi 0, %s57
      %s77 = sphi 0, %s79
      %s80 = sphi 0, %s77
      %s81 = sphi 0, %s80
      %s97 = sphi 0, %s81
      %s103 = sphi 0, %s105
      %s106 = sphi 0, %s103
      %s107 = sphi 0, %s106
      %s123 = sphi 0, %s107
      %s129 = sphi 0, %s131
      %s132 = sphi 0, %s129
      %s133 = sphi 0, %s132
      %s149 = sphi 0, %s133
      %s155 = sphi 0, %s157
      %s158 = sphi 0, %s155
      %s159 = sphi 0, %s158
      %s175 = sphi 0, %s159
      %s181 = sphi 0, %s183
      %s184 = sphi 0, %s181
      %s185 = sphi 0, %s184
      %s201 = sphi 0, %s185
      %s207 = sphi 0, %s209
      %s210 = sphi 0, %s207
      %s211 = sphi 0, %s210
      %s227 = sphi 0, %s211
      %s233 = sphi 0, %s235
      %s236 = sphi 0, %s233
      %s237 = sphi 0, %s236
      %s253 = sphi 0, %s237
      %s259 = sphi 0, %s261
      %s262 = sphi 0, %s259
      %s263 = sphi 0, %s262
      %s279 = sphi 0, %s263
      %s285 = sphi 0, %s287
      %s288 = sphi 0, %s285
      %s289 = sphi 0, %s288
      %s305 = sphi 0, %s289
      %s311 = sphi 0, %s313
      %s314 = sphi 0, %s311
      %s315 = sphi 0, %s314
      %s331 = sphi 0, %s315
      %s337 = sphi 0, %s339
      %s340 = sphi 0, %s337
      %s341 = sphi 0, %s340
      %s357 = sphi 0, %s341
      %s363 = sphi 0, %s365
      %s366 = sphi 0, %s363
      %s367 = sphi 0, %s366
      %s383 = sphi 0, %s367
    $region4: #{tpu_custom_call.1} parent=1 // loop_header_branch
      %28 = sbr.rel (%p26) target = $region8
    $region5: #{tpu_custom_call.1} parent=1 // loop_body
      %s30 = ssub.s32 %s25, 1
      %s31 = ssub.s32 %s25, 2
      %s32 = sadd.s32 %s25, 1
      %s34 = sadd.s32 %s33, 1
      %p37 = scmp.eq.s32.totalorder %s25, 1
      %p38 = scmp.ne.s32.totalorder %s33, %s35
      %p39 = scmp.eq.s32.totalorder %s25, 0
      %p40 = por %p38, %p39
      %p41 = scmp.ne.s32.totalorder %s33, %s35
      %p42 = scmp.eq.s32.totalorder %s30, 1
      %p43 = por %p41, %p42
      %p44 = scmp.ne.s32.totalorder %s35, %s36
      %p45 = scmp.eq.s32.totalorder %s30, 0
      %p46 = por %p44, %p45
      %p47 = scmp.ne.s32.totalorder %s35, %s36
      %p48 = scmp.eq.s32.totalorder %s31, 1
      %p49 = por %p47, %p48
      %p51 = scmp.ne.s32.totalorder %s36, %s50
      %p52 = scmp.eq.s32.totalorder %s31, 0
      %p53 = por %p51, %p52
      %s55 = sadd.s32 %s54, 1
      %p58 = scmp.eq.s32.totalorder %s25, 1
      %p59 = scmp.ne.s32.totalorder %s54, %s56
      %p60 = scmp.eq.s32.totalorder %s25, 0
      %p61 = por %p59, %p60
      %p62 = scmp.ne.s32.totalorder %s54, %s56
      %p63 = scmp.eq.s32.totalorder %s30, 1
      %p64 = por %p62, %p63
      %p65 = scmp.ne.s32.totalorder %s56, %s57
      %p66 = scmp.eq.s32.totalorder %s30, 0
      %p67 = por %p65, %p66
      %p68 = scmp.ne.s32.totalorder %s56, %s57
      %p69 = scmp.eq.s32.totalorder %s31, 1
      %p70 = por %p68, %p69
      %p72 = scmp.ne.s32.totalorder %s57, %s71
      %p73 = scmp.eq.s32.totalorder %s31, 0
      %p74 = por %p72, %p73
      %s75 = ssub.s32 %s25, %s32
      %p76 = scmp.eq.s32.totalorder %s75, 0
      %s78 = sadd.s32 %s77, 1
      %s79 = scalar_select %p76, %s77, %s78
      %p82 = pneg %p76
      %p83 = scmp.eq.s32.totalorder %s25, 1
      %p84 = por %p82, %p83
      %p85 = scmp.ne.s32.totalorder %s77, %s80
      %p86 = scmp.eq.s32.totalorder %s25, 0
      %p87 = por %p85, %p86
      %p88 = scmp.ne.s32.totalorder %s77, %s80
      %p89 = scmp.eq.s32.totalorder %s30, 1
      %p90 = por %p88, %p89
      %p91 = scmp.ne.s32.totalorder %s80, %s81
      %p92 = scmp.eq.s32.totalorder %s30, 0
      %p93 = por %p91, %p92
      %p94 = scmp.ne.s32.totalorder %s80, %s81
      %p95 = scmp.eq.s32.totalorder %s31, 1
      %p96 = por %p94, %p95
      %p98 = scmp.ne.s32.totalorder %s81, %s97
      %p99 = scmp.eq.s32.totalorder %s31, 0
      %p100 = por %p98, %p99
      %s101 = ssub.s32 %s25, %s32
      %p102 = scmp.eq.s32.totalorder %s101, 0
      %s104 = sadd.s32 %s103, 1
      %s105 = scalar_select %p102, %s103, %s104
      %p108 = pneg %p102
      %p109 = scmp.eq.s32.totalorder %s25, 1
      %p110 = por %p108, %p109
      %p111 = scmp.ne.s32.totalorder %s103, %s106
      %p112 = scmp.eq.s32.totalorder %s25, 0
      %p113 = por %p111, %p112
      %p114 = scmp.ne.s32.totalorder %s103, %s106
      %p115 = scmp.eq.s32.totalorder %s30, 1
      %p116 = por %p114, %p115
      %p117 = scmp.ne.s32.totalorder %s106, %s107
      %p118 = scmp.eq.s32.totalorder %s30, 0
      %p119 = por %p117, %p118
      %p120 = scmp.ne.s32.totalorder %s106, %s107
      %p121 = scmp.eq.s32.totalorder %s31, 1
      %p122 = por %p120, %p121
      %p124 = scmp.ne.s32.totalorder %s107, %s123
      %p125 = scmp.eq.s32.totalorder %s31, 0
      %p126 = por %p124, %p125
      %s127 = ssub.s32 %s25, %s32
      %p128 = scmp.eq.s32.totalorder %s127, 0
      %s130 = sadd.s32 %s129, 1
      %s131 = scalar_select %p128, %s129, %s130
      %p134 = pneg %p128
      %p135 = scmp.eq.s32.totalorder %s25, 1
      %p136 = por %p134, %p135
      %p137 = scmp.ne.s32.totalorder %s129, %s132
      %p138 = scmp.eq.s32.totalorder %s25, 0
      %p139 = por %p137, %p138
      %p140 = scmp.ne.s32.totalorder %s129, %s132
      %p141 = scmp.eq.s32.totalorder %s30, 1
      %p142 = por %p140, %p141
      %p143 = scmp.ne.s32.totalorder %s132, %s133
      %p144 = scmp.eq.s32.totalorder %s30, 0
      %p145 = por %p143, %p144
      %p146 = scmp.ne.s32.totalorder %s132, %s133
      %p147 = scmp.eq.s32.totalorder %s31, 1
      %p148 = por %p146, %p147
      %p150 = scmp.ne.s32.totalorder %s133, %s149
      %p151 = scmp.eq.s32.totalorder %s31, 0
      %p152 = por %p150, %p151
      %s153 = ssub.s32 %s25, %s32
      %p154 = scmp.eq.s32.totalorder %s153, 0
      %s156 = sadd.s32 %s155, 1
      %s157 = scalar_select %p154, %s155, %s156
      %p160 = pneg %p154
      %p161 = scmp.eq.s32.totalorder %s25, 1
      %p162 = por %p160, %p161
      %p163 = scmp.ne.s32.totalorder %s155, %s158
      %p164 = scmp.eq.s32.totalorder %s25, 0
      %p165 = por %p163, %p164
      %p166 = scmp.ne.s32.totalorder %s155, %s158
      %p167 = scmp.eq.s32.totalorder %s30, 1
      %p168 = por %p166, %p167
      %p169 = scmp.ne.s32.totalorder %s158, %s159
      %p170 = scmp.eq.s32.totalorder %s30, 0
      %p171 = por %p169, %p170
      %p172 = scmp.ne.s32.totalorder %s158, %s159
      %p173 = scmp.eq.s32.totalorder %s31, 1
      %p174 = por %p172, %p173
      %p176 = scmp.ne.s32.totalorder %s159, %s175
      %p177 = scmp.eq.s32.totalorder %s31, 0
      %p178 = por %p176, %p177
      %s179 = ssub.s32 %s25, %s32
      %p180 = scmp.eq.s32.totalorder %s179, 0
      %s182 = sadd.s32 %s181, 1
      %s183 = scalar_select %p180, %s181, %s182
      %p186 = pneg %p180
      %p187 = scmp.eq.s32.totalorder %s25, 1
      %p188 = por %p186, %p187
      %p189 = scmp.ne.s32.totalorder %s181, %s184
      %p190 = scmp.eq.s32.totalorder %s25, 0
      %p191 = por %p189, %p190
      %p192 = scmp.ne.s32.totalorder %s181, %s184
      %p193 = scmp.eq.s32.totalorder %s30, 1
      %p194 = por %p192, %p193
      %p195 = scmp.ne.s32.totalorder %s184, %s185
      %p196 = scmp.eq.s32.totalorder %s30, 0
      %p197 = por %p195, %p196
      %p198 = scmp.ne.s32.totalorder %s184, %s185
      %p199 = scmp.eq.s32.totalorder %s31, 1
      %p200 = por %p198, %p199
      %p202 = scmp.ne.s32.totalorder %s185, %s201
      %p203 = scmp.eq.s32.totalorder %s31, 0
      %p204 = por %p202, %p203
      %s205 = ssub.s32 %s25, %s32
      %p206 = scmp.eq.s32.totalorder %s205, 0
      %s208 = sadd.s32 %s207, 1
      %s209 = scalar_select %p206, %s207, %s208
      %p212 = pneg %p206
      %p213 = scmp.eq.s32.totalorder %s25, 1
      %p214 = por %p212, %p213
      %p215 = scmp.ne.s32.totalorder %s207, %s210
      %p216 = scmp.eq.s32.totalorder %s25, 0
      %p217 = por %p215, %p216
      %p218 = scmp.ne.s32.totalorder %s207, %s210
      %p219 = scmp.eq.s32.totalorder %s30, 1
      %p220 = por %p218, %p219
      %p221 = scmp.ne.s32.totalorder %s210, %s211
      %p222 = scmp.eq.s32.totalorder %s30, 0
      %p223 = por %p221, %p222
      %p224 = scmp.ne.s32.totalorder %s210, %s211
      %p225 = scmp.eq.s32.totalorder %s31, 1
      %p226 = por %p224, %p225
      %p228 = scmp.ne.s32.totalorder %s211, %s227
      %p229 = scmp.eq.s32.totalorder %s31, 0
      %p230 = por %p228, %p229
      %s231 = ssub.s32 %s25, %s32
      %p232 = scmp.eq.s32.totalorder %s231, 0
      %s234 = sadd.s32 %s233, 1
      %s235 = scalar_select %p232, %s233, %s234
      %p238 = pneg %p232
      %p239 = scmp.eq.s32.totalorder %s25, 1
      %p240 = por %p238, %p239
      %p241 = scmp.ne.s32.totalorder %s233, %s236
      %p242 = scmp.eq.s32.totalorder %s25, 0
      %p243 = por %p241, %p242
      %p244 = scmp.ne.s32.totalorder %s233, %s236
      %p245 = scmp.eq.s32.totalorder %s30, 1
      %p246 = por %p244, %p245
      %p247 = scmp.ne.s32.totalorder %s236, %s237
      %p248 = scmp.eq.s32.totalorder %s30, 0
      %p249 = por %p247, %p248
      %p250 = scmp.ne.s32.totalorder %s236, %s237
      %p251 = scmp.eq.s32.totalorder %s31, 1
      %p252 = por %p250, %p251
      %p254 = scmp.ne.s32.totalorder %s237, %s253
      %p255 = scmp.eq.s32.totalorder %s31, 0
      %p256 = por %p254, %p255
      %s257 = ssub.s32 %s25, %s32
      %p258 = scmp.eq.s32.totalorder %s257, 0
      %s260 = sadd.s32 %s259, 1
      %s261 = scalar_select %p258, %s259, %s260
      %p264 = pneg %p258
      %p265 = scmp.eq.s32.totalorder %s25, 1
      %p266 = por %p264, %p265
      %p267 = scmp.ne.s32.totalorder %s259, %s262
      %p268 = scmp.eq.s32.totalorder %s25, 0
      %p269 = por %p267, %p268
      %p270 = scmp.ne.s32.totalorder %s259, %s262
      %p271 = scmp.eq.s32.totalorder %s30, 1
      %p272 = por %p270, %p271
      %p273 = scmp.ne.s32.totalorder %s262, %s263
      %p274 = scmp.eq.s32.totalorder %s30, 0
      %p275 = por %p273, %p274
      %p276 = scmp.ne.s32.totalorder %s262, %s263
      %p277 = scmp.eq.s32.totalorder %s31, 1
      %p278 = por %p276, %p277
      %p280 = scmp.ne.s32.totalorder %s263, %s279
      %p281 = scmp.eq.s32.totalorder %s31, 0
      %p282 = por %p280, %p281
      %s283 = ssub.s32 %s25, %s32
      %p284 = scmp.eq.s32.totalorder %s283, 0
      %s286 = sadd.s32 %s285, 1
      %s287 = scalar_select %p284, %s285, %s286
      %p290 = pneg %p284
      %p291 = scmp.eq.s32.totalorder %s25, 1
      %p292 = por %p290, %p291
      %p293 = scmp.ne.s32.totalorder %s285, %s288
      %p294 = scmp.eq.s32.totalorder %s25, 0
      %p295 = por %p293, %p294
      %p296 = scmp.ne.s32.totalorder %s285, %s288
      %p297 = scmp.eq.s32.totalorder %s30, 1
      %p298 = por %p296, %p297
      %p299 = scmp.ne.s32.totalorder %s288, %s289
      %p300 = scmp.eq.s32.totalorder %s30, 0
      %p301 = por %p299, %p300
      %p302 = scmp.ne.s32.totalorder %s288, %s289
      %p303 = scmp.eq.s32.totalorder %s31, 1
      %p304 = por %p302, %p303
      %p306 = scmp.ne.s32.totalorder %s289, %s305
      %p307 = scmp.eq.s32.totalorder %s31, 0
      %p308 = por %p306, %p307
      %s309 = ssub.s32 %s25, %s32
      %p310 = scmp.eq.s32.totalorder %s309, 0
      %s312 = sadd.s32 %s311, 1
      %s313 = scalar_select %p310, %s311, %s312
      %p316 = pneg %p310
      %p317 = scmp.eq.s32.totalorder %s25, 1
      %p318 = por %p316, %p317
      %p319 = scmp.ne.s32.totalorder %s311, %s314
      %p320 = scmp.eq.s32.totalorder %s25, 0
      %p321 = por %p319, %p320
      %p322 = scmp.ne.s32.totalorder %s311, %s314
      %p323 = scmp.eq.s32.totalorder %s30, 1
      %p324 = por %p322, %p323
      %p325 = scmp.ne.s32.totalorder %s314, %s315
      %p326 = scmp.eq.s32.totalorder %s30, 0
      %p327 = por %p325, %p326
      %p328 = scmp.ne.s32.totalorder %s314, %s315
      %p329 = scmp.eq.s32.totalorder %s31, 1
      %p330 = por %p328, %p329
      %p332 = scmp.ne.s32.totalorder %s315, %s331
      %p333 = scmp.eq.s32.totalorder %s31, 0
      %p334 = por %p332, %p333
      %s335 = ssub.s32 %s25, %s32
      %p336 = scmp.eq.s32.totalorder %s335, 0
      %s338 = sadd.s32 %s337, 1
      %s339 = scalar_select %p336, %s337, %s338
      %p342 = pneg %p336
      %p343 = scmp.eq.s32.totalorder %s25, 1
      %p344 = por %p342, %p343
      %p345 = scmp.ne.s32.totalorder %s337, %s340
      %p346 = scmp.eq.s32.totalorder %s25, 0
      %p347 = por %p345, %p346
      %p348 = scmp.ne.s32.totalorder %s337, %s340
      %p349 = scmp.eq.s32.totalorder %s30, 1
      %p350 = por %p348, %p349
      %p351 = scmp.ne.s32.totalorder %s340, %s341
      %p352 = scmp.eq.s32.totalorder %s30, 0
      %p353 = por %p351, %p352
      %p354 = scmp.ne.s32.totalorder %s340, %s341
      %p355 = scmp.eq.s32.totalorder %s31, 1
      %p356 = por %p354, %p355
      %p358 = scmp.ne.s32.totalorder %s341, %s357
      %p359 = scmp.eq.s32.totalorder %s31, 0
      %p360 = por %p358, %p359
      %s361 = ssub.s32 %s25, %s32
      %p362 = scmp.eq.s32.totalorder %s361, 0
      %s364 = sadd.s32 %s363, 1
      %s365 = scalar_select %p362, %s363, %s364
      %p368 = pneg %p362
      %p369 = scmp.eq.s32.totalorder %s25, 1
      %p370 = por %p368, %p369
      %p371 = scmp.ne.s32.totalorder %s363, %s366
      %p372 = scmp.eq.s32.totalorder %s25, 0
      %p373 = por %p371, %p372
      %p374 = scmp.ne.s32.totalorder %s363, %s366
      %p375 = scmp.eq.s32.totalorder %s30, 1
      %p376 = por %p374, %p375
      %p377 = scmp.ne.s32.totalorder %s366, %s367
      %p378 = scmp.eq.s32.totalorder %s30, 0
      %p379 = por %p377, %p378
      %p380 = scmp.ne.s32.totalorder %s366, %s367
      %p381 = scmp.eq.s32.totalorder %s31, 1
      %p382 = por %p380, %p381
      %p384 = scmp.ne.s32.totalorder %s367, %s383
      %p385 = scmp.eq.s32.totalorder %s31, 0
      %p386 = por %p384, %p385
      %p387 = scmp.le.s32.totalorder 1, %s25
      %p388 = scmp.lt.s32.totalorder %s25, 3
      %p389 = pnand %p387, %p388
      %p390 = pneg %p389
      // Predicated region
      $region9: #{tpu_custom_call.1} parent=5 // pred_check
        _
      $region10: #{tpu_custom_call.1} parent=5 // pred_check_branch
        %392 = sbr.rel (%p389) target = $region12
      $region11: #{tpu_custom_call.1} parent=5 // pred_region
        %s393 = ssub.s32 %s25, 1
        // Predicated region
        $region13: #{tpu_custom_call.1} parent=11 // pred_check
          %p394 = pneg %p46
        $region14: #{tpu_custom_call.1} parent=11 // pred_check_branch
          %396 = sbr.rel (%p394) target = $region16
        $region15: #{tpu_custom_call.1} parent=11 // pred_region
          %s398 = ssub.s32 512, 512
          %399 = vsyncadd [#allocation5], %s398
          %s400 = sshll.u32 [#allocation4], 4
          %s401 = int_to_ptr.vmem [resolvable:$true] %s400
          %406 = dma.hbm_to_vmem [thread:$0]  %s1, 512, %s401, [#allocation5], 128, 128, 8
        $region16: #{tpu_custom_call.1} parent=11 // pred_fallthru
          _
        // Predicated region
        $region17: #{tpu_custom_call.1} parent=11 // pred_check
          %p407 = pneg %p67
        $region18: #{tpu_custom_call.1} parent=11 // pred_check_branch
          %409 = sbr.rel (%p407) target = $region20
        $region19: #{tpu_custom_call.1} parent=11 // pred_region
          %s411 = ssub.s32 512, 512
          %412 = vsyncadd [#allocation8], %s411
          %s413 = sshll.u32 [#allocation7], 4
          %s414 = int_to_ptr.vmem [resolvable:$true] %s413
          %419 = dma.hbm_to_vmem [thread:$0]  %s2, 512, %s414, [#allocation8], 128, 128, 8
        $region20: #{tpu_custom_call.1} parent=11 // pred_fallthru
          _
      $region12: #{tpu_custom_call.1} parent=5 // pred_fallthru
        _
      %p420 = scmp.lt.s32.totalorder %s25, 2
      // Predicated region
      $region21: #{tpu_custom_call.1} parent=5 // pred_check
        %p421 = pneg %p420
      $region22: #{tpu_custom_call.1} parent=5 // pred_check_branch
        %423 = sbr.rel (%p421) target = $region24
      $region23: #{tpu_custom_call.1} parent=5 // pred_region
        // Predicated region
        $region25: #{tpu_custom_call.1} parent=23 // pred_check
          %p424 = pneg %p87
        $region26: #{tpu_custom_call.1} parent=23 // pred_check_branch
          %426 = sbr.rel (%p424) target = $region28
        $region27: #{tpu_custom_call.1} parent=23 // pred_region
          %s427 = sand.u32 %s25, 1
          %s428 = scalar_lea.sflag [#allocation5], %s427
          %s429 = sand.u32 %s77, 1
          %s430 = smul.addr %s429, 16
          %s431 = scalar_lea.vmem [#allocation9], %s430
          %s433 = ssub.s32 256, 256
          %434 = vsyncadd %s428, %s433
          %s435 = smul.addr %s25, 4
          %s436 = smul.addr %s435, 64
          %s437 = scalar_lea.hbm %s3, %s436
          %s438 = sshll.u32 %s431, 4
          %s439 = int_to_ptr.vmem [resolvable:$true] %s438
          %444 = dma.hbm_to_vmem [thread:$0]  %s437, 256, %s439, %s428, 64, 64, 4
        $region28: #{tpu_custom_call.1} parent=23 // pred_fallthru
          _
        // Predicated region
        $region29: #{tpu_custom_call.1} parent=23 // pred_check
          %p445 = pneg %p113
        $region30: #{tpu_custom_call.1} parent=23 // pred_check_branch
          %447 = sbr.rel (%p445) target = $region32
        $region31: #{tpu_custom_call.1} parent=23 // pred_region
          %s448 = sand.u32 %s25, 1
          %s449 = scalar_lea.sflag [#allocation5], %s448
          %s450 = sand.u32 %s103, 1
          %s451 = smul.addr %s450, 16
          %s452 = scalar_lea.vmem [#allocation10], %s451
          %s454 = ssub.s32 256, 256
          %455 = vsyncadd %s449, %s454
          %s456 = smul.addr %s25, 4
          %s457 = smul.addr %s456, 64
          %s458 = scalar_lea.hbm %s4, %s457
          %s459 = sshll.u32 %s452, 4
          %s460 = int_to_ptr.vmem [resolvable:$true] %s459
          %465 = dma.hbm_to_vmem [thread:$0]  %s458, 256, %s460, %s449, 64, 64, 4
        $region32: #{tpu_custom_call.1} parent=23 // pred_fallthru
          _
        // Predicated region
        $region33: #{tpu_custom_call.1} parent=23 // pred_check
          %p466 = pneg %p139
        $region34: #{tpu_custom_call.1} parent=23 // pred_check_branch
          %468 = sbr.rel (%p466) target = $region36
        $region35: #{tpu_custom_call.1} parent=23 // pred_region
          %p469 = scmp.lt.s32.totalorder %s25, 1
          %s470 = scalar_select %p469, %s25, 1
          %s471 = smul.addr %s470, 2
          %s472 = scalar_lea.vmem %s5, %s471
        $region36: #{tpu_custom_call.1} parent=23 // pred_fallthru
          _
        // Predicated region
        $region37: #{tpu_custom_call.1} parent=23 // pred_check
          %p473 = pneg %p165
        $region38: #{tpu_custom_call.1} parent=23 // pred_check_branch
          %475 = sbr.rel (%p473) target = $region40
        $region39: #{tpu_custom_call.1} parent=23 // pred_region
          %p476 = scmp.lt.s32.totalorder %s25, 1
          %s477 = scalar_select %p476, %s25, 1
          %s478 = smul.addr %s477, 2
          %s479 = scalar_lea.vmem %s6, %s478
        $region40: #{tpu_custom_call.1} parent=23 // pred_fallthru
          _
        // Predicated region
        $region41: #{tpu_custom_call.1} parent=23 // pred_check
          %p480 = pneg %p191
        $region42: #{tpu_custom_call.1} parent=23 // pred_check_branch
          %482 = sbr.rel (%p480) target = $region44
        $region43: #{tpu_custom_call.1} parent=23 // pred_region
          %s483 = sand.u32 %s25, 1
          %s484 = scalar_lea.sflag [#allocation5], %s483
          %s485 = sand.u32 %s181, 1
          %s486 = smul.addr %s485, 16
          %s487 = scalar_lea.vmem [#allocation11], %s486
          %s489 = ssub.s32 256, 256
          %490 = vsyncadd %s484, %s489
          %s491 = smul.addr %s25, 4
          %s492 = smul.addr %s491, 64
          %s493 = scalar_lea.hbm %s7, %s492
          %s494 = sshll.u32 %s487, 4
          %s495 = int_to_ptr.vmem [resolvable:$true] %s494
          %500 = dma.hbm_to_vmem [thread:$0]  %s493, 256, %s495, %s484, 64, 64, 4
        $region44: #{tpu_custom_call.1} parent=23 // pred_fallthru
          _
        // Predicated region
        $region45: #{tpu_custom_call.1} parent=23 // pred_check
          %p501 = pneg %p217
        $region46: #{tpu_custom_call.1} parent=23 // pred_check_branch
          %503 = sbr.rel (%p501) target = $region48
        $region47: #{tpu_custom_call.1} parent=23 // pred_region
          %p504 = scmp.lt.s32.totalorder %s25, 1
          %s505 = scalar_select %p504, %s25, 1
          %s506 = scalar_lea.vmem %s8, %s505
        $region48: #{tpu_custom_call.1} parent=23 // pred_fallthru
          _
        // Predicated region
        $region49: #{tpu_custom_call.1} parent=23 // pred_check
          %p507 = pneg %p243
        $region50: #{tpu_custom_call.1} parent=23 // pred_check_branch
          %509 = sbr.rel (%p507) target = $region52
        $region51: #{tpu_custom_call.1} parent=23 // pred_region
          %p510 = scmp.lt.s32.totalorder %s25, 1
          %s511 = scalar_select %p510, %s25, 1
          %s512 = smul.addr %s511, 8
          %s513 = smul.addr %s512, 4
          %s514 = scalar_lea.vmem %s9, %s513
        $region52: #{tpu_custom_call.1} parent=23 // pred_fallthru
          _
        // Predicated region
        $region53: #{tpu_custom_call.1} parent=23 // pred_check
          %p515 = pneg %p269
        $region54: #{tpu_custom_call.1} parent=23 // pred_check_branch
          %517 = sbr.rel (%p515) target = $region56
        $region55: #{tpu_custom_call.1} parent=23 // pred_region
          %p518 = scmp.lt.s32.totalorder %s25, 1
          %s519 = scalar_select %p518, %s25, 1
          %s520 = scalar_lea.vmem %s10, %s519
        $region56: #{tpu_custom_call.1} parent=23 // pred_fallthru
          _
        // Predicated region
        $region57: #{tpu_custom_call.1} parent=23 // pred_check
          %p521 = pneg %p295
        $region58: #{tpu_custom_call.1} parent=23 // pred_check_branch
          %523 = sbr.rel (%p521) target = $region60
        $region59: #{tpu_custom_call.1} parent=23 // pred_region
          %p524 = scmp.lt.s32.totalorder %s25, 1
          %s525 = scalar_select %p524, %s25, 1
          %s526 = smul.addr %s525, 8
          %s527 = smul.addr %s526, 4
          %s528 = scalar_lea.vmem %s11, %s527
        $region60: #{tpu_custom_call.1} parent=23 // pred_fallthru
          _
        // Predicated region
        $region61: #{tpu_custom_call.1} parent=23 // pred_check
          %p529 = pneg %p321
        $region62: #{tpu_custom_call.1} parent=23 // pred_check_branch
          %531 = sbr.rel (%p529) target = $region64
        $region63: #{tpu_custom_call.1} parent=23 // pred_region
          %s532 = sand.u32 %s25, 1
          %s533 = scalar_lea.sflag [#allocation5], %s532
          %s534 = sand.u32 %s311, 1
          %s535 = smul.addr %s534, 32
          %s536 = scalar_lea.vmem [#allocation12], %s535
          %s538 = ssub.s32 512, 512
          %539 = vsyncadd %s533, %s538
          %s540 = smul.addr %s25, 8
          %s541 = smul.addr %s540, 64
          %s542 = scalar_lea.hbm %s12, %s541
          %s543 = sshll.u32 %s536, 4
          %s544 = int_to_ptr.vmem [resolvable:$true] %s543
          %549 = dma.hbm_to_vmem [thread:$0]  %s542, 512, %s544, %s533, 64, 64, 4
        $region64: #{tpu_custom_call.1} parent=23 // pred_fallthru
          _
        // Predicated region
        $region65: #{tpu_custom_call.1} parent=23 // pred_check
          %p550 = pneg %p347
        $region66: #{tpu_custom_call.1} parent=23 // pred_check_branch
          %552 = sbr.rel (%p550) target = $region68
        $region67: #{tpu_custom_call.1} parent=23 // pred_region
          %p553 = scmp.lt.s32.totalorder %s25, 1
          %s554 = scalar_select %p553, %s25, 1
          %s555 = smul.addr %s554, 2
          %s556 = scalar_lea.vmem %s13, %s555
        $region68: #{tpu_custom_call.1} parent=23 // pred_fallthru
          _
      $region24: #{tpu_custom_call.1} parent=5 // pred_fallthru
        _
      %p557 = scmp.le.s32.totalorder 1, %s25
      %p558 = scmp.lt.s32.totalorder %s25, 3
      %p559 = pnand %p557, %p558
      %p560 = pneg %p559
      // Predicated region
      $region69: #{tpu_custom_call.1} parent=5 // pred_check
        _
      $region70: #{tpu_custom_call.1} parent=5 // pred_check_branch
        %562 = sbr.rel (%p559) target = $region72
      $region71: #{tpu_custom_call.1} parent=5 // pred_region
        %s563 = ssub.s32 %s25, 1
        // Predicated region
        $region73: #{tpu_custom_call.1} parent=71 // pred_check
          %p564 = pneg %p46
        $region74: #{tpu_custom_call.1} parent=71 // pred_check_branch
          %566 = sbr.rel (%p564) target = $region76
        $region75: #{tpu_custom_call.1} parent=71 // pred_region
          %567 = dma.done [#allocation5], 512
        $region76: #{tpu_custom_call.1} parent=71 // pred_fallthru
          _
        // Predicated region
        $region77: #{tpu_custom_call.1} parent=71 // pred_check
          %p568 = pneg %p67
        $region78: #{tpu_custom_call.1} parent=71 // pred_check_branch
          %570 = sbr.rel (%p568) target = $region80
        $region79: #{tpu_custom_call.1} parent=71 // pred_region
          %571 = dma.done [#allocation8], 512
        $region80: #{tpu_custom_call.1} parent=71 // pred_fallthru
          _
        %s572 = sand.u32 %s30, 1
        %s573 = scalar_lea.sflag [#allocation5], %s572
        %s574 = sand.u32 %s80, 1
        %s575 = smul.addr %s574, 16
        %s576 = scalar_lea.vmem [#allocation9], %s575
        // Predicated region
        $region81: #{tpu_custom_call.1} parent=71 // pred_check
          %p577 = pneg %p93
        $region82: #{tpu_custom_call.1} parent=71 // pred_check_branch
          %579 = sbr.rel (%p577) target = $region84
        $region83: #{tpu_custom_call.1} parent=71 // pred_region
          %580 = dma.done %s573, 256
        $region84: #{tpu_custom_call.1} parent=71 // pred_fallthru
          _
        %s581 = sand.u32 %s30, 1
        %s582 = scalar_lea.sflag [#allocation5], %s581
        %s583 = sand.u32 %s106, 1
        %s584 = smul.addr %s583, 16
        %s585 = scalar_lea.vmem [#allocation10], %s584
        // Predicated region
        $region85: #{tpu_custom_call.1} parent=71 // pred_check
          %p586 = pneg %p119
        $region86: #{tpu_custom_call.1} parent=71 // pred_check_branch
          %588 = sbr.rel (%p586) target = $region88
        $region87: #{tpu_custom_call.1} parent=71 // pred_region
          %589 = dma.done %s582, 256
        $region88: #{tpu_custom_call.1} parent=71 // pred_fallthru
          _
        %s590 = sand.u32 %s30, 1
        %s591 = scalar_lea.sflag [#allocation5], %s590
        %s592 = sand.u32 %s184, 1
        %s593 = smul.addr %s592, 16
        %s594 = scalar_lea.vmem [#allocation11], %s593
        // Predicated region
        $region89: #{tpu_custom_call.1} parent=71 // pred_check
          %p595 = pneg %p197
        $region90: #{tpu_custom_call.1} parent=71 // pred_check_branch
          %597 = sbr.rel (%p595) target = $region92
        $region91: #{tpu_custom_call.1} parent=71 // pred_region
          %598 = dma.done %s591, 256
        $region92: #{tpu_custom_call.1} parent=71 // pred_fallthru
          _
        %s599 = sand.u32 %s30, 1
        %s600 = scalar_lea.sflag [#allocation5], %s599
        %s601 = sand.u32 %s314, 1
        %s602 = smul.addr %s601, 32
        %s603 = scalar_lea.vmem [#allocation12], %s602
        // Predicated region
        $region93: #{tpu_custom_call.1} parent=71 // pred_check
          %p604 = pneg %p327
        $region94: #{tpu_custom_call.1} parent=71 // pred_check_branch
          %606 = sbr.rel (%p604) target = $region96
        $region95: #{tpu_custom_call.1} parent=71 // pred_region
          %607 = dma.done %s600, 512
        $region96: #{tpu_custom_call.1} parent=71 // pred_fallthru
          _
        %p608 = pneg %p46
        %p609 = pneg %p43
        %p610 = pneg %p67
        %p611 = pneg %p64
        %s612 = sand.u32 %s30, 1
        %s613 = scalar_lea.sflag [#allocation5], %s612
        %s614 = sand.u32 %s80, 1
        %s615 = smul.addr %s614, 16
        %s616 = scalar_lea.vmem [#allocation9], %s615
        %p617 = pneg %p93
        %p618 = pneg %p90
        %s619 = sand.u32 %s30, 1
        %s620 = scalar_lea.sflag [#allocation5], %s619
        %s621 = sand.u32 %s106, 1
        %s622 = smul.addr %s621, 16
        %s623 = scalar_lea.vmem [#allocation10], %s622
        %p624 = pneg %p119
        %p625 = pneg %p116
        %p626 = scmp.lt.s32.totalorder %s30, 1
        %s627 = scalar_select %p626, %s30, 1
        %s628 = smul.addr %s627, 2
        %s629 = scalar_lea.vmem %s5, %s628
        %p630 = pneg %p145
        %p631 = pneg %p142
        %p632 = scmp.lt.s32.totalorder %s30, 1
        %s633 = scalar_select %p632, %s30, 1
        %s634 = smul.addr %s633, 2
        %s635 = scalar_lea.vmem %s6, %s634
        %p636 = pneg %p171
        %p637 = pneg %p168
        %s638 = sand.u32 %s30, 1
        %s639 = scalar_lea.sflag [#allocation5], %s638
        %s640 = sand.u32 %s184, 1
        %s641 = smul.addr %s640, 16
        %s642 = scalar_lea.vmem [#allocation11], %s641
        %p643 = pneg %p197
        %p644 = pneg %p194
        %p645 = scmp.lt.s32.totalorder %s30, 1
        %s646 = scalar_select %p645, %s30, 1
        %s647 = scalar_lea.vmem %s8, %s646
        %p648 = pneg %p223
        %p649 = pneg %p220
        %p650 = scmp.lt.s32.totalorder %s30, 1
        %s651 = scalar_select %p650, %s30, 1
        %s652 = smul.addr %s651, 8
        %s653 = smul.addr %s652, 4
        %s654 = scalar_lea.vmem %s9, %s653
        %p655 = pneg %p249
        %p656 = pneg %p246
        %p657 = scmp.lt.s32.totalorder %s30, 1
        %s658 = scalar_select %p657, %s30, 1
        %s659 = scalar_lea.vmem %s10, %s658
        %p660 = pneg %p275
        %p661 = pneg %p272
        %p662 = scmp.lt.s32.totalorder %s30, 1
        %s663 = scalar_select %p662, %s30, 1
        %s664 = smul.addr %s663, 8
        %s665 = smul.addr %s664, 4
        %s666 = scalar_lea.vmem %s11, %s665
        %p667 = pneg %p301
        %p668 = pneg %p298
        %s669 = sand.u32 %s30, 1
        %s670 = scalar_lea.sflag [#allocation5], %s669
        %s671 = sand.u32 %s314, 1
        %s672 = smul.addr %s671, 32
        %s673 = scalar_lea.vmem [#allocation12], %s672
        %p674 = pneg %p327
        %p675 = pneg %p324
        %p676 = scmp.lt.s32.totalorder %s30, 1
        %s677 = scalar_select %p676, %s30, 1
        %s678 = smul.addr %s677, 2
        %s679 = scalar_lea.vmem %s13, %s678
        %p680 = pneg %p353
        %p681 = pneg %p350
        %p682 = pneg %p379
        %p683 = pneg %p376
        %s684 = sand.u32 %s366, 1
        %s685 = scalar_lea.sflag [#allocation6], %s684
        %s686 = sand.u32 %s366, 1
        %s687 = smul.addr %s686, 32
        %s688 = scalar_lea.vmem [#allocation13], %s687
        %p689 = scmp.lt.s32.totalorder %s30, 1
        %s690 = scalar_select %p689, %s30, 1
        %s691 = smul.addr %s690, 2
        %s692 = scalar_lea.vmem %s5, %s691
        %p693 = scmp.lt.s32.totalorder %s30, 1
        %s694 = scalar_select %p693, %s30, 1
        %s695 = smul.addr %s694, 2
        %s696 = scalar_lea.vmem %s6, %s695
        %p697 = scmp.lt.s32.totalorder %s30, 1
        %s698 = scalar_select %p697, %s30, 1
        %s699 = scalar_lea.vmem %s8, %s698
        %p700 = scmp.lt.s32.totalorder %s30, 1
        %s701 = scalar_select %p700, %s30, 1
        %s702 = smul.addr %s701, 8
        %s703 = smul.addr %s702, 4
        %s704 = scalar_lea.vmem %s9, %s703
        %p705 = scmp.lt.s32.totalorder %s30, 1
        %s706 = scalar_select %p705, %s30, 1
        %s707 = scalar_lea.vmem %s10, %s706
        %p708 = scmp.lt.s32.totalorder %s30, 1
        %s709 = scalar_select %p708, %s30, 1
        %s710 = smul.addr %s709, 8
        %s711 = smul.addr %s710, 4
        %s712 = scalar_lea.vmem %s11, %s711
        %p713 = scmp.lt.s32.totalorder %s30, 1
        %s714 = scalar_select %p713, %s30, 1
        %s715 = smul.addr %s714, 2
        %s716 = scalar_lea.vmem %s13, %s715
        %p718 = scmp.eq.s32.totalorder %s30, 0
        // Predicated region
        $region97: #{tpu_custom_call.1} parent=71 // pred_check
          %p719 = pneg %p718
        $region98: #{tpu_custom_call.1} parent=71 // pred_check_branch
          %721 = sbr.rel (%p719) target = $region100
        $region99: #{tpu_custom_call.1} parent=71 // pred_region
          $region101: #{tpu_custom_call.1} parent=99
            #allocation14 [shape = 's32[1]{0}', space=sflag, size = 0x4, scoped, tag = 'scoped memory for tpu_custom_call.1']
            %p723 = scmp.lt.u32.totalorder 32, 8
            %p724 = pneg %p723
            // Predicated region
            $region102: #{tpu_custom_call.1} parent=101 // pred_check
              _
            $region103: #{tpu_custom_call.1} parent=101 // pred_check_branch
              %726 = sbr.rel (%p723) target = $region105
            $region104: #{tpu_custom_call.1} parent=101 // pred_region
              %s742 = sand.u32 32, 7
              %p743 = scmp.eq.s32.totalorder %s742, 0
              // Predicated region
              $region117: #{tpu_custom_call.1} parent=104 // pred_check
                %p744 = pneg %p743
              $region118: #{tpu_custom_call.1} parent=104 // pred_check_branch
                %746 = sbr.rel (%p744) target = $region120
              $region119: #{tpu_custom_call.1} parent=104 // pred_region
                loop: start=0, step=1, limit=1
                $region121: #{tpu_custom_call.1} parent=119 // loop_pre_header
                  _
                $region122: #{tpu_custom_call.1} parent=119 // loop_header
                  %s748 = sphi 0, %s752
                  %p749 = scmp.ge.s32.totalorder %s748, 1
                  %s753 = sphi %s0, %s0
                  %s754 = sphi [#allocation2], [#allocation2]
                $region123: #{tpu_custom_call.1} parent=119 // loop_header_branch
                  %751 = sbr.rel (%p749) target = $region127
                $region124: #{tpu_custom_call.1} parent=119 // loop_body
                  %v755 = vld [vmem:[%s753] sm:$0xff]
                  %756 = vst [vmem:[%s754] sm:$0xff] %v755
                  %v757 = vld [vmem:[%s753 + $0x8] sm:$0xff]
                  %758 = vst [vmem:[%s754 + $0x8] sm:$0xff] %v757
                  %v759 = vld [vmem:[%s753 + $0x10] sm:$0xff]
                  %760 = vst [vmem:[%s754 + $0x10] sm:$0xff] %v759
                  %v761 = vld [vmem:[%s753 + $0x18] sm:$0xff]
                  %762 = vst [vmem:[%s754 + $0x18] sm:$0xff] %v761
                $region125: #{tpu_custom_call.1} parent=119 // loop_footer
                  %s752 = sadd.s32 1, %s748
                $region126: #{tpu_custom_call.1} parent=119 // loop_footer_branch
                  %747 = sbr.rel target = $region122
                $region127: #{tpu_custom_call.1} parent=119 // loop_exit
                  _
              $region120: #{tpu_custom_call.1} parent=104 // pred_fallthru
                _
              %p763 = pneg %p743
              // Predicated region
              $region128: #{tpu_custom_call.1} parent=104 // pred_check
                _
              $region129: #{tpu_custom_call.1} parent=104 // pred_check_branch
                %765 = sbr.rel (%p743) target = $region131
              $region130: #{tpu_custom_call.1} parent=104 // pred_region
                %s766 = sand.u32 32, 7
              $region131: #{tpu_custom_call.1} parent=104 // pred_fallthru
                _
            $region105: #{tpu_custom_call.1} parent=101 // pred_fallthru
              _
            // Predicated region
            $region106: #{tpu_custom_call.1} parent=101 // pred_check
              %p727 = pneg %p723
            $region107: #{tpu_custom_call.1} parent=101 // pred_check_branch
              %729 = sbr.rel (%p727) target = $region109
            $region108: #{tpu_custom_call.1} parent=101 // pred_region
              %s730 = sshll.u32 1, 32
              %s731 = ssub.s32 %s730, 1
              loop: start=0, step=1, limit=1
              $region110: #{tpu_custom_call.1} parent=108 // loop_pre_header
                _
              $region111: #{tpu_custom_call.1} parent=108 // loop_header
                %s733 = sphi 0, %s737
                %p734 = scmp.ge.s32.totalorder %s733, 1
                %s738 = sphi %s0, %s0
                %s739 = sphi [#allocation2], [#allocation2]
              $region112: #{tpu_custom_call.1} parent=108 // loop_header_branch
                %736 = sbr.rel (%p734) target = $region116
              $region113: #{tpu_custom_call.1} parent=108 // loop_body
                %v740 = vld [vmem:[%s738] sm:%s731]
                %741 = vst [vmem:[%s739] sm:%s731] %v740
              $region114: #{tpu_custom_call.1} parent=108 // loop_footer
                %s737 = sadd.s32 1, %s733
              $region115: #{tpu_custom_call.1} parent=108 // loop_footer_branch
                %732 = sbr.rel target = $region111
              $region116: #{tpu_custom_call.1} parent=108 // loop_exit
                _
            $region109: #{tpu_custom_call.1} parent=101 // pred_fallthru
              _
            // Predicated region
            $region132: #{tpu_custom_call.1} parent=101 // pred_check
              _
            $region133: #{tpu_custom_call.1} parent=101 // pred_check_branch
              %769 = sbr.rel (0) target = $region135
            $region134: #{tpu_custom_call.1} parent=101 // pred_region
              %770 = vsyncadd [#allocation14], 512
            $region135: #{tpu_custom_call.1} parent=101 // pred_fallthru
              _
            %s771 = smul.u32 32, 1
            %s772 = sshll.u32 %s771, 4
            %773 = dma.done [#allocation14], %s772
        $region100: #{tpu_custom_call.1} parent=71 // pred_fallthru
          _
        %v774 = vld [vmem:[%s576] sm:$0xf]
        %v775 = vld [vmem:[%s576 + $0x4] sm:$0xf]
        %v776 = vld [vmem:[%s576 + $0x8] sm:$0xf]
        %v777 = vld [vmem:[%s576 + $0xc] sm:$0xf]
        %v778 = vld [vmem:[%s585] sm:$0xf]
        %v779 = vld [vmem:[%s585 + $0x4] sm:$0xf]
        %v780 = vld [vmem:[%s585 + $0x8] sm:$0xf]
        %v781 = vld [vmem:[%s585 + $0xc] sm:$0xf]
        %v782 = vld [vmem:[%s692] sm:$0x3]
        %v783 = vld [vmem:[%s696] sm:$0x3]
        %v784 = vld [vmem:[%s594] sm:$0xf]
        %v785 = vld [vmem:[%s594 + $0x4] sm:$0xf]
        %v786 = vld [vmem:[%s594 + $0x8] sm:$0xf]
        %v787 = vld [vmem:[%s594 + $0xc] sm:$0xf]
        %v788 = vld [vmem:[%s699] sm:$0x1]
        %v789 = vld [vmem:[%s704] sm:$0xf]
        %v790 = vld [vmem:[%s704 + $0x4] sm:$0xf]
        %v791 = vld [vmem:[%s704 + $0x8] sm:$0xf]
        %v792 = vld [vmem:[%s704 + $0xc] sm:$0xf]
        %v793 = vld [vmem:[%s704 + $0x10] sm:$0xf]
        %v794 = vld [vmem:[%s704 + $0x14] sm:$0xf]
        %v795 = vld [vmem:[%s704 + $0x18] sm:$0xf]
        %v796 = vld [vmem:[%s704 + $0x1c] sm:$0xf]
        %v797 = vld [vmem:[%s707] sm:$0x1]
        %v798 = vld [vmem:[%s716] sm:$0x3]
        %v799 = vld [vmem:[%s712] sm:$0xf]
        %v800 = vld [vmem:[%s712 + $0x4] sm:$0xf]
        %v801 = vld [vmem:[%s712 + $0x8] sm:$0xf]
        %v802 = vld [vmem:[%s712 + $0xc] sm:$0xf]
        %s803 = scalar_lea.vmem %s712, 16
        %v804 = vld [vmem:[%s803] sm:$0xf]
        %v805 = vld [vmem:[%s803 + $0x4] sm:$0xf]
        %v806 = vld [vmem:[%s803 + $0x8] sm:$0xf]
        %v807 = vld [vmem:[%s803 + $0xc] sm:$0xf]
        %v808 = vld [vmem:[%s603] sm:$0xf]
        %v809 = vld [vmem:[%s603 + $0x4] sm:$0xf]
        %v810 = vld [vmem:[%s603 + $0x8] sm:$0xf]
        %v811 = vld [vmem:[%s603 + $0xc] sm:$0xf]
        %s812 = scalar_lea.vmem %s603, 16 [#allocation12]
        %v813 = vld [vmem:[%s812] sm:$0xf]
        %v814 = vld [vmem:[%s812 + $0x4] sm:$0xf]
        %v815 = vld [vmem:[%s812 + $0x8] sm:$0xf]
        %v816 = vld [vmem:[%s812 + $0xc] sm:$0xf]
        %v817 = vld [vmem:[#allocation2] sm:$0xff]
        %v818 = vld [vmem:[#allocation2 + $0x8] sm:$0xff]
        %v819 = vld [vmem:[#allocation2 + $0x10] sm:$0xff]
        %v820 = vld [vmem:[#allocation2 + $0x18] sm:$0xff]
        %vm821 = vcmask 261120
        %v822 = vsel %vm821, %v817, 0.0
        %823 = vadd.xlane.f32.xlu0 %v822
        %v824 = vpop.xlane.xlu0 %823
        %v825 = vsel %vm821, %v818, 0.0
        %826 = vadd.xlane.f32.xlu0 %v825
        %v827 = vpop.xlane.xlu0 %826
        %v828 = vsel %vm821, %v819, 0.0
        %829 = vadd.xlane.f32.xlu0 %v828
        %v830 = vpop.xlane.xlu0 %829
        %v831 = vsel %vm821, %v820, 0.0
        %832 = vadd.xlane.f32.xlu0 %v831
        %v833 = vpop.xlane.xlu0 %832
        %v834 = vrcp.pop 32.0
        %v835 = vmul.f32 %v824, %v834
        %v836 = vmul.f32 %v827, %v834
        %v837 = vmul.f32 %v830, %v834
        %v838 = vmul.f32 %v833, %v834
        %v839 = vsub.f32 %v817, %v835
        %v840 = vsub.f32 %v818, %v836
        %v841 = vsub.f32 %v819, %v837
        %v842 = vsub.f32 %v820, %v838
        %v843 = vmul.f32 %v839, %v839
        %v844 = vmul.f32 %v840, %v840
        %v845 = vmul.f32 %v841, %v841
        %v846 = vmul.f32 %v842, %v842
        %v847 = vsel %vm821, %v843, 0.0
        %848 = vadd.xlane.f32.xlu0 %v847
        %v849 = vpop.xlane.xlu0 %848
        %v850 = vsel %vm821, %v844, 0.0
        %851 = vadd.xlane.f32.xlu0 %v850
        %v852 = vpop.xlane.xlu0 %851
        %v853 = vsel %vm821, %v845, 0.0
        %854 = vadd.xlane.f32.xlu0 %v853
        %v855 = vpop.xlane.xlu0 %854
        %v856 = vsel %vm821, %v846, 0.0
        %857 = vadd.xlane.f32.xlu0 %v856
        %v858 = vpop.xlane.xlu0 %857
        %v859 = vmul.f32 %v849, %v834
        %v860 = vmul.f32 %v852, %v834
        %v861 = vmul.f32 %v855, %v834
        %v862 = vmul.f32 %v858, %v834
        %v863 = vadd.f32 %v859, 1e-05
        %v864 = vadd.f32 %v860, 1e-05
        %v865 = vadd.f32 %v861, 1e-05
        %v866 = vadd.f32 %v862, 1e-05
        %v867 = vrsqrt.pop %v863
        %v868 = vrsqrt.pop %v864
        %v869 = vrsqrt.pop %v865
        %v870 = vrsqrt.pop %v866
        %v871 = vmul.f32 %v839, %v867
        %v872 = vmul.f32 %v840, %v868
        %v873 = vmul.f32 %v841, %v869
        %v874 = vmul.f32 %v842, %v870
        %v875 = vlaneseq
        %v876 = vshrl.u32 %v875, 7
        %v877 = vsub.s32 0, %v876
        %v878 = vrot.slane %v782, %v877
        %v879 = vmul.f32 %v871, %v878
        %v880 = vmul.f32 %v872, %v878
        %v881 = vmul.f32 %v873, %v878
        %v882 = vmul.f32 %v874, %v878
        %v883 = vlaneseq
        %v884 = vshrl.u32 %v883, 7
        %v885 = vsub.s32 1, %v884
        %v886 = vrot.slane %v782, %v885
        %v887 = vadd.f32 %v879, %v886
        %v888 = vadd.f32 %v880, %v886
        %v889 = vadd.f32 %v881, %v886
        %v890 = vadd.f32 %v882, %v886
        %v891 = vpack.c.bf16 %v888, %v887
        %v892 = vpack.c.bf16 %v890, %v889
        %v897 = vunpack.c.l.b16 %v774
        %v898 = vunpack.c.l.b16 %v775
        %v899 = vunpack.c.l.b16 %v776
        %v900 = vunpack.c.l.b16 %v777
        %v901 = vpack.c.b16 %v898, %v897
        %v902 = vpack.c.b16 %v900, %v899
        %v906 = vsel %vm821, %v891, 0
        %v909 = vsel %vm821, %v892, 0
        %911 = vmatprep.subr.bf16.mxu0 0
        %912 = vmatpush1.bf16.msra.mxu0 0
        %913 = vmatprep.subr.bf16.mxu0 0
        %914 = vmatpush1.bf16.msra.mxu0 0
        %915 = vmatprep.subr.bf16.mxu0 0
        %916 = vmatpush1.bf16.msra.mxu0 0
        %917 = vmatprep.subr.bf16.mxu0 0
        %918 = vmatpush1.bf16.msra.mxu0 0
        %919 = vmatprep.subr.bf16.mxu0 0
        %920 = vmatpush1.bf16.msra.mxu0 0
        %921 = vmatprep.subr.bf16.mxu0 0
        %922 = vmatpush1.bf16.msra.mxu0 0
        %923 = vmatprep.subr.bf16.mxu0 0
        %924 = vmatpush1.bf16.msra.mxu0 %v902
        %925 = vmatprep.subr.bf16.mxu0 0
        %926 = vmatpush1.bf16.msra.mxu0 %v901
        %927 = vmatprep.subr.bf16.mxu0 0
        %928 = vmatpush2.bf16.msra.mxu0 0
        %929 = vmatprep.subr.bf16.mxu0 0
        %930 = vmatpush2.bf16.msra.mxu0 0
        %931 = vmatprep.subr.bf16.mxu0 0
        %932 = vmatpush2.bf16.msra.mxu0 0
        %933 = vmatprep.subr.bf16.mxu0 0
        %934 = vmatpush2.bf16.msra.mxu0 0
        %935 = vmatprep.subr.bf16.mxu0 0
        %936 = vmatpush2.bf16.msra.mxu0 0
        %937 = vmatprep.subr.bf16.mxu0 0
        %938 = vmatpush2.bf16.msra.mxu0 0
        %939 = vmatprep.subr.bf16.mxu0 0
        %940 = vmatpush2.bf16.msra.mxu0 0
        %941 = vmatprep.subr.bf16.mxu0 0
        %942 = vmatpush2.bf16.msra.mxu0 0
        %943 = vmatprep.mubr.bf16.mxu0 0
        %944 = vmatmul.mubr.bf16.gmra.mxu0 %v906
        %v945 = vpop.f32.mrf.mxu0
        %v946 = vadd.f32 0.0, %v945
        %v947 = vpop.f32.mrf.mxu0
        %v948 = vpop.f32.mrf.mxu0
        %v949 = vadd.f32 0.0, %v948
        %v950 = vpop.f32.mrf.mxu0
        %951 = vmatprep.mubr.bf16.mxu0 0
        %952 = vmatmul.mubr.bf16.gmra.mxu0 %v909
        %v953 = vpop.f32.mrf.mxu0
        %v954 = vadd.f32 0.0, %v953
        %v955 = vpop.f32.mrf.mxu0
        %v956 = vpop.f32.mrf.mxu0
        %v957 = vadd.f32 0.0, %v956
        %v958 = vpop.f32.mrf.mxu0
        %959 = vdwg.mxu0
        %v960 = vpack.c.bf16 %v949, %v946
        %v961 = vpack.c.bf16 %v957, %v954
        %v964 = vunpack.c.l.b16 %v960
        %v965 = vunpack.c.h.b16 %v960
        %v966 = vunpack.c.l.b16 %v961
        %v967 = vunpack.c.h.b16 %v961
        %v968 = vpack.c.b16 %v964, %v964
        %v969 = vpack.c.b16 %v965, %v965
        %v970 = vpack.c.b16 %v966, %v966
        %v971 = vpack.c.b16 %v967, %v967
        %972 = vrot.lane.b32.xlu0 %v968, 96
        %v973 = vpop.permute.xlu0 %972
        %974 = vrot.lane.b32.xlu0 %v969, 96
        %v975 = vpop.permute.xlu0 %974
        %976 = vrot.lane.b32.xlu0 %v970, 96
        %v977 = vpop.permute.xlu0 %976
        %978 = vrot.lane.b32.xlu0 %v971, 96
        %v979 = vpop.permute.xlu0 %978
        %vm984 = vcmask 519168
        %985 = vst.msk [vmem:[#allocation3] sm:$0xf] %vm984, %v973
        %986 = vst.msk [vmem:[#allocation3 + $0x4] sm:$0xf] %vm984, %v975
        %987 = vst.msk [vmem:[#allocation3 + $0x8] sm:$0xf] %vm984, %v977
        %988 = vst.msk [vmem:[#allocation3 + $0xc] sm:$0xf] %vm984, %v979
        %v989 = vld [vmem:[#allocation3] sm:$0xf]
        %v990 = vld [vmem:[#allocation3 + $0x4] sm:$0xf]
        %v991 = vld [vmem:[#allocation3 + $0x8] sm:$0xf]
        %v992 = vld [vmem:[#allocation3 + $0xc] sm:$0xf]
        %v993 = vld [vmem:[#allocation4] sm:$0xff]
        %v994 = vld [vmem:[#allocation4 + $0x8] sm:$0xff]
        %v995 = vld [vmem:[#allocation4 + $0x10] sm:$0xff]
        %v996 = vld [vmem:[#allocation4 + $0x18] sm:$0xff]
        %v997 = vld [vmem:[#allocation7] sm:$0xff]
        %v998 = vld [vmem:[#allocation7 + $0x8] sm:$0xff]
        %v999 = vld [vmem:[#allocation7 + $0x10] sm:$0xff]
        %v1000 = vld [vmem:[#allocation7 + $0x18] sm:$0xff]
        %vm1001 = vcmp.gt.s32.totalorder %v997, 0
        %vm1002 = vcmp.gt.s32.totalorder %v998, 0
        %vm1003 = vcmp.gt.s32.totalorder %v999, 0
        %vm1004 = vcmp.gt.s32.totalorder %v1000, 0
        %v1005 = vsel %vm1001, -1e+30, %v993
        %v1006 = vsel %vm1002, -1e+30, %v994
        %v1007 = vsel %vm1003, -1e+30, %v995
        %v1008 = vsel %vm1004, -1e+30, %v996
        %v1013 = vunpack.c.l.b16 %v989
        %v1014 = vunpack.c.l.b16 %v990
        %v1015 = vunpack.c.l.b16 %v991
        %v1016 = vunpack.c.l.b16 %v992
        %v1017 = vpack.c.b16 %v1014, %v1013
        %v1018 = vpack.c.b16 %v1016, %v1015
        %vm1019 = vcmask 130048
        %v1021 = vsel %vm1019, %v960, 0
        %v1024 = vsel %vm1019, %v961, 0
        %v1027 = vsel %vm1019, %v1017, 0
        %v1030 = vsel %vm1019, %v1018, 0
        %1032 = vmatprep.subr.bf16.mxu0 0
        %1033 = vmatpush1.bf16.xpose.msra.mxu0 0
        %1034 = vmatprep.subr.bf16.mxu0 0
        %1035 = vmatpush1.bf16.xpose.msra.mxu0 0
        %1036 = vmatprep.subr.bf16.mxu0 0
        %1037 = vmatpush1.bf16.xpose.msra.mxu0 0
        %1038 = vmatprep.subr.bf16.mxu0 0
        %1039 = vmatpush1.bf16.xpose.msra.mxu0 0
        %1040 = vmatprep.subr.bf16.mxu0 0
        %1041 = vmatpush1.bf16.xpose.msra.mxu0 0
        %1042 = vmatprep.subr.bf16.mxu0 0
        %1043 = vmatpush1.bf16.xpose.msra.mxu0 0
        %1044 = vmatprep.subr.bf16.mxu0 0
        %1045 = vmatpush1.bf16.xpose.msra.mxu0 %v1030
        %1046 = vmatprep.subr.bf16.mxu0 0
        %1047 = vmatpush1.bf16.xpose.msra.mxu0 %v1027
        %1048 = vmatprep.subr.bf16.mxu0 0
        %1049 = vmatpush2.bf16.xpose.msra.mxu0 0
        %1050 = vmatprep.subr.bf16.mxu0 0
        %1051 = vmatpush2.bf16.xpose.msra.mxu0 0
        %1052 = vmatprep.subr.bf16.mxu0 0
        %1053 = vmatpush2.bf16.xpose.msra.mxu0 0
        %1054 = vmatprep.subr.bf16.mxu0 0
        %1055 = vmatpush2.bf16.xpose.msra.mxu0 0
        %1056 = vmatprep.subr.bf16.mxu0 0
        %1057 = vmatpush2.bf16.xpose.msra.mxu0 0
        %1058 = vmatprep.subr.bf16.mxu0 0
        %1059 = vmatpush2.bf16.xpose.msra.mxu0 0
        %1060 = vmatprep.subr.bf16.mxu0 0
        %1061 = vmatpush2.bf16.xpose.msra.mxu0 0
        %1062 = vmatprep.subr.bf16.mxu0 0
        %1063 = vmatpush2.bf16.xpose.msra.mxu0 0
        %1064 = vmatprep.mubr.bf16.mxu0 0
        %1065 = vmatmul.mubr.bf16.gmra.mxu0 %v1021
        %v1066 = vpop.f32.mrf.mxu0
        %v1067 = vadd.f32 %v1005, %v1066
        %v1068 = vpop.f32.mrf.mxu0
        %v1069 = vpop.f32.mrf.mxu0
        %v1070 = vadd.f32 %v1006, %v1069
        %v1071 = vpop.f32.mrf.mxu0
        %1072 = vmatprep.mubr.bf16.mxu0 0
        %1073 = vmatmul.mubr.bf16.gmra.mxu0 %v1024
        %v1074 = vpop.f32.mrf.mxu0
        %v1075 = vadd.f32 %v1007, %v1074
        %v1076 = vpop.f32.mrf.mxu0
        %v1077 = vpop.f32.mrf.mxu0
        %v1078 = vadd.f32 %v1008, %v1077
        %v1079 = vpop.f32.mrf.mxu0
        %1080 = vdwg.mxu0
        %v1081 = vsel %vm821, %v1067, -inf
        %1082 = vmax.xlane.f32.xlu0 %v1081
        %v1083 = vpop.xlane.xlu0 %1082
        %v1084 = vsel %vm821, %v1070, -inf
        %1085 = vmax.xlane.f32.xlu0 %v1084
        %v1086 = vpop.xlane.xlu0 %1085
        %v1087 = vsel %vm821, %v1075, -inf
        %1088 = vmax.xlane.f32.xlu0 %v1087
        %v1089 = vpop.xlane.xlu0 %1088
        %v1090 = vsel %vm821, %v1078, -inf
        %1091 = vmax.xlane.f32.xlu0 %v1090
        %v1092 = vpop.xlane.xlu0 %1091
        %v1093 = vmax.f32 %v1083, -1e+30
        %v1094 = vmax.f32 %v1086, -1e+30
        %v1095 = vmax.f32 %v1089, -1e+30
        %v1096 = vmax.f32 %v1092, -1e+30
        %v1097 = vsub.f32 -1e+30, %v1093
        %v1098 = vsub.f32 -1e+30, %v1094
        %v1099 = vsub.f32 -1e+30, %v1095
        %v1100 = vsub.f32 -1e+30, %v1096
        %v1101 = vmul.f32 %v1097, 1.442695
        %v1102 = vpow.pop %v1101
        %v1103 = vmul.f32 %v1098, 1.442695
        %v1104 = vpow.pop %v1103
        %v1105 = vmul.f32 %v1099, 1.442695
        %v1106 = vpow.pop %v1105
        %v1107 = vmul.f32 %v1100, 1.442695
        %v1108 = vpow.pop %v1107
        %v1109 = vsub.f32 %v1067, %v1093
        %v1110 = vsub.f32 %v1070, %v1094
        %v1111 = vsub.f32 %v1075, %v1095
        %v1112 = vsub.f32 %v1078, %v1096
        %v1113 = vmul.f32 %v1109, 1.442695
        %v1114 = vpow.pop %v1113
        %v1115 = vmul.f32 %v1110, 1.442695
        %v1116 = vpow.pop %v1115
        %v1117 = vmul.f32 %v1111, 1.442695
        %v1118 = vpow.pop %v1117
        %v1119 = vmul.f32 %v1112, 1.442695
        %v1120 = vpow.pop %v1119
        %v1121 = vmul.f32 %v1102, 0.0
        %v1122 = vmul.f32 %v1104, 0.0
        %v1123 = vmul.f32 %v1106, 0.0
        %v1124 = vmul.f32 %v1108, 0.0
        %v1125 = vsel %vm821, %v1114, 0.0
        %1126 = vadd.xlane.f32.xlu0 %v1125
        %v1127 = vpop.xlane.xlu0 %1126
        %v1128 = vsel %vm821, %v1116, 0.0
        %1129 = vadd.xlane.f32.xlu0 %v1128
        %v1130 = vpop.xlane.xlu0 %1129
        %v1131 = vsel %vm821, %v1118, 0.0
        %1132 = vadd.xlane.f32.xlu0 %v1131
        %v1133 = vpop.xlane.xlu0 %1132
        %v1134 = vsel %vm821, %v1120, 0.0
        %1135 = vadd.xlane.f32.xlu0 %v1134
        %v1136 = vpop.xlane.xlu0 %1135
        %v1137 = vadd.f32 %v1121, %v1127
        %v1138 = vadd.f32 %v1122, %v1130
        %v1139 = vadd.f32 %v1123, %v1133
        %v1140 = vadd.f32 %v1124, %v1136
        %v1141 = vpack.c.bf16 %v1116, %v1114
        %v1142 = vpack.c.bf16 %v1120, %v1118
        %1143 = vrot.lane.b32.xlu0 %v1017, 96
        %v1144 = vpop.permute.xlu0 %1143
        %1145 = vrot.lane.b32.xlu0 %v1018, 96
        %v1146 = vpop.permute.xlu0 %1145
        %v1150 = vsel %vm821, %v1141, 0
        %v1153 = vsel %vm821, %v1142, 0
        %1155 = vmatprep.subr.bf16.mxu0 0
        %1156 = vmatpush1.bf16.msra.mxu0 0
        %1157 = vmatprep.subr.bf16.mxu0 0
        %1158 = vmatpush1.bf16.msra.mxu0 0
        %1159 = vmatprep.subr.bf16.mxu0 0
        %1160 = vmatpush1.bf16.msra.mxu0 0
        %1161 = vmatprep.subr.bf16.mxu0 0
        %1162 = vmatpush1.bf16.msra.mxu0 0
        %1163 = vmatprep.subr.bf16.mxu0 0
        %1164 = vmatpush1.bf16.msra.mxu0 0
        %1165 = vmatprep.subr.bf16.mxu0 0
        %1166 = vmatpush1.bf16.msra.mxu0 0
        %1167 = vmatprep.subr.bf16.mxu0 0
        %1168 = vmatpush1.bf16.msra.mxu0 %v1146
        %1169 = vmatprep.subr.bf16.mxu0 0
        %1170 = vmatpush1.bf16.msra.mxu0 %v1144
        %1171 = vmatprep.subr.bf16.mxu0 0
        %1172 = vmatpush2.bf16.msra.mxu0 0
        %1173 = vmatprep.subr.bf16.mxu0 0
        %1174 = vmatpush2.bf16.msra.mxu0 0
        %1175 = vmatprep.subr.bf16.mxu0 0
        %1176 = vmatpush2.bf16.msra.mxu0 0
        %1177 = vmatprep.subr.bf16.mxu0 0
        %1178 = vmatpush2.bf16.msra.mxu0 0
        %1179 = vmatprep.subr.bf16.mxu0 0
        %1180 = vmatpush2.bf16.msra.mxu0 0
        %1181 = vmatprep.subr.bf16.mxu0 0
        %1182 = vmatpush2.bf16.msra.mxu0 0
        %1183 = vmatprep.subr.bf16.mxu0 0
        %1184 = vmatpush2.bf16.msra.mxu0 0
        %1185 = vmatprep.subr.bf16.mxu0 0
        %1186 = vmatpush2.bf16.msra.mxu0 0
        %1187 = vmatprep.mubr.bf16.mxu0 0
        %1188 = vmatmul.mubr.bf16.gmra.mxu0 %v1150
        %v1189 = vpop.f32.mrf.mxu0
        %v1190 = vadd.f32 0.0, %v1189
        %v1191 = vpop.f32.mrf.mxu0
        %v1192 = vpop.f32.mrf.mxu0
        %v1193 = vadd.f32 0.0, %v1192
        %v1194 = vpop.f32.mrf.mxu0
        %1195 = vmatprep.mubr.bf16.mxu0 0
        %1196 = vmatmul.mubr.bf16.gmra.mxu0 %v1153
        %v1197 = vpop.f32.mrf.mxu0
        %v1198 = vadd.f32 0.0, %v1197
        %v1199 = vpop.f32.mrf.mxu0
        %v1200 = vpop.f32.mrf.mxu0
        %v1201 = vadd.f32 0.0, %v1200
        %v1202 = vpop.f32.mrf.mxu0
        %1203 = vdwg.mxu0
        %v1204 = vadd.f32 %v1121, %v1190
        %v1205 = vadd.f32 %v1122, %v1193
        %v1206 = vadd.f32 %v1123, %v1198
        %v1207 = vadd.f32 %v1124, %v1201
        %1208 = vrot.lane.b32.xlu0 %v960, 112
        %v1209 = vpop.permute.xlu0 %1208
        %1210 = vrot.lane.b32.xlu0 %v961, 112
        %v1211 = vpop.permute.xlu0 %1210
        %1212 = vrot.lane.b32.xlu0 %v1017, 112
        %v1213 = vpop.permute.xlu0 %1212
        %1214 = vrot.lane.b32.xlu0 %v1018, 112
        %v1215 = vpop.permute.xlu0 %1214
        %v1217 = vsel %vm1019, %v1209, 0
        %v1220 = vsel %vm1019, %v1211, 0
        %v1223 = vsel %vm1019, %v1213, 0
        %v1226 = vsel %vm1019, %v1215, 0
        %1228 = vmatprep.subr.bf16.mxu0 0
        %1229 = vmatpush1.bf16.xpose.msra.mxu0 0
        %1230 = vmatprep.subr.bf16.mxu0 0
        %1231 = vmatpush1.bf16.xpose.msra.mxu0 0
        %1232 = vmatprep.subr.bf16.mxu0 0
        %1233 = vmatpush1.bf16.xpose.msra.mxu0 0
        %1234 = vmatprep.subr.bf16.mxu0 0
        %1235 = vmatpush1.bf16.xpose.msra.mxu0 0
        %1236 = vmatprep.subr.bf16.mxu0 0
        %1237 = vmatpush1.bf16.xpose.msra.mxu0 0
        %1238 = vmatprep.subr.bf16.mxu0 0
        %1239 = vmatpush1.bf16.xpose.msra.mxu0 0
        %1240 = vmatprep.subr.bf16.mxu0 0
        %1241 = vmatpush1.bf16.xpose.msra.mxu0 %v1226
        %1242 = vmatprep.subr.bf16.mxu0 0
        %1243 = vmatpush1.bf16.xpose.msra.mxu0 %v1223
        %1244 = vmatprep.subr.bf16.mxu0 0
        %1245 = vmatpush2.bf16.xpose.msra.mxu0 0
        %1246 = vmatprep.subr.bf16.mxu0 0
        %1247 = vmatpush2.bf16.xpose.msra.mxu0 0
        %1248 = vmatprep.subr.bf16.mxu0 0
        %1249 = vmatpush2.bf16.xpose.msra.mxu0 0
        %1250 = vmatprep.subr.bf16.mxu0 0
        %1251 = vmatpush2.bf16.xpose.msra.mxu0 0
        %1252 = vmatprep.subr.bf16.mxu0 0
        %1253 = vmatpush2.bf16.xpose.msra.mxu0 0
        %1254 = vmatprep.subr.bf16.mxu0 0
        %1255 = vmatpush2.bf16.xpose.msra.mxu0 0
        %1256 = vmatprep.subr.bf16.mxu0 0
        %1257 = vmatpush2.bf16.xpose.msra.mxu0 0
        %1258 = vmatprep.subr.bf16.mxu0 0
        %1259 = vmatpush2.bf16.xpose.msra.mxu0 0
        %1260 = vmatprep.mubr.bf16.mxu0 0
        %1261 = vmatmul.mubr.bf16.gmra.mxu0 %v1217
        %v1262 = vpop.f32.mrf.mxu0
        %v1263 = vadd.f32 %v1005, %v1262
        %v1264 = vpop.f32.mrf.mxu0
        %v1265 = vpop.f32.mrf.mxu0
        %v1266 = vadd.f32 %v1006, %v1265
        %v1267 = vpop.f32.mrf.mxu0
        %1268 = vmatprep.mubr.bf16.mxu0 0
        %1269 = vmatmul.mubr.bf16.gmra.mxu0 %v1220
        %v1270 = vpop.f32.mrf.mxu0
        %v1271 = vadd.f32 %v1007, %v1270
        %v1272 = vpop.f32.mrf.mxu0
        %v1273 = vpop.f32.mrf.mxu0
        %v1274 = vadd.f32 %v1008, %v1273
        %v1275 = vpop.f32.mrf.mxu0
        %1276 = vdwg.mxu0
        %v1277 = vsel %vm821, %v1263, -inf
        %1278 = vmax.xlane.f32.xlu0 %v1277
        %v1279 = vpop.xlane.xlu0 %1278
        %v1280 = vsel %vm821, %v1266, -inf
        %1281 = vmax.xlane.f32.xlu0 %v1280
        %v1282 = vpop.xlane.xlu0 %1281
        %v1283 = vsel %vm821, %v1271, -inf
        %1284 = vmax.xlane.f32.xlu0 %v1283
        %v1285 = vpop.xlane.xlu0 %1284
        %v1286 = vsel %vm821, %v1274, -inf
        %1287 = vmax.xlane.f32.xlu0 %v1286
        %v1288 = vpop.xlane.xlu0 %1287
        %v1289 = vmax.f32 %v1279, -1e+30
        %v1290 = vmax.f32 %v1282, -1e+30
        %v1291 = vmax.f32 %v1285, -1e+30
        %v1292 = vmax.f32 %v1288, -1e+30
        %v1293 = vsub.f32 -1e+30, %v1289
        %v1294 = vsub.f32 -1e+30, %v1290
        %v1295 = vsub.f32 -1e+30, %v1291
        %v1296 = vsub.f32 -1e+30, %v1292
        %v1297 = vmul.f32 %v1293, 1.442695
        %v1298 = vpow.pop %v1297
        %v1299 = vmul.f32 %v1294, 1.442695
        %v1300 = vpow.pop %v1299
        %v1301 = vmul.f32 %v1295, 1.442695
        %v1302 = vpow.pop %v1301
        %v1303 = vmul.f32 %v1296, 1.442695
        %v1304 = vpow.pop %v1303
        %v1305 = vsub.f32 %v1263, %v1289
        %v1306 = vsub.f32 %v1266, %v1290
        %v1307 = vsub.f32 %v1271, %v1291
        %v1308 = vsub.f32 %v1274, %v1292
        %v1309 = vmul.f32 %v1305, 1.442695
        %v1310 = vpow.pop %v1309
        %v1311 = vmul.f32 %v1306, 1.442695
        %v1312 = vpow.pop %v1311
        %v1313 = vmul.f32 %v1307, 1.442695
        %v1314 = vpow.pop %v1313
        %v1315 = vmul.f32 %v1308, 1.442695
        %v1316 = vpow.pop %v1315
        %v1317 = vmul.f32 %v1298, 0.0
        %v1318 = vmul.f32 %v1300, 0.0
        %v1319 = vmul.f32 %v1302, 0.0
        %v1320 = vmul.f32 %v1304, 0.0
        %v1321 = vsel %vm821, %v1310, 0.0
        %1322 = vadd.xlane.f32.xlu0 %v1321
        %v1323 = vpop.xlane.xlu0 %1322
        %v1324 = vsel %vm821, %v1312, 0.0
        %1325 = vadd.xlane.f32.xlu0 %v1324
        %v1326 = vpop.xlane.xlu0 %1325
        %v1327 = vsel %vm821, %v1314, 0.0
        %1328 = vadd.xlane.f32.xlu0 %v1327
        %v1329 = vpop.xlane.xlu0 %1328
        %v1330 = vsel %vm821, %v1316, 0.0
        %1331 = vadd.xlane.f32.xlu0 %v1330
        %v1332 = vpop.xlane.xlu0 %1331
        %v1333 = vadd.f32 %v1317, %v1323
        %v1334 = vadd.f32 %v1318, %v1326
        %v1335 = vadd.f32 %v1319, %v1329
        %v1336 = vadd.f32 %v1320, %v1332
        %v1337 = vpack.c.bf16 %v1312, %v1310
        %v1338 = vpack.c.bf16 %v1316, %v1314
        %1339 = vrot.lane.b32.xlu0 %v1017, 80
        %v1340 = vpop.permute.xlu0 %1339
        %1341 = vrot.lane.b32.xlu0 %v1018, 80
        %v1342 = vpop.permute.xlu0 %1341
        %v1346 = vsel %vm821, %v1337, 0
        %v1349 = vsel %vm821, %v1338, 0
        %1351 = vmatprep.subr.bf16.mxu0 0
        %1352 = vmatpush1.bf16.msra.mxu0 0
        %1353 = vmatprep.subr.bf16.mxu0 0
        %1354 = vmatpush1.bf16.msra.mxu0 0
        %1355 = vmatprep.subr.bf16.mxu0 0
        %1356 = vmatpush1.bf16.msra.mxu0 0
        %1357 = vmatprep.subr.bf16.mxu0 0
        %1358 = vmatpush1.bf16.msra.mxu0 0
        %1359 = vmatprep.subr.bf16.mxu0 0
        %1360 = vmatpush1.bf16.msra.mxu0 0
        %1361 = vmatprep.subr.bf16.mxu0 0
        %1362 = vmatpush1.bf16.msra.mxu0 0
        %1363 = vmatprep.subr.bf16.mxu0 0
        %1364 = vmatpush1.bf16.msra.mxu0 %v1342
        %1365 = vmatprep.subr.bf16.mxu0 0
        %1366 = vmatpush1.bf16.msra.mxu0 %v1340
        %1367 = vmatprep.subr.bf16.mxu0 0
        %1368 = vmatpush2.bf16.msra.mxu0 0
        %1369 = vmatprep.subr.bf16.mxu0 0
        %1370 = vmatpush2.bf16.msra.mxu0 0
        %1371 = vmatprep.subr.bf16.mxu0 0
        %1372 = vmatpush2.bf16.msra.mxu0 0
        %1373 = vmatprep.subr.bf16.mxu0 0
        %1374 = vmatpush2.bf16.msra.mxu0 0
        %1375 = vmatprep.subr.bf16.mxu0 0
        %1376 = vmatpush2.bf16.msra.mxu0 0
        %1377 = vmatprep.subr.bf16.mxu0 0
        %1378 = vmatpush2.bf16.msra.mxu0 0
        %1379 = vmatprep.subr.bf16.mxu0 0
        %1380 = vmatpush2.bf16.msra.mxu0 0
        %1381 = vmatprep.subr.bf16.mxu0 0
        %1382 = vmatpush2.bf16.msra.mxu0 0
        %1383 = vmatprep.mubr.bf16.mxu0 0
        %1384 = vmatmul.mubr.bf16.gmra.mxu0 %v1346
        %v1385 = vpop.f32.mrf.mxu0
        %v1386 = vadd.f32 0.0, %v1385
        %v1387 = vpop.f32.mrf.mxu0
        %v1388 = vpop.f32.mrf.mxu0
        %v1389 = vadd.f32 0.0, %v1388
        %v1390 = vpop.f32.mrf.mxu0
        %1391 = vmatprep.mubr.bf16.mxu0 0
        %1392 = vmatmul.mubr.bf16.gmra.mxu0 %v1349
        %v1393 = vpop.f32.mrf.mxu0
        %v1394 = vadd.f32 0.0, %v1393
        %v1395 = vpop.f32.mrf.mxu0
        %v1396 = vpop.f32.mrf.mxu0
        %v1397 = vadd.f32 0.0, %v1396
        %v1398 = vpop.f32.mrf.mxu0
        %1399 = vdwg.mxu0
        %v1400 = vadd.f32 %v1317, %v1386
        %v1401 = vadd.f32 %v1318, %v1389
        %v1402 = vadd.f32 %v1319, %v1394
        %v1403 = vadd.f32 %v1320, %v1397
        %v1404 = vrcp.pop %v1137
        %v1405 = vrcp.pop %v1138
        %v1406 = vrcp.pop %v1139
        %v1407 = vrcp.pop %v1140
        %v1408 = vmul.f32 %v1204, %v1404
        %v1409 = vmul.f32 %v1205, %v1405
        %v1410 = vmul.f32 %v1206, %v1406
        %v1411 = vmul.f32 %v1207, %v1407
        %v1412 = vrcp.pop %v1333
        %v1413 = vrcp.pop %v1334
        %v1414 = vrcp.pop %v1335
        %v1415 = vrcp.pop %v1336
        %v1416 = vmul.f32 %v1400, %v1412
        %v1417 = vmul.f32 %v1401, %v1413
        %v1418 = vmul.f32 %v1402, %v1414
        %v1419 = vmul.f32 %v1403, %v1415
        %1424 = vrot.lane.b32.xlu0 %v1416, 16
        %v1425 = vpop.permute.xlu0 %1424
        %1426 = vrot.lane.b32.xlu0 %v1417, 16
        %v1427 = vpop.permute.xlu0 %1426
        %1428 = vrot.lane.b32.xlu0 %v1418, 16
        %v1429 = vpop.permute.xlu0 %1428
        %1430 = vrot.lane.b32.xlu0 %v1419, 16
        %v1431 = vpop.permute.xlu0 %1430
        %v1436 = vsel %vm1019, %v1408, %v1425
        %v1437 = vsel %vm1019, %v1409, %v1427
        %v1438 = vsel %vm1019, %v1410, %v1429
        %v1439 = vsel %vm1019, %v1411, %v1431
        %v1440 = vpack.c.bf16 %v1437, %v1436
        %v1441 = vpack.c.bf16 %v1439, %v1438
        %v1446 = vunpack.c.l.b16 %v778
        %v1447 = vunpack.c.l.b16 %v779
        %v1448 = vunpack.c.l.b16 %v780
        %v1449 = vunpack.c.l.b16 %v781
        %v1450 = vpack.c.b16 %v1447, %v1446
        %v1451 = vpack.c.b16 %v1449, %v1448
        %v1455 = vsel %vm821, %v1440, 0
        %v1458 = vsel %vm821, %v1441, 0
        %1460 = vmatprep.subr.bf16.mxu0 0
        %1461 = vmatpush1.bf16.msra.mxu0 0
        %1462 = vmatprep.subr.bf16.mxu0 0
        %1463 = vmatpush1.bf16.msra.mxu0 0
        %1464 = vmatprep.subr.bf16.mxu0 0
        %1465 = vmatpush1.bf16.msra.mxu0 0
        %1466 = vmatprep.subr.bf16.mxu0 0
        %1467 = vmatpush1.bf16.msra.mxu0 0
        %1468 = vmatprep.subr.bf16.mxu0 0
        %1469 = vmatpush1.bf16.msra.mxu0 0
        %1470 = vmatprep.subr.bf16.mxu0 0
        %1471 = vmatpush1.bf16.msra.mxu0 0
        %1472 = vmatprep.subr.bf16.mxu0 0
        %1473 = vmatpush1.bf16.msra.mxu0 %v1451
        %1474 = vmatprep.subr.bf16.mxu0 0
        %1475 = vmatpush1.bf16.msra.mxu0 %v1450
        %1476 = vmatprep.subr.bf16.mxu0 0
        %1477 = vmatpush2.bf16.msra.mxu0 0
        %1478 = vmatprep.subr.bf16.mxu0 0
        %1479 = vmatpush2.bf16.msra.mxu0 0
        %1480 = vmatprep.subr.bf16.mxu0 0
        %1481 = vmatpush2.bf16.msra.mxu0 0
        %1482 = vmatprep.subr.bf16.mxu0 0
        %1483 = vmatpush2.bf16.msra.mxu0 0
        %1484 = vmatprep.subr.bf16.mxu0 0
        %1485 = vmatpush2.bf16.msra.mxu0 0
        %1486 = vmatprep.subr.bf16.mxu0 0
        %1487 = vmatpush2.bf16.msra.mxu0 0
        %1488 = vmatprep.subr.bf16.mxu0 0
        %1489 = vmatpush2.bf16.msra.mxu0 0
        %1490 = vmatprep.subr.bf16.mxu0 0
        %1491 = vmatpush2.bf16.msra.mxu0 0
        %1492 = vmatprep.mubr.bf16.mxu0 0
        %1493 = vmatmul.mubr.bf16.gmra.mxu0 %v1455
        %v1494 = vpop.f32.mrf.mxu0
        %v1495 = vadd.f32 0.0, %v1494
        %v1496 = vpop.f32.mrf.mxu0
        %v1497 = vpop.f32.mrf.mxu0
        %v1498 = vadd.f32 0.0, %v1497
        %v1499 = vpop.f32.mrf.mxu0
        %1500 = vmatprep.mubr.bf16.mxu0 0
        %1501 = vmatmul.mubr.bf16.gmra.mxu0 %v1458
        %v1502 = vpop.f32.mrf.mxu0
        %v1503 = vadd.f32 0.0, %v1502
        %v1504 = vpop.f32.mrf.mxu0
        %v1505 = vpop.f32.mrf.mxu0
        %v1506 = vadd.f32 0.0, %v1505
        %v1507 = vpop.f32.mrf.mxu0
        %1508 = vdwg.mxu0
        %v1509 = vpack.c.bf16 %v1498, %v1495
        %v1510 = vpack.c.bf16 %v1506, %v1503
        %v1515 = vunpack.c.l.b16 %v799
        %v1516 = vunpack.c.l.b16 %v800
        %v1517 = vunpack.c.l.b16 %v801
        %v1518 = vunpack.c.l.b16 %v802
        %v1519 = vpack.c.b16 %v1516, %v1515
        %v1520 = vpack.c.b16 %v1518, %v1517
        %v1524 = vsel %vm821, %v1509, 0
        %v1527 = vsel %vm821, %v1510, 0
        %1529 = vmatprep.subr.bf16.mxu0 0
        %1530 = vmatpush1.bf16.msra.mxu0 0
        %1531 = vmatprep.subr.bf16.mxu0 0
        %1532 = vmatpush1.bf16.msra.mxu0 0
        %1533 = vmatprep.subr.bf16.mxu0 0
        %1534 = vmatpush1.bf16.msra.mxu0 0
        %1535 = vmatprep.subr.bf16.mxu0 0
        %1536 = vmatpush1.bf16.msra.mxu0 0
        %1537 = vmatprep.subr.bf16.mxu0 0
        %1538 = vmatpush1.bf16.msra.mxu0 0
        %1539 = vmatprep.subr.bf16.mxu0 0
        %1540 = vmatpush1.bf16.msra.mxu0 0
        %1541 = vmatprep.subr.bf16.mxu0 0
        %1542 = vmatpush1.bf16.msra.mxu0 %v1520
        %1543 = vmatprep.subr.bf16.mxu0 0
        %1544 = vmatpush1.bf16.msra.mxu0 %v1519
        %1545 = vmatprep.subr.bf16.mxu0 0
        %1546 = vmatpush2.bf16.msra.mxu0 0
        %1547 = vmatprep.subr.bf16.mxu0 0
        %1548 = vmatpush2.bf16.msra.mxu0 0
        %1549 = vmatprep.subr.bf16.mxu0 0
        %1550 = vmatpush2.bf16.msra.mxu0 0
        %1551 = vmatprep.subr.bf16.mxu0 0
        %1552 = vmatpush2.bf16.msra.mxu0 0
        %1553 = vmatprep.subr.bf16.mxu0 0
        %1554 = vmatpush2.bf16.msra.mxu0 0
        %1555 = vmatprep.subr.bf16.mxu0 0
        %1556 = vmatpush2.bf16.msra.mxu0 0
        %1557 = vmatprep.subr.bf16.mxu0 0
        %1558 = vmatpush2.bf16.msra.mxu0 0
        %1559 = vmatprep.subr.bf16.mxu0 0
        %1560 = vmatpush2.bf16.msra.mxu0 0
        %1561 = vmatprep.mubr.bf16.mxu0 0
        %1562 = vmatmul.mubr.bf16.gmra.mxu0 %v1524
        %v1563 = vpop.f32.mrf.mxu0
        %v1564 = vadd.f32 0.0, %v1563
        %v1565 = vpop.f32.mrf.mxu0
        %v1566 = vpop.f32.mrf.mxu0
        %v1567 = vadd.f32 0.0, %v1566
        %v1568 = vpop.f32.mrf.mxu0
        %1569 = vmatprep.mubr.bf16.mxu0 0
        %1570 = vmatmul.mubr.bf16.gmra.mxu0 %v1527
        %v1571 = vpop.f32.mrf.mxu0
        %v1572 = vadd.f32 0.0, %v1571
        %v1573 = vpop.f32.mrf.mxu0
        %v1574 = vpop.f32.mrf.mxu0
        %v1575 = vadd.f32 0.0, %v1574
        %v1576 = vpop.f32.mrf.mxu0
        %1577 = vdwg.mxu0
        %v1578 = vpack.c.bf16 %v818, %v817
        %v1579 = vpack.c.bf16 %v820, %v819
        %v1584 = vunpack.c.l.b16 %v808
        %v1585 = vunpack.c.l.b16 %v809
        %v1586 = vunpack.c.l.b16 %v810
        %v1587 = vunpack.c.l.b16 %v811
        %v1588 = vpack.c.b16 %v1585, %v1584
        %v1589 = vpack.c.b16 %v1587, %v1586
        %v1593 = vsel %vm821, %v1578, 0
        %v1596 = vsel %vm821, %v1579, 0
        %1598 = vmatprep.subr.bf16.mxu0 0
        %1599 = vmatpush1.bf16.msra.mxu0 0
        %1600 = vmatprep.subr.bf16.mxu0 0
        %1601 = vmatpush1.bf16.msra.mxu0 0
        %1602 = vmatprep.subr.bf16.mxu0 0
        %1603 = vmatpush1.bf16.msra.mxu0 0
        %1604 = vmatprep.subr.bf16.mxu0 0
        %1605 = vmatpush1.bf16.msra.mxu0 0
        %1606 = vmatprep.subr.bf16.mxu0 0
        %1607 = vmatpush1.bf16.msra.mxu0 0
        %1608 = vmatprep.subr.bf16.mxu0 0
        %1609 = vmatpush1.bf16.msra.mxu0 0
        %1610 = vmatprep.subr.bf16.mxu0 0
        %1611 = vmatpush1.bf16.msra.mxu0 %v1589
        %1612 = vmatprep.subr.bf16.mxu0 0
        %1613 = vmatpush1.bf16.msra.mxu0 %v1588
        %1614 = vmatprep.subr.bf16.mxu0 0
        %1615 = vmatpush2.bf16.msra.mxu0 0
        %1616 = vmatprep.subr.bf16.mxu0 0
        %1617 = vmatpush2.bf16.msra.mxu0 0
        %1618 = vmatprep.subr.bf16.mxu0 0
        %1619 = vmatpush2.bf16.msra.mxu0 0
        %1620 = vmatprep.subr.bf16.mxu0 0
        %1621 = vmatpush2.bf16.msra.mxu0 0
        %1622 = vmatprep.subr.bf16.mxu0 0
        %1623 = vmatpush2.bf16.msra.mxu0 0
        %1624 = vmatprep.subr.bf16.mxu0 0
        %1625 = vmatpush2.bf16.msra.mxu0 0
        %1626 = vmatprep.subr.bf16.mxu0 0
        %1627 = vmatpush2.bf16.msra.mxu0 0
        %1628 = vmatprep.subr.bf16.mxu0 0
        %1629 = vmatpush2.bf16.msra.mxu0 0
        %1630 = vmatprep.mubr.bf16.mxu0 0
        %1631 = vmatmul.mubr.bf16.gmra.mxu0 %v1593
        %v1632 = vpop.f32.mrf.mxu0
        %v1633 = vadd.f32 0.0, %v1632
        %v1634 = vpop.f32.mrf.mxu0
        %v1635 = vpop.f32.mrf.mxu0
        %v1636 = vadd.f32 0.0, %v1635
        %v1637 = vpop.f32.mrf.mxu0
        %1638 = vmatprep.mubr.bf16.mxu0 0
        %1639 = vmatmul.mubr.bf16.gmra.mxu0 %v1596
        %v1640 = vpop.f32.mrf.mxu0
        %v1641 = vadd.f32 0.0, %v1640
        %v1642 = vpop.f32.mrf.mxu0
        %v1643 = vpop.f32.mrf.mxu0
        %v1644 = vadd.f32 0.0, %v1643
        %v1645 = vpop.f32.mrf.mxu0
        %1646 = vdwg.mxu0
        %v1647 = vadd.f32 %v1564, %v1633
        %v1648 = vadd.f32 %v1567, %v1636
        %v1649 = vadd.f32 %v1572, %v1641
        %v1650 = vadd.f32 %v1575, %v1644
        %v1651 = vxor.u32 %v1647, 2147483648
        %v1652 = vxor.u32 %v1648, 2147483648
        %v1653 = vxor.u32 %v1649, 2147483648
        %v1654 = vxor.u32 %v1650, 2147483648
        %v1655 = vmul.f32 %v1651, 1.442695
        %v1656 = vpow.pop %v1655
        %v1657 = vmul.f32 %v1652, 1.442695
        %v1658 = vpow.pop %v1657
        %v1659 = vmul.f32 %v1653, 1.442695
        %v1660 = vpow.pop %v1659
        %v1661 = vmul.f32 %v1654, 1.442695
        %v1662 = vpow.pop %v1661
        %v1663 = vadd.f32 %v1656, 1.0
        %v1664 = vadd.f32 %v1658, 1.0
        %v1665 = vadd.f32 %v1660, 1.0
        %v1666 = vadd.f32 %v1662, 1.0
        %v1667 = vrcp.pop %v1663
        %v1668 = vmul.f32 1.0, %v1667
        %v1669 = vrcp.pop %v1664
        %v1670 = vmul.f32 1.0, %v1669
        %v1671 = vrcp.pop %v1665
        %v1672 = vmul.f32 1.0, %v1671
        %v1673 = vrcp.pop %v1666
        %v1674 = vmul.f32 1.0, %v1673
        %v1675 = vlaneseq
        %v1676 = vshrl.u32 %v1675, 7
        %v1677 = vsub.s32 0, %v1676
        %v1678 = vrot.slane %v798, %v1677
        %1680 = vrot.lane.b32.xlu0 %v1678, 32
        %v1681 = vpop.permute.xlu0 %1680
        %v1683 = vadd.f32 %v1633, %v1681
        %v1684 = vadd.f32 %v1636, %v1681
        %v1685 = vadd.f32 %v1641, %v1681
        %v1686 = vadd.f32 %v1644, %v1681
        %v1687 = vadd.f32 %v1564, %v1683
        %v1688 = vadd.f32 %v1567, %v1684
        %v1689 = vadd.f32 %v1572, %v1685
        %v1690 = vadd.f32 %v1575, %v1686
        %v1691 = vsub.f32 %v1687, 0.1
        %v1692 = vsub.f32 %v1688, 0.1
        %v1693 = vsub.f32 %v1689, 0.1
        %v1694 = vsub.f32 %v1690, 0.1
        %v1695 = vxor.u32 %v1691, 2147483648
        %v1696 = vxor.u32 %v1692, 2147483648
        %v1697 = vxor.u32 %v1693, 2147483648
        %v1698 = vxor.u32 %v1694, 2147483648
        %v1699 = vmul.f32 %v1695, 1.442695
        %v1700 = vpow.pop %v1699
        %v1701 = vmul.f32 %v1696, 1.442695
        %v1702 = vpow.pop %v1701
        %v1703 = vmul.f32 %v1697, 1.442695
        %v1704 = vpow.pop %v1703
        %v1705 = vmul.f32 %v1698, 1.442695
        %v1706 = vpow.pop %v1705
        %v1707 = vadd.f32 %v1700, 1.0
        %v1708 = vadd.f32 %v1702, 1.0
        %v1709 = vadd.f32 %v1704, 1.0
        %v1710 = vadd.f32 %v1706, 1.0
        %v1711 = vrcp.pop %v1707
        %v1712 = vmul.f32 1.0, %v1711
        %v1713 = vrcp.pop %v1708
        %v1714 = vmul.f32 1.0, %v1713
        %v1715 = vrcp.pop %v1709
        %v1716 = vmul.f32 1.0, %v1715
        %v1717 = vrcp.pop %v1710
        %v1718 = vmul.f32 1.0, %v1717
        %1723 = vrot.lane.b32.xlu0 %v1633, 64
        %v1724 = vpop.permute.xlu0 %1723
        %1725 = vrot.lane.b32.xlu0 %v1636, 64
        %v1726 = vpop.permute.xlu0 %1725
        %1727 = vrot.lane.b32.xlu0 %v1641, 64
        %v1728 = vpop.permute.xlu0 %1727
        %1729 = vrot.lane.b32.xlu0 %v1644, 64
        %v1730 = vpop.permute.xlu0 %1729
        %v1735 = vmul.f32 %v1668, %v1724
        %v1736 = vmul.f32 %v1670, %v1726
        %v1737 = vmul.f32 %v1672, %v1728
        %v1738 = vmul.f32 %v1674, %v1730
        %1743 = vrot.lane.b32.xlu0 %v1735, 64
        %v1744 = vpop.permute.xlu0 %1743
        %1745 = vrot.lane.b32.xlu0 %v1736, 64
        %v1746 = vpop.permute.xlu0 %1745
        %1747 = vrot.lane.b32.xlu0 %v1737, 64
        %v1748 = vpop.permute.xlu0 %1747
        %1749 = vrot.lane.b32.xlu0 %v1738, 64
        %v1750 = vpop.permute.xlu0 %1749
        %v1755 = vadd.f32 %v1564, %v1744
        %v1756 = vadd.f32 %v1567, %v1746
        %v1757 = vadd.f32 %v1572, %v1748
        %v1758 = vadd.f32 %v1575, %v1750
        %v1759 = vtanh.pop %v1755
        %v1760 = vtanh.pop %v1756
        %v1761 = vtanh.pop %v1757
        %v1762 = vtanh.pop %v1758
        %v1763 = vsub.f32 1.0, %v1712
        %v1764 = vsub.f32 1.0, %v1714
        %v1765 = vsub.f32 1.0, %v1716
        %v1766 = vsub.f32 1.0, %v1718
        %1771 = vrot.lane.b32.xlu0 %v817, 32
        %v1772 = vpop.permute.xlu0 %1771
        %1773 = vrot.lane.b32.xlu0 %v818, 32
        %v1774 = vpop.permute.xlu0 %1773
        %1775 = vrot.lane.b32.xlu0 %v819, 32
        %v1776 = vpop.permute.xlu0 %1775
        %1777 = vrot.lane.b32.xlu0 %v820, 32
        %v1778 = vpop.permute.xlu0 %1777
        %v1783 = vmul.f32 %v1763, %v1772
        %v1784 = vmul.f32 %v1764, %v1774
        %v1785 = vmul.f32 %v1765, %v1776
        %v1786 = vmul.f32 %v1766, %v1778
        %1791 = vrot.lane.b32.xlu0 %v1759, 96
        %v1792 = vpop.permute.xlu0 %1791
        %1793 = vrot.lane.b32.xlu0 %v1760, 96
        %v1794 = vpop.permute.xlu0 %1793
        %1795 = vrot.lane.b32.xlu0 %v1761, 96
        %v1796 = vpop.permute.xlu0 %1795
        %1797 = vrot.lane.b32.xlu0 %v1762, 96
        %v1798 = vpop.permute.xlu0 %1797
        %v1803 = vmul.f32 %v1712, %v1792
        %v1804 = vmul.f32 %v1714, %v1794
        %v1805 = vmul.f32 %v1716, %v1796
        %v1806 = vmul.f32 %v1718, %v1798
        %v1807 = vadd.f32 %v1783, %v1803
        %v1808 = vadd.f32 %v1784, %v1804
        %v1809 = vadd.f32 %v1785, %v1805
        %v1810 = vadd.f32 %v1786, %v1806
        %1815 = vrot.lane.b32.xlu0 %v1807, 96
        %v1816 = vpop.permute.xlu0 %1815
        %1817 = vrot.lane.b32.xlu0 %v1808, 96
        %v1818 = vpop.permute.xlu0 %1817
        %1819 = vrot.lane.b32.xlu0 %v1809, 96
        %v1820 = vpop.permute.xlu0 %1819
        %1821 = vrot.lane.b32.xlu0 %v1810, 96
        %v1822 = vpop.permute.xlu0 %1821
        %v1827 = vsel %vm821, %v1816, 0.0
        %1828 = vadd.xlane.f32.xlu0 %v1827
        %v1829 = vpop.xlane.xlu0 %1828
        %v1830 = vsel %vm821, %v1818, 0.0
        %1831 = vadd.xlane.f32.xlu0 %v1830
        %v1832 = vpop.xlane.xlu0 %1831
        %v1833 = vsel %vm821, %v1820, 0.0
        %1834 = vadd.xlane.f32.xlu0 %v1833
        %v1835 = vpop.xlane.xlu0 %1834
        %v1836 = vsel %vm821, %v1822, 0.0
        %1837 = vadd.xlane.f32.xlu0 %v1836
        %v1838 = vpop.xlane.xlu0 %1837
        %v1839 = vmul.f32 %v1829, %v834
        %v1840 = vmul.f32 %v1832, %v834
        %v1841 = vmul.f32 %v1835, %v834
        %v1842 = vmul.f32 %v1838, %v834
        %v1843 = vsub.f32 %v1807, %v1839
        %v1844 = vsub.f32 %v1808, %v1840
        %v1845 = vsub.f32 %v1809, %v1841
        %v1846 = vsub.f32 %v1810, %v1842
        %v1847 = vmul.f32 %v1843, %v1843
        %v1848 = vmul.f32 %v1844, %v1844
        %v1849 = vmul.f32 %v1845, %v1845
        %v1850 = vmul.f32 %v1846, %v1846
        %1855 = vrot.lane.b32.xlu0 %v1847, 96
        %v1856 = vpop.permute.xlu0 %1855
        %1857 = vrot.lane.b32.xlu0 %v1848, 96
        %v1858 = vpop.permute.xlu0 %1857
        %1859 = vrot.lane.b32.xlu0 %v1849, 96
        %v1860 = vpop.permute.xlu0 %1859
        %1861 = vrot.lane.b32.xlu0 %v1850, 96
        %v1862 = vpop.permute.xlu0 %1861
        %v1867 = vsel %vm821, %v1856, 0.0
        %1868 = vadd.xlane.f32.xlu0 %v1867
        %v1869 = vpop.xlane.xlu0 %1868
        %v1870 = vsel %vm821, %v1858, 0.0
        %1871 = vadd.xlane.f32.xlu0 %v1870
        %v1872 = vpop.xlane.xlu0 %1871
        %v1873 = vsel %vm821, %v1860, 0.0
        %1874 = vadd.xlane.f32.xlu0 %v1873
        %v1875 = vpop.xlane.xlu0 %1874
        %v1876 = vsel %vm821, %v1862, 0.0
        %1877 = vadd.xlane.f32.xlu0 %v1876
        %v1878 = vpop.xlane.xlu0 %1877
        %v1879 = vmul.f32 %v1869, %v834
        %v1880 = vmul.f32 %v1872, %v834
        %v1881 = vmul.f32 %v1875, %v834
        %v1882 = vmul.f32 %v1878, %v834
        %v1883 = vadd.f32 %v1879, 1e-05
        %v1884 = vadd.f32 %v1880, 1e-05
        %v1885 = vadd.f32 %v1881, 1e-05
        %v1886 = vadd.f32 %v1882, 1e-05
        %v1887 = vrsqrt.pop %v1883
        %v1888 = vrsqrt.pop %v1884
        %v1889 = vrsqrt.pop %v1885
        %v1890 = vrsqrt.pop %v1886
        %v1891 = vmul.f32 %v1843, %v1887
        %v1892 = vmul.f32 %v1844, %v1888
        %v1893 = vmul.f32 %v1845, %v1889
        %v1894 = vmul.f32 %v1846, %v1890
        %v1895 = vlaneseq
        %v1896 = vshrl.u32 %v1895, 7
        %v1897 = vsub.s32 0, %v1896
        %v1898 = vrot.slane %v783, %v1897
        %1900 = vrot.lane.b32.xlu0 %v1898, 32
        %v1901 = vpop.permute.xlu0 %1900
        %v1903 = vmul.f32 %v1891, %v1901
        %v1904 = vmul.f32 %v1892, %v1901
        %v1905 = vmul.f32 %v1893, %v1901
        %v1906 = vmul.f32 %v1894, %v1901
        %v1907 = vlaneseq
        %v1908 = vshrl.u32 %v1907, 7
        %v1909 = vsub.s32 1, %v1908
        %v1910 = vrot.slane %v783, %v1909
        %1912 = vrot.lane.b32.xlu0 %v1910, 32
        %v1913 = vpop.permute.xlu0 %1912
        %v1915 = vadd.f32 %v1903, %v1913
        %v1916 = vadd.f32 %v1904, %v1913
        %v1917 = vadd.f32 %v1905, %v1913
        %v1918 = vadd.f32 %v1906, %v1913
        %v1919 = vpack.c.bf16 %v1916, %v1915
        %v1920 = vpack.c.bf16 %v1918, %v1917
        %v1922 = vlaneseq
        %v1923 = vshrl.u32 %v1922, 7
        %v1924 = vsub.s32 0, %v1923
        %v1925 = vrot.slane %v788, %v1924
        %1929 = vrot.lane.b32.xlu0 %v1919, 96
        %v1930 = vpop.permute.xlu0 %1929
        %1931 = vrot.lane.b32.xlu0 %v1920, 96
        %v1932 = vpop.permute.xlu0 %1931
        %v1937 = vunpack.c.l.b16 %v784
        %v1938 = vunpack.c.l.b16 %v785
        %v1939 = vunpack.c.l.b16 %v786
        %v1940 = vunpack.c.l.b16 %v787
        %v1941 = vpack.c.b16 %v1938, %v1937
        %v1942 = vpack.c.b16 %v1940, %v1939
        %v1946 = vsel %vm821, %v1930, 0
        %v1949 = vsel %vm821, %v1932, 0
        %1951 = vmatprep.subr.bf16.mxu0 0
        %1952 = vmatpush1.bf16.msra.mxu0 0
        %1953 = vmatprep.subr.bf16.mxu0 0
        %1954 = vmatpush1.bf16.msra.mxu0 0
        %1955 = vmatprep.subr.bf16.mxu0 0
        %1956 = vmatpush1.bf16.msra.mxu0 0
        %1957 = vmatprep.subr.bf16.mxu0 0
        %1958 = vmatpush1.bf16.msra.mxu0 0
        %1959 = vmatprep.subr.bf16.mxu0 0
        %1960 = vmatpush1.bf16.msra.mxu0 0
        %1961 = vmatprep.subr.bf16.mxu0 0
        %1962 = vmatpush1.bf16.msra.mxu0 0
        %1963 = vmatprep.subr.bf16.mxu0 0
        %1964 = vmatpush1.bf16.msra.mxu0 %v1942
        %1965 = vmatprep.subr.bf16.mxu0 0
        %1966 = vmatpush1.bf16.msra.mxu0 %v1941
        %1967 = vmatprep.subr.bf16.mxu0 0
        %1968 = vmatpush2.bf16.msra.mxu0 0
        %1969 = vmatprep.subr.bf16.mxu0 0
        %1970 = vmatpush2.bf16.msra.mxu0 0
        %1971 = vmatprep.subr.bf16.mxu0 0
        %1972 = vmatpush2.bf16.msra.mxu0 0
        %1973 = vmatprep.subr.bf16.mxu0 0
        %1974 = vmatpush2.bf16.msra.mxu0 0
        %1975 = vmatprep.subr.bf16.mxu0 0
        %1976 = vmatpush2.bf16.msra.mxu0 0
        %1977 = vmatprep.subr.bf16.mxu0 0
        %1978 = vmatpush2.bf16.msra.mxu0 0
        %1979 = vmatprep.subr.bf16.mxu0 0
        %1980 = vmatpush2.bf16.msra.mxu0 0
        %1981 = vmatprep.subr.bf16.mxu0 0
        %1982 = vmatpush2.bf16.msra.mxu0 0
        %1983 = vmatprep.mubr.bf16.mxu0 0
        %1984 = vmatmul.mubr.bf16.gmra.mxu0 %v1946
        %v1985 = vpop.f32.mrf.mxu0
        %v1986 = vadd.f32 %v1925, %v1985
        %v1987 = vpop.f32.mrf.mxu0
        %v1988 = vpop.f32.mrf.mxu0
        %v1989 = vadd.f32 %v1925, %v1988
        %v1990 = vpop.f32.mrf.mxu0
        %1991 = vmatprep.mubr.bf16.mxu0 0
        %1992 = vmatmul.mubr.bf16.gmra.mxu0 %v1949
        %v1993 = vpop.f32.mrf.mxu0
        %v1994 = vadd.f32 %v1925, %v1993
        %v1995 = vpop.f32.mrf.mxu0
        %v1996 = vpop.f32.mrf.mxu0
        %v1997 = vadd.f32 %v1925, %v1996
        %v1998 = vpop.f32.mrf.mxu0
        %1999 = vdwg.mxu0
        %v2000 = vmax.f32 %v1986, 0.0
        %v2001 = vmax.f32 %v1989, 0.0
        %v2002 = vmax.f32 %v1994, 0.0
        %v2003 = vmax.f32 %v1997, 0.0
        %v2004 = vpack.c.bf16 %v2001, %v2000
        %v2005 = vpack.c.bf16 %v2003, %v2002
        %v2007 = vlaneseq
        %v2008 = vshrl.u32 %v2007, 7
        %v2009 = vsub.s32 0, %v2008
        %v2010 = vrot.slane %v797, %v2009
        %v2020 = vunpack.c.l.b16 %v789
        %v2021 = vunpack.c.l.b16 %v790
        %v2022 = vunpack.c.l.b16 %v791
        %v2023 = vunpack.c.l.b16 %v792
        %v2024 = vunpack.c.l.b16 %v793
        %v2025 = vunpack.c.l.b16 %v794
        %v2026 = vunpack.c.l.b16 %v795
        %v2027 = vunpack.c.l.b16 %v796
        %v2028 = vpack.c.b16 %v2021, %v2020
        %v2029 = vpack.c.b16 %v2023, %v2022
        %v2030 = vpack.c.b16 %v2025, %v2024
        %v2031 = vpack.c.b16 %v2027, %v2026
        %vm2036 = vcmask 523264
        %v2038 = vsel %vm2036, %v2004, 0
        %v2041 = vsel %vm2036, %v2005, 0
        %2043 = vmatprep.subr.bf16.mxu0 0
        %2044 = vmatpush1.bf16.msra.mxu0 0
        %2045 = vmatprep.subr.bf16.mxu0 0
        %2046 = vmatpush1.bf16.msra.mxu0 0
        %2047 = vmatprep.subr.bf16.mxu0 0
        %2048 = vmatpush1.bf16.msra.mxu0 0
        %2049 = vmatprep.subr.bf16.mxu0 0
        %2050 = vmatpush1.bf16.msra.mxu0 0
        %2051 = vmatprep.subr.bf16.mxu0 0
        %2052 = vmatpush1.bf16.msra.mxu0 %v2031
        %2053 = vmatprep.subr.bf16.mxu0 0
        %2054 = vmatpush1.bf16.msra.mxu0 %v2030
        %2055 = vmatprep.subr.bf16.mxu0 0
        %2056 = vmatpush1.bf16.msra.mxu0 %v2029
        %2057 = vmatprep.subr.bf16.mxu0 0
        %2058 = vmatpush1.bf16.msra.mxu0 %v2028
        %2059 = vmatprep.subr.bf16.mxu0 0
        %2060 = vmatpush2.bf16.msra.mxu0 0
        %2061 = vmatprep.subr.bf16.mxu0 0
        %2062 = vmatpush2.bf16.msra.mxu0 0
        %2063 = vmatprep.subr.bf16.mxu0 0
        %2064 = vmatpush2.bf16.msra.mxu0 0
        %2065 = vmatprep.subr.bf16.mxu0 0
        %2066 = vmatpush2.bf16.msra.mxu0 0
        %2067 = vmatprep.subr.bf16.mxu0 0
        %2068 = vmatpush2.bf16.msra.mxu0 0
        %2069 = vmatprep.subr.bf16.mxu0 0
        %2070 = vmatpush2.bf16.msra.mxu0 0
        %2071 = vmatprep.subr.bf16.mxu0 0
        %2072 = vmatpush2.bf16.msra.mxu0 0
        %2073 = vmatprep.subr.bf16.mxu0 0
        %2074 = vmatpush2.bf16.msra.mxu0 0
        %2075 = vmatprep.mubr.bf16.mxu0 0
        %2076 = vmatmul.mubr.bf16.gmra.mxu0 %v2038
        %v2077 = vpop.f32.mrf.mxu0
        %v2078 = vadd.f32 %v2010, %v2077
        %v2079 = vpop.f32.mrf.mxu0
        %v2080 = vpop.f32.mrf.mxu0
        %v2081 = vadd.f32 %v2010, %v2080
        %v2082 = vpop.f32.mrf.mxu0
        %2083 = vmatprep.mubr.bf16.mxu0 0
        %2084 = vmatmul.mubr.bf16.gmra.mxu0 %v2041
        %v2085 = vpop.f32.mrf.mxu0
        %v2086 = vadd.f32 %v2010, %v2085
        %v2087 = vpop.f32.mrf.mxu0
        %v2088 = vpop.f32.mrf.mxu0
        %v2089 = vadd.f32 %v2010, %v2088
        %v2090 = vpop.f32.mrf.mxu0
        %2091 = vdwg.mxu0
        %v2092 = vpack.c.bf16 %v2081, %v2078
        %v2093 = vpack.c.bf16 %v2089, %v2086
        %v2098 = vunpack.c.l.b16 %v804
        %v2099 = vunpack.c.l.b16 %v805
        %v2100 = vunpack.c.l.b16 %v806
        %v2101 = vunpack.c.l.b16 %v807
        %v2102 = vpack.c.b16 %v2099, %v2098
        %v2103 = vpack.c.b16 %v2101, %v2100
        %v2107 = vsel %vm821, %v2092, 0
        %v2110 = vsel %vm821, %v2093, 0
        %2112 = vmatprep.subr.bf16.mxu0 0
        %2113 = vmatpush1.bf16.msra.mxu0 0
        %2114 = vmatprep.subr.bf16.mxu0 0
        %2115 = vmatpush1.bf16.msra.mxu0 0
        %2116 = vmatprep.subr.bf16.mxu0 0
        %2117 = vmatpush1.bf16.msra.mxu0 0
        %2118 = vmatprep.subr.bf16.mxu0 0
        %2119 = vmatpush1.bf16.msra.mxu0 0
        %2120 = vmatprep.subr.bf16.mxu0 0
        %2121 = vmatpush1.bf16.msra.mxu0 0
        %2122 = vmatprep.subr.bf16.mxu0 0
        %2123 = vmatpush1.bf16.msra.mxu0 0
        %2124 = vmatprep.subr.bf16.mxu0 0
        %2125 = vmatpush1.bf16.msra.mxu0 %v2103
        %2126 = vmatprep.subr.bf16.mxu0 0
        %2127 = vmatpush1.bf16.msra.mxu0 %v2102
        %2128 = vmatprep.subr.bf16.mxu0 0
        %2129 = vmatpush2.bf16.msra.mxu0 0
        %2130 = vmatprep.subr.bf16.mxu0 0
        %2131 = vmatpush2.bf16.msra.mxu0 0
        %2132 = vmatprep.subr.bf16.mxu0 0
        %2133 = vmatpush2.bf16.msra.mxu0 0
        %2134 = vmatprep.subr.bf16.mxu0 0
        %2135 = vmatpush2.bf16.msra.mxu0 0
        %2136 = vmatprep.subr.bf16.mxu0 0
        %2137 = vmatpush2.bf16.msra.mxu0 0
        %2138 = vmatprep.subr.bf16.mxu0 0
        %2139 = vmatpush2.bf16.msra.mxu0 0
        %2140 = vmatprep.subr.bf16.mxu0 0
        %2141 = vmatpush2.bf16.msra.mxu0 0
        %2142 = vmatprep.subr.bf16.mxu0 0
        %2143 = vmatpush2.bf16.msra.mxu0 0
        %2144 = vmatprep.mubr.bf16.mxu0 0
        %2145 = vmatmul.mubr.bf16.gmra.mxu0 %v2107
        %v2146 = vpop.f32.mrf.mxu0
        %v2147 = vadd.f32 0.0, %v2146
        %v2148 = vpop.f32.mrf.mxu0
        %v2149 = vpop.f32.mrf.mxu0
        %v2150 = vadd.f32 0.0, %v2149
        %v2151 = vpop.f32.mrf.mxu0
        %2152 = vmatprep.mubr.bf16.mxu0 0
        %2153 = vmatmul.mubr.bf16.gmra.mxu0 %v2110
        %v2154 = vpop.f32.mrf.mxu0
        %v2155 = vadd.f32 0.0, %v2154
        %v2156 = vpop.f32.mrf.mxu0
        %v2157 = vpop.f32.mrf.mxu0
        %v2158 = vadd.f32 0.0, %v2157
        %v2159 = vpop.f32.mrf.mxu0
        %2160 = vdwg.mxu0
        %v2161 = vpack.c.bf16 %v1808, %v1807
        %v2162 = vpack.c.bf16 %v1810, %v1809
        %2165 = vrot.lane.b32.xlu0 %v2161, 96
        %v2166 = vpop.permute.xlu0 %2165
        %2167 = vrot.lane.b32.xlu0 %v2162, 96
        %v2168 = vpop.permute.xlu0 %2167
        %v2173 = vunpack.c.l.b16 %v813
        %v2174 = vunpack.c.l.b16 %v814
        %v2175 = vunpack.c.l.b16 %v815
        %v2176 = vunpack.c.l.b16 %v816
        %v2177 = vpack.c.b16 %v2174, %v2173
        %v2178 = vpack.c.b16 %v2176, %v2175
        %v2182 = vsel %vm821, %v2166, 0
        %v2185 = vsel %vm821, %v2168, 0
        %2187 = vmatprep.subr.bf16.mxu0 0
        %2188 = vmatpush1.bf16.msra.mxu0 0
        %2189 = vmatprep.subr.bf16.mxu0 0
        %2190 = vmatpush1.bf16.msra.mxu0 0
        %2191 = vmatprep.subr.bf16.mxu0 0
        %2192 = vmatpush1.bf16.msra.mxu0 0
        %2193 = vmatprep.subr.bf16.mxu0 0
        %2194 = vmatpush1.bf16.msra.mxu0 0
        %2195 = vmatprep.subr.bf16.mxu0 0
        %2196 = vmatpush1.bf16.msra.mxu0 0
        %2197 = vmatprep.subr.bf16.mxu0 0
        %2198 = vmatpush1.bf16.msra.mxu0 0
        %2199 = vmatprep.subr.bf16.mxu0 0
        %2200 = vmatpush1.bf16.msra.mxu0 %v2178
        %2201 = vmatprep.subr.bf16.mxu0 0
        %2202 = vmatpush1.bf16.msra.mxu0 %v2177
        %2203 = vmatprep.subr.bf16.mxu0 0
        %2204 = vmatpush2.bf16.msra.mxu0 0
        %2205 = vmatprep.subr.bf16.mxu0 0
        %2206 = vmatpush2.bf16.msra.mxu0 0
        %2207 = vmatprep.subr.bf16.mxu0 0
        %2208 = vmatpush2.bf16.msra.mxu0 0
        %2209 = vmatprep.subr.bf16.mxu0 0
        %2210 = vmatpush2.bf16.msra.mxu0 0
        %2211 = vmatprep.subr.bf16.mxu0 0
        %2212 = vmatpush2.bf16.msra.mxu0 0
        %2213 = vmatprep.subr.bf16.mxu0 0
        %2214 = vmatpush2.bf16.msra.mxu0 0
        %2215 = vmatprep.subr.bf16.mxu0 0
        %2216 = vmatpush2.bf16.msra.mxu0 0
        %2217 = vmatprep.subr.bf16.mxu0 0
        %2218 = vmatpush2.bf16.msra.mxu0 0
        %2219 = vmatprep.mubr.bf16.mxu0 0
        %2220 = vmatmul.mubr.bf16.gmra.mxu0 %v2182
        %v2221 = vpop.f32.mrf.mxu0
        %v2222 = vadd.f32 0.0, %v2221
        %v2223 = vpop.f32.mrf.mxu0
        %v2224 = vpop.f32.mrf.mxu0
        %v2225 = vadd.f32 0.0, %v2224
        %v2226 = vpop.f32.mrf.mxu0
        %2227 = vmatprep.mubr.bf16.mxu0 0
        %2228 = vmatmul.mubr.bf16.gmra.mxu0 %v2185
        %v2229 = vpop.f32.mrf.mxu0
        %v2230 = vadd.f32 0.0, %v2229
        %v2231 = vpop.f32.mrf.mxu0
        %v2232 = vpop.f32.mrf.mxu0
        %v2233 = vadd.f32 0.0, %v2232
        %v2234 = vpop.f32.mrf.mxu0
        %2235 = vdwg.mxu0
        %v2236 = vadd.f32 %v2147, %v2222
        %v2237 = vadd.f32 %v2150, %v2225
        %v2238 = vadd.f32 %v2155, %v2230
        %v2239 = vadd.f32 %v2158, %v2233
        %v2240 = vxor.u32 %v2236, 2147483648
        %v2241 = vxor.u32 %v2237, 2147483648
        %v2242 = vxor.u32 %v2238, 2147483648
        %v2243 = vxor.u32 %v2239, 2147483648
        %v2244 = vmul.f32 %v2240, 1.442695
        %v2245 = vpow.pop %v2244
        %v2246 = vmul.f32 %v2241, 1.442695
        %v2247 = vpow.pop %v2246
        %v2248 = vmul.f32 %v2242, 1.442695
        %v2249 = vpow.pop %v2248
        %v2250 = vmul.f32 %v2243, 1.442695
        %v2251 = vpow.pop %v2250
        %v2252 = vadd.f32 %v2245, 1.0
        %v2253 = vadd.f32 %v2247, 1.0
        %v2254 = vadd.f32 %v2249, 1.0
        %v2255 = vadd.f32 %v2251, 1.0
        %v2256 = vrcp.pop %v2252
        %v2257 = vmul.f32 1.0, %v2256
        %v2258 = vrcp.pop %v2253
        %v2259 = vmul.f32 1.0, %v2258
        %v2260 = vrcp.pop %v2254
        %v2261 = vmul.f32 1.0, %v2260
        %v2262 = vrcp.pop %v2255
        %v2263 = vmul.f32 1.0, %v2262
        %v2264 = vlaneseq
        %v2265 = vshrl.u32 %v2264, 7
        %v2266 = vsub.s32 1, %v2265
        %v2267 = vrot.slane %v798, %v2266
        %2269 = vrot.lane.b32.xlu0 %v2267, 32
        %v2270 = vpop.permute.xlu0 %2269
        %v2272 = vadd.f32 %v2222, %v2270
        %v2273 = vadd.f32 %v2225, %v2270
        %v2274 = vadd.f32 %v2230, %v2270
        %v2275 = vadd.f32 %v2233, %v2270
        %v2276 = vadd.f32 %v2147, %v2272
        %v2277 = vadd.f32 %v2150, %v2273
        %v2278 = vadd.f32 %v2155, %v2274
        %v2279 = vadd.f32 %v2158, %v2275
        %v2280 = vsub.f32 %v2276, 0.1
        %v2281 = vsub.f32 %v2277, 0.1
        %v2282 = vsub.f32 %v2278, 0.1
        %v2283 = vsub.f32 %v2279, 0.1
        %v2284 = vxor.u32 %v2280, 2147483648
        %v2285 = vxor.u32 %v2281, 2147483648
        %v2286 = vxor.u32 %v2282, 2147483648
        %v2287 = vxor.u32 %v2283, 2147483648
        %v2288 = vmul.f32 %v2284, 1.442695
        %v2289 = vpow.pop %v2288
        %v2290 = vmul.f32 %v2285, 1.442695
        %v2291 = vpow.pop %v2290
        %v2292 = vmul.f32 %v2286, 1.442695
        %v2293 = vpow.pop %v2292
        %v2294 = vmul.f32 %v2287, 1.442695
        %v2295 = vpow.pop %v2294
        %v2296 = vadd.f32 %v2289, 1.0
        %v2297 = vadd.f32 %v2291, 1.0
        %v2298 = vadd.f32 %v2293, 1.0
        %v2299 = vadd.f32 %v2295, 1.0
        %v2300 = vrcp.pop %v2296
        %v2301 = vmul.f32 1.0, %v2300
        %v2302 = vrcp.pop %v2297
        %v2303 = vmul.f32 1.0, %v2302
        %v2304 = vrcp.pop %v2298
        %v2305 = vmul.f32 1.0, %v2304
        %v2306 = vrcp.pop %v2299
        %v2307 = vmul.f32 1.0, %v2306
        %2312 = vrot.lane.b32.xlu0 %v2222, 64
        %v2313 = vpop.permute.xlu0 %2312
        %2314 = vrot.lane.b32.xlu0 %v2225, 64
        %v2315 = vpop.permute.xlu0 %2314
        %2316 = vrot.lane.b32.xlu0 %v2230, 64
        %v2317 = vpop.permute.xlu0 %2316
        %2318 = vrot.lane.b32.xlu0 %v2233, 64
        %v2319 = vpop.permute.xlu0 %2318
        %v2324 = vmul.f32 %v2257, %v2313
        %v2325 = vmul.f32 %v2259, %v2315
        %v2326 = vmul.f32 %v2261, %v2317
        %v2327 = vmul.f32 %v2263, %v2319
        %2332 = vrot.lane.b32.xlu0 %v2324, 64
        %v2333 = vpop.permute.xlu0 %2332
        %2334 = vrot.lane.b32.xlu0 %v2325, 64
        %v2335 = vpop.permute.xlu0 %2334
        %2336 = vrot.lane.b32.xlu0 %v2326, 64
        %v2337 = vpop.permute.xlu0 %2336
        %2338 = vrot.lane.b32.xlu0 %v2327, 64
        %v2339 = vpop.permute.xlu0 %2338
        %v2344 = vadd.f32 %v2147, %v2333
        %v2345 = vadd.f32 %v2150, %v2335
        %v2346 = vadd.f32 %v2155, %v2337
        %v2347 = vadd.f32 %v2158, %v2339
        %v2348 = vtanh.pop %v2344
        %v2349 = vtanh.pop %v2345
        %v2350 = vtanh.pop %v2346
        %v2351 = vtanh.pop %v2347
        %v2352 = vsub.f32 1.0, %v2301
        %v2353 = vsub.f32 1.0, %v2303
        %v2354 = vsub.f32 1.0, %v2305
        %v2355 = vsub.f32 1.0, %v2307
        %v2356 = vmul.f32 %v2352, %v1807
        %v2357 = vmul.f32 %v2353, %v1808
        %v2358 = vmul.f32 %v2354, %v1809
        %v2359 = vmul.f32 %v2355, %v1810
        %2364 = vrot.lane.b32.xlu0 %v2348, 96
        %v2365 = vpop.permute.xlu0 %2364
        %2366 = vrot.lane.b32.xlu0 %v2349, 96
        %v2367 = vpop.permute.xlu0 %2366
        %2368 = vrot.lane.b32.xlu0 %v2350, 96
        %v2369 = vpop.permute.xlu0 %2368
        %2370 = vrot.lane.b32.xlu0 %v2351, 96
        %v2371 = vpop.permute.xlu0 %2370
        %v2376 = vmul.f32 %v2301, %v2365
        %v2377 = vmul.f32 %v2303, %v2367
        %v2378 = vmul.f32 %v2305, %v2369
        %v2379 = vmul.f32 %v2307, %v2371
        %v2380 = vadd.f32 %v2356, %v2376
        %v2381 = vadd.f32 %v2357, %v2377
        %v2382 = vadd.f32 %v2358, %v2378
        %v2383 = vadd.f32 %v2359, %v2379
        %2388 = vrot.lane.b32.xlu0 %v2380, 96
        %v2389 = vpop.permute.xlu0 %2388
        %2390 = vrot.lane.b32.xlu0 %v2381, 96
        %v2391 = vpop.permute.xlu0 %2390
        %2392 = vrot.lane.b32.xlu0 %v2382, 96
        %v2393 = vpop.permute.xlu0 %2392
        %2394 = vrot.lane.b32.xlu0 %v2383, 96
        %v2395 = vpop.permute.xlu0 %2394
        %2400 = vst.msk [vmem:[#allocation2] sm:$0xff] %vm821, %v2389
        %2401 = vst.msk [vmem:[#allocation2 + $0x8] sm:$0xff] %vm821, %v2391
        %2402 = vst.msk [vmem:[#allocation2 + $0x10] sm:$0xff] %vm821, %v2393
        %2403 = vst.msk [vmem:[#allocation2 + $0x18] sm:$0xff] %vm821, %v2395
        %2404 = vst.msk [vmem:[%s688] sm:$0xff] %vm821, %v2389
        %2405 = vst.msk [vmem:[%s688 + $0x8] sm:$0xff] %vm821, %v2391
        %2406 = vst.msk [vmem:[%s688 + $0x10] sm:$0xff] %vm821, %v2393
        %2407 = vst.msk [vmem:[%s688 + $0x18] sm:$0xff] %vm821, %v2395
        %s2408 = sand.u32 %s366, 1
        %s2409 = scalar_lea.sflag [#allocation6], %s2408
        %s2410 = sand.u32 %s366, 1
        %s2411 = smul.addr %s2410, 32
        %s2412 = scalar_lea.vmem [#allocation13], %s2411
        // Predicated region
        $region136: #{tpu_custom_call.1} parent=71 // pred_check
          %p2413 = pneg %p376
        $region137: #{tpu_custom_call.1} parent=71 // pred_check_branch
          %2415 = sbr.rel (%p2413) target = $region139
        $region138: #{tpu_custom_call.1} parent=71 // pred_region
          %s2417 = ssub.s32 512, 512
          %2418 = vsyncadd %s2409, %s2417
          %s2419 = smul.addr %s30, 4
          %s2420 = smul.addr %s2419, 128
          %s2421 = scalar_lea.hbm %s14, %s2420
          %s2422 = sshll.u32 %s2412, 4
          %s2423 = int_to_ptr.vmem [resolvable:$true] %s2422
          %2428 = dma.vmem_to_hbm [thread:$0]  %s2423, 512, %s2421, %s2409, 128, 128, 8
        $region139: #{tpu_custom_call.1} parent=71 // pred_fallthru
          _
      $region72: #{tpu_custom_call.1} parent=5 // pred_fallthru
        _
      %p2429 = scmp.le.s32.totalorder 2, %s25
      // Predicated region
      $region140: #{tpu_custom_call.1} parent=5 // pred_check
        %p2430 = pneg %p2429
      $region141: #{tpu_custom_call.1} parent=5 // pred_check_branch
        %2432 = sbr.rel (%p2430) target = $region143
      $region142: #{tpu_custom_call.1} parent=5 // pred_region
        %s2433 = ssub.s32 %s25, 2
        // Predicated region
        $region144: #{tpu_custom_call.1} parent=142 // pred_check
          %p2434 = pneg %p382
        $region145: #{tpu_custom_call.1} parent=142 // pred_check_branch
          %2436 = sbr.rel (%p2434) target = $region147
        $region146: #{tpu_custom_call.1} parent=142 // pred_region
          %s2437 = sand.u32 %s367, 1
          %s2438 = scalar_lea.sflag [#allocation6], %s2437
          %s2439 = sand.u32 %s367, 1
          %s2440 = smul.addr %s2439, 32
          %s2441 = scalar_lea.vmem [#allocation13], %s2440
          %2442 = dma.done %s2438, 512
        $region147: #{tpu_custom_call.1} parent=142 // pred_fallthru
          _
      $region143: #{tpu_custom_call.1} parent=5 // pred_fallthru
        _
    $region6: #{tpu_custom_call.1} parent=1 // loop_footer
      %s29 = sadd.s32 1, %s25
    $region7: #{tpu_custom_call.1} parent=1 // loop_footer_branch
      %24 = sbr.rel target = $region3
    $region8: #{tpu_custom_call.1} parent=1 // loop_exit
      _
    %2443 = vsyncpa [#allocation5], 1
    %s2444 = scalar_lea.sflag [#allocation5], 1
    %2445 = vsyncpa %s2444, 1
    %2446 = vsyncpa [#allocation8], 1
    %2447 = vsyncpa [#allocation6], 1
    %s2448 = scalar_lea.sflag [#allocation6], 1
    %2449 = vsyncpa %s2448, 1

</llo_original>
